<compile_context>
chip_gen: v7x
topology: tpu7x:2x2x1
jax: 0.10.0
libtpu: 0.0.40
codegen_flags: <defaults>
</compile_context>

<pallas_src>
import functools

import numpy as np
import jax
import jax.numpy as jnp
from jax import lax
from jax.experimental import pallas as pl
from jax.experimental.pallas import tpu as pltpu


def _round_up(x, m):
    return ((x + m - 1) // m) * m


# ----------------------------------------------------------------------------
# Pallas kernel
# ----------------------------------------------------------------------------
def _giou_diag_rows(pred_r, tgt_r, eps=1e-9):
    """Element-wise (diagonal) GIoU of cxcywh boxes in row layout.

    pred_r, tgt_r: (8, Np); rows 0..3 = (cx, cy, w, h), rows 4..7 are padding.
    Returns (1, Np).
    """
    pcx, pcy, pw, ph = pred_r[0:1, :], pred_r[1:2, :], pred_r[2:3, :], pred_r[3:4, :]
    tcx, tcy, tw, th = tgt_r[0:1, :], tgt_r[1:2, :], tgt_r[2:3, :], tgt_r[3:4, :]
    # box_cxcywh_to_xyxy
    px1, py1 = pcx - 0.5 * pw, pcy - 0.5 * ph
    px2, py2 = pcx + 0.5 * pw, pcy + 0.5 * ph
    tx1, ty1 = tcx - 0.5 * tw, tcy - 0.5 * th
    tx2, ty2 = tcx + 0.5 * tw, tcy + 0.5 * th
    area_p = (px2 - px1) * (py2 - py1)
    area_t = (tx2 - tx1) * (ty2 - ty1)
    # intersection
    ix1 = jnp.maximum(px1, tx1)
    iy1 = jnp.maximum(py1, ty1)
    ix2 = jnp.minimum(px2, tx2)
    iy2 = jnp.minimum(py2, ty2)
    inter = jnp.maximum(ix2 - ix1, 0.0) * jnp.maximum(iy2 - iy1, 0.0)
    # eps guards keep padded (all-zero) boxes finite; real boxes are unaffected.
    union = jnp.maximum(area_p + area_t - inter, eps)
    iou = inter * pl.reciprocal(union, approx=False)
    # smallest enclosing box
    ex1 = jnp.minimum(px1, tx1)
    ey1 = jnp.minimum(py1, ty1)
    ex2 = jnp.maximum(px2, tx2)
    ey2 = jnp.maximum(py2, ty2)
    earea = jnp.maximum((ex2 - ex1) * (ey2 - ey1), eps)
    return iou - (earea - union) * pl.reciprocal(earea, approx=False)  # (1, Np)


def _matcher_cost_kernel(
    pred_sub_ref,     # (G, 8, Np)   rows 0..3 = cxcywh, rows 4..7 = zero pad
    pred_obj_ref,     # (G, 8, Np)
    tgt_sub_ref,      # (G, 8, Np)
    tgt_obj_ref,      # (G, 8, Np)
    obj_scores_ref,   # (G, 1, Np)   logits
    obj_labels_ref,   # (G, 1, Np)   soft class targets
    verb_scores_ref,  # (G, Np, Vp)  logits (natural layout)
    verb_labels_ref,  # (G, Np, Vp)  {0,1} targets (natural layout)
    c_ref,            # (G, Np, Np)  output cost block
    *,
    n_valid, v_valid, w_cls, w_verb, w_bbox, w_giou,
):
    g_blk, n_pad, _ = c_ref.shape
    v_pad = verb_scores_ref.shape[2]
    f32 = jnp.float32

    # Constants shared by every batch element of this block (hoisted out of the
    # per-element loop).
    lane_n = lax.broadcasted_iota(jnp.int32, (1, n_pad), 1) < n_valid        # (1, Np)
    lane_v = lax.broadcasted_iota(jnp.int32, (n_pad, v_pad), 1) < v_valid    # (Np, Vp)
    eye = (lax.broadcasted_iota(jnp.int32, (n_pad, n_pad), 0)
           == lax.broadcasted_iota(jnp.int32, (n_pad, n_pad), 1)).astype(f32)  # (Np, Np)

    for g in range(g_blk):  # static unroll over the batch block
        # ---- cost_class: CE with probability targets over the N logits ------
        logits = jnp.where(lane_n, obj_scores_ref[g], -1e9)   # mask padding lanes
        labels = obj_labels_ref[g]
        m = jnp.max(logits, axis=-1, keepdims=True)
        lse = jnp.log(jnp.sum(jnp.exp(logits - m), axis=-1, keepdims=True)) + m
        log_probs = logits - lse
        cost_class = -jnp.sum(jnp.where(lane_n, labels * log_probs, 0.0))  # scalar

        # ---- cost_verb: BCE-with-logits summed over verbs -> row (1, Np) ----
        x = verb_scores_ref[g]                                 # (Np, Vp)
        y = verb_labels_ref[g]
        # Note: log1p(exp(-|x|)) would be marginally more precise; the plain
        # form is kept (difference < 1e-7 here) for guaranteed Mosaic lowering.
        bce = jnp.maximum(x, 0.0) - x * y + jnp.log(1.0 + jnp.exp(-jnp.abs(x)))
        verb_col = jnp.sum(jnp.where(lane_v, bce, 0.0), axis=1, keepdims=True)  # (Np, 1)
        # Column -> row without an XLU transpose: identity mask + sublane sum.
        cost_verb = jnp.sum(verb_col * eye, axis=0, keepdims=True)              # (1, Np)

        # ---- cost_bbox: L1 cdist(sub) + L1 cdist(obj) -> (Np, Np) -----------
        ps = pred_sub_ref[g]   # (8, Np)
        po = pred_obj_ref[g]
        ts = tgt_sub_ref[g]
        to = tgt_obj_ref[g]
        cost_bbox = jnp.zeros((n_pad, n_pad), f32)
        for k in range(4):  # static 4-coordinate unroll
            # (Np, 1) coordinate column of the predictions, derived in-kernel
            # from the single row-layout feed (row broadcast * identity, then a
            # lane reduction) -- no duplicate (B, N, 4) input needed.
            ps_col = jnp.sum(ps[k:k + 1, :] * eye, axis=1, keepdims=True)
            po_col = jnp.sum(po[k:k + 1, :] * eye, axis=1, keepdims=True)
            cost_bbox = (cost_bbox
                         + jnp.abs(ps_col - ts[k:k + 1, :])
                         + jnp.abs(po_col - to[k:k + 1, :]))

        # ---- cost_giou: 1 - diag(giou(sub)) + 1 - diag(giou(obj)) -> (1, Np)
        cost_giou = ((1.0 - _giou_diag_rows(ps, ts))
                     + (1.0 - _giou_diag_rows(po, to)))

        # ---- combine (reproduces the reference's literal broadcasting:
        #      scalar + row-vector + matrix + row-vector) ---------------------
        c = (w_cls * cost_class
             + w_verb * cost_verb
             + w_bbox * cost_bbox
             + w_giou * cost_giou)
        c_ref[g] = c.astype(c_ref.dtype)


def _cost_matrix_pallas(pred_sub, pred_obj, obj_scores, verb_scores,
                        tgt_sub, tgt_obj, obj_labels, verb_labels,
                        w_cls, w_verb, w_bbox, w_giou, block_b=None):
    """pred_sub/pred_obj/tgt_sub/tgt_obj: (B,N,4); obj_scores/obj_labels: (B,N);
    verb_scores/verb_labels: (B,N,V).  Returns C: (B, N, N) float32."""
    B, N, _ = pred_sub.shape
    V = verb_scores.shape[-1]
    f32 = jnp.float32

    n_pad = _round_up(max(N, 1), 128)   # lane-dense output / row vectors
    v_pad = _round_up(max(V, 1), 128)
    if block_b is None:
        # Amortize per-grid-step overhead while keeping >= 2 steps (v7x megacore).
        block_b = max(1, min(8, B // 2)) if B > 1 else 1
    b_pad = _round_up(B, block_b)

    def box_rows(boxes):   # (B, N, 4) -> (b_pad, 8, n_pad); rows = coords
        rows = jnp.transpose(boxes.astype(f32), (0, 2, 1))            # (B, 4, N)
        return jnp.pad(rows, ((0, b_pad - B), (0, 4), (0, n_pad - N)))

    def row1(x):           # (B, N) -> (b_pad, 1, n_pad)
        return jnp.pad(x.astype(f32)[:, None, :],
                       ((0, b_pad - B), (0, 0), (0, n_pad - N)))

    def verb_nat(x):       # (B, N, V) -> (b_pad, n_pad, v_pad); no transpose
        return jnp.pad(x.astype(f32),
                       ((0, b_pad - B), (0, n_pad - N), (0, v_pad - V)))

    inputs = (box_rows(pred_sub), box_rows(pred_obj),
              box_rows(tgt_sub), box_rows(tgt_obj),
              row1(obj_scores), row1(obj_labels),
              verb_nat(verb_scores), verb_nat(verb_labels))

    kernel = functools.partial(
        _matcher_cost_kernel, n_valid=N, v_valid=V,
        w_cls=w_cls, w_verb=w_verb, w_bbox=w_bbox, w_giou=w_giou)

    def spec(d1, d2):
        return pl.BlockSpec((block_b, d1, d2), lambda b: (b, 0, 0))

    c_padded = pl.pallas_call(
        kernel,
        out_shape=jax.ShapeDtypeStruct((b_pad, n_pad, n_pad), f32),
        grid_spec=pltpu.PrefetchScalarGridSpec(
            num_scalar_prefetch=0,
            grid=(b_pad // block_b,),
            in_specs=[
                spec(8, n_pad),        # pred_sub rows
                spec(8, n_pad),        # pred_obj rows
                spec(8, n_pad),        # tgt_sub rows
                spec(8, n_pad),        # tgt_obj rows
                spec(1, n_pad),        # obj_scores
                spec(1, n_pad),        # obj_labels
                spec(n_pad, v_pad),    # verb_scores (natural layout)
                spec(n_pad, v_pad),    # verb_labels (natural layout)
            ],
            out_specs=spec(n_pad, n_pad),
        ),
        compiler_params=pltpu.CompilerParams(
            dimension_semantics=("parallel",)),
    )(*inputs)

    # Padded rows/columns carry finite garbage by construction; slice them off
    # before any downstream use.  (For variable per-image target counts, the
    # per-element valid column count would be sliced here instead.)
    return c_padded[:B, :N, :N]


# ----------------------------------------------------------------------------
# Host-side assignment (no Pallas equivalent for the Hungarian algorithm)
# ----------------------------------------------------------------------------
def _linear_sum_assignment(cost):
    # TODO(synk): exact Hungarian (scipy.optimize.linear_sum_assignment) has no
    # Pallas equivalent; runs on host, with a greedy fallback if scipy is absent.
    try:
        from scipy.optimize import linear_sum_assignment
        r, c = linear_sum_assignment(cost)
        return np.asarray(r), np.asarray(c)
    except Exception:
        cost = np.array(cost, dtype=np.float64, copy=True)
        n = cost.shape[0]
        rows, cols = [], []
        for _ in range(n):
            i, j = np.unravel_index(np.argmin(cost), cost.shape)
            rows.append(int(i))
            cols.append(int(j))
            cost[i, :] = np.inf
            cost[:, j] = np.inf
        order = np.argsort(rows)
        return np.array(rows)[order], np.array(cols)[order]


class HungarianMatcherHOI:
    """JAX/Pallas port of the PyTorch HungarianMatcherHOI."""

    def __init__(self, cost_obj_class=1.0, cost_verb_class=1.0,
                 cost_bbox=1.0, cost_giou=1.0):
        self.cost_obj_class = float(cost_obj_class)
        self.cost_verb_class = float(cost_verb_class)
        self.cost_bbox = float(cost_bbox)
        self.cost_giou = float(cost_giou)

    def cost_matrix(self, pred_sub, pred_obj, obj_scores, verb_scores,
                    tgt_sub, tgt_obj, obj_labels, verb_labels):
        return _cost_matrix_pallas(
            pred_sub, pred_obj, obj_scores, verb_scores,
            tgt_sub, tgt_obj, obj_labels, verb_labels,
            self.cost_obj_class, self.cost_verb_class,
            self.cost_bbox, self.cost_giou)

    def __call__(self, pred_sub, pred_obj, obj_scores, verb_scores,
                 tgt_sub, tgt_obj, obj_labels, verb_labels):
        C = self.cost_matrix(pred_sub, pred_obj, obj_scores, verb_scores,
                             tgt_sub, tgt_obj, obj_labels, verb_labels)
        C_host = np.asarray(jax.device_get(C))
        # NOTE: the reference flattens C with .view(-1) before assignment, which
        # scipy rejects (needs a 2-D matrix); we assign on the 2-D cost matrix.
        return [(_linear_sum_assignment(C_host[b])) for b in range(C_host.shape[0])]


# ----------------------------------------------------------------------------
# Pure-JAX reference (for correctness check)
# ----------------------------------------------------------------------------
def _cost_matrix_ref(pred_sub, pred_obj, obj_scores, verb_scores,
                     tgt_sub, tgt_obj, obj_labels, verb_labels,
                     w_cls, w_verb, w_bbox, w_giou):
    logp = jax.nn.log_softmax(obj_scores, axis=-1)
    cls = -jnp.sum(obj_labels * logp, axis=-1)                      # (B,)
    x, y = verb_scores, verb_labels
    bce = jnp.maximum(x, 0.0) - x * y + jnp.log(1.0 + jnp.exp(-jnp.abs(x)))
    verb = bce.sum(-1)                                              # (B, N)
    cdist = lambda a, b: jnp.abs(a[:, :, None, :] - b[:, None, :, :]).sum(-1)
    bbox = cdist(pred_sub, tgt_sub) + cdist(pred_obj, tgt_obj)      # (B, N, N)

    def giou_diag(p, t):
        def xyxy(b):
            cx, cy, w, h = b[..., 0], b[..., 1], b[..., 2], b[..., 3]
            return cx - 0.5 * w, cy - 0.5 * h, cx + 0.5 * w, cy + 0.5 * h
        px1, py1, px2, py2 = xyxy(p)
        tx1, ty1, tx2, ty2 = xyxy(t)
        ap = (px2 - px1) * (py2 - py1)
        at = (tx2 - tx1) * (ty2 - ty1)
        inter = (jnp.maximum(jnp.minimum(px2, tx2) - jnp.maximum(px1, tx1), 0.0)
                 * jnp.maximum(jnp.minimum(py2, ty2) - jnp.maximum(py1, ty1), 0.0))
        union = ap + at - inter
        iou = inter / union
        earea = ((jnp.maximum(px2, tx2) - jnp.minimum(px1, tx1))
                 * (jnp.maximum(py2, ty2) - jnp.minimum(py1, ty1)))
        return iou - (earea - union) / earea

    giou_c = (1.0 - giou_diag(pred_sub, tgt_sub)) + (1.0 - giou_diag(pred_obj, tgt_obj))
    return (w_cls * cls[:, None, None] + w_verb * verb[:, None, :]
            + w_bbox * bbox + w_giou * giou_c[:, None, :])


# ----------------------------------------------------------------------------
# Main
# ----------------------------------------------------------------------------
if __name__ == "__main__":
    key = jax.random.PRNGKey(0)
    B, N, V = 4, 8, 16       # B=4 -> 2 batch elements per grid step, 2 grid steps
    ks = jax.random.split(key, 8)

    def rand_boxes(k):
        cxy = jax.random.uniform(k, (B, N, 2), minval=0.25, maxval=0.75)
        wh = jax.random.uniform(jax.random.fold_in(k, 1), (B, N, 2),
                                minval=0.1, maxval=0.4)
        return jnp.concatenate([cxy, wh], axis=-1).astype(jnp.float32)

    pred_sub = rand_boxes(ks[0])
    pred_obj = rand_boxes(ks[1])
    tgt_sub = rand_boxes(ks[2])
    tgt_obj = rand_boxes(ks[3])
    obj_scores = jax.random.normal(ks[4], (B, N), jnp.float32)
    obj_labels = jax.nn.softmax(jax.random.normal(ks[5], (B, N), jnp.float32), -1)
    verb_scores = jax.random.normal(ks[6], (B, N, V), jnp.float32)
    verb_labels = (jax.random.uniform(ks[7], (B, N, V)) > 0.7).astype(jnp.float32)

    matcher = HungarianMatcherHOI(cost_obj_class=1.0, cost_verb_class=1.0,
                                  cost_bbox=1.0, cost_giou=1.0)

    C = matcher.cost_matrix(pred_sub, pred_obj, obj_scores, verb_scores,
                            tgt_sub, tgt_obj, obj_labels, verb_labels)
    C = jax.block_until_ready(C)

    C_ref = _cost_matrix_ref(pred_sub, pred_obj, obj_scores, verb_scores,
                             tgt_sub, tgt_obj, obj_labels, verb_labels,
                             1.0, 1.0, 1.0, 1.0)
    np.testing.assert_allclose(np.asarray(C), np.asarray(C_ref),
                               rtol=1e-4, atol=1e-4)

    indices = matcher(pred_sub, pred_obj, obj_scores, verb_scores,
                      tgt_sub, tgt_obj, obj_labels, verb_labels)
    assert len(indices) == B and all(len(r) == N for r, _ in indices)

    print("KERNEL_OK")
</pallas_src>

<mosaic_0001>
module attributes {stable_mosaic.version = 11 : i64} {
  func.func @_matcher_cost_kernel(%arg0: i32, %arg1: memref<2x8x128xf32, #tpu.memory_space<vmem>>, %arg2: memref<2x8x128xf32, #tpu.memory_space<vmem>>, %arg3: memref<2x8x128xf32, #tpu.memory_space<vmem>>, %arg4: memref<2x8x128xf32, #tpu.memory_space<vmem>>, %arg5: memref<2x1x128xf32, #tpu.memory_space<vmem>>, %arg6: memref<2x1x128xf32, #tpu.memory_space<vmem>>, %arg7: memref<2x128x128xf32, #tpu.memory_space<vmem>>, %arg8: memref<2x128x128xf32, #tpu.memory_space<vmem>>, %arg9: memref<2x128x128xf32, #tpu.memory_space<vmem>>) attributes {dimension_semantics = [#tpu.dimension_semantics<parallel>], iteration_bounds = array<i64: 2>, scalar_prefetch = 0 : i64, scratch_operands = 0 : i64, tpu.core_type = #tpu.core_type<tc>, window_params = [{transform_indices = @transform_0, window_bounds = array<i64: 2, 8, 128>}, {transform_indices = @transform_1, window_bounds = array<i64: 2, 8, 128>}, {transform_indices = @transform_2, window_bounds = array<i64: 2, 8, 128>}, {transform_indices = @transform_3, window_bounds = array<i64: 2, 8, 128>}, {transform_indices = @transform_4, window_bounds = array<i64: 2, 1, 128>}, {transform_indices = @transform_5, window_bounds = array<i64: 2, 1, 128>}, {transform_indices = @transform_6, window_bounds = array<i64: 2, 128, 128>}, {transform_indices = @transform_7, window_bounds = array<i64: 2, 128, 128>}, {transform_indices = @transform_8, window_bounds = array<i64: 2, 128, 128>}]} {
    %0 = tpu.iota {dimensions = array<i32: 1>} : vector<1x128xi32>
    %c8_i32 = arith.constant 8 : i32
    %1 = vector.broadcast %c8_i32 : i32 to vector<1x128xi32>
    %2 = arith.cmpi slt, %0, %1 : vector<1x128xi32>
    %3 = tpu.iota {dimensions = array<i32: 1>} : vector<128x128xi32>
    %c16_i32 = arith.constant 16 : i32
    %4 = vector.broadcast %c16_i32 : i32 to vector<128x128xi32>
    %5 = arith.cmpi slt, %3, %4 : vector<128x128xi32>
    %6 = tpu.iota {dimensions = array<i32: 0>} : vector<128x128xi32>
    %7 = tpu.iota {dimensions = array<i32: 1>} : vector<128x128xi32>
    %8 = arith.cmpi eq, %6, %7 : vector<128x128xi32>
    %9 = arith.extui %8 : vector<128x128xi1> to vector<128x128xi32>
    %10 = arith.sitofp %9 : vector<128x128xi32> to vector<128x128xf32>
    %c0 = arith.constant 0 : index
    %c0_0 = arith.constant 0 : index
    %c0_1 = arith.constant 0 : index
    %11 = vector.load %arg5[%c0, %c0_0, %c0_1] : memref<2x1x128xf32, #tpu.memory_space<vmem>>, vector<1x1x128xf32>
    %12 = vector.shape_cast %11 : vector<1x1x128xf32> to vector<1x128xf32>
    %cst = arith.constant -1.000000e+09 : f32
    %13 = vector.broadcast %cst : f32 to vector<1x128xf32>
    %14 = arith.select %2, %12, %13 : vector<1x128xi1>, vector<1x128xf32>
    %c0_2 = arith.constant 0 : index
    %c0_3 = arith.constant 0 : index
    %c0_4 = arith.constant 0 : index
    %15 = vector.load %arg6[%c0_2, %c0_3, %c0_4] : memref<2x1x128xf32, #tpu.memory_space<vmem>>, vector<1x1x128xf32>
    %16 = vector.shape_cast %15 : vector<1x1x128xf32> to vector<1x128xf32>
    %cst_5 = arith.constant dense<0xFF800000> : vector<1xf32>
    %17 = vector.multi_reduction <maximumf>, %14, %cst_5 [1] : vector<1x128xf32> to vector<1xf32>
    %18 = vector.shape_cast %17 : vector<1xf32> to vector<1x1xf32>
    %19 = vector.broadcast %18 : vector<1x1xf32> to vector<1x128xf32>
    %20 = arith.subf %14, %19 : vector<1x128xf32>
    %21 = math.exp %20 : vector<1x128xf32>
    %cst_6 = arith.constant dense<0.000000e+00> : vector<1xf32>
    %22 = vector.multi_reduction <add>, %21, %cst_6 [1] : vector<1x128xf32> to vector<1xf32>
    %23 = vector.shape_cast %22 : vector<1xf32> to vector<1x1xf32>
    %24 = math.log %23 : vector<1x1xf32>
    %25 = arith.addf %24, %18 : vector<1x1xf32>
    %26 = vector.broadcast %25 : vector<1x1xf32> to vector<1x128xf32>
    %27 = arith.subf %14, %26 : vector<1x128xf32>
    %28 = arith.mulf %16, %27 : vector<1x128xf32>
    %cst_7 = arith.constant 0.000000e+00 : f32
    %29 = vector.broadcast %cst_7 : f32 to vector<1x128xf32>
    %30 = arith.select %2, %28, %29 : vector<1x128xi1>, vector<1x128xf32>
    %31 = vector.shape_cast %30 : vector<1x128xf32> to vector<1x1x128xf32>
    %cst_8 = arith.constant dense<0.000000e+00> : vector<1xf32>
    %32 = vector.multi_reduction <add>, %31, %cst_8 [1, 2] : vector<1x1x128xf32> to vector<1xf32>
    %33 = vector.shape_cast %32 : vector<1xf32> to vector<1x1x1xf32>
    %34 = vector.extract %33[0, 0, 0] : f32 from vector<1x1x1xf32>
    %cst_9 = arith.constant 0.000000e+00 : f32
    %35 = arith.subf %cst_9, %34 : f32
    %c0_10 = arith.constant 0 : index
    %c0_11 = arith.constant 0 : index
    %c0_12 = arith.constant 0 : index
    %36 = vector.load %arg7[%c0_10, %c0_11, %c0_12] : memref<2x128x128xf32, #tpu.memory_space<vmem>>, vector<1x128x128xf32>
    %37 = vector.shape_cast %36 : vector<1x128x128xf32> to vector<128x128xf32>
    %c0_13 = arith.constant 0 : index
    %c0_14 = arith.constant 0 : index
    %c0_15 = arith.constant 0 : index
    %38 = vector.load %arg8[%c0_13, %c0_14, %c0_15] : memref<2x128x128xf32, #tpu.memory_space<vmem>>, vector<1x128x128xf32>
    %39 = vector.shape_cast %38 : vector<1x128x128xf32> to vector<128x128xf32>
    %cst_16 = arith.constant 0.000000e+00 : f32
    %40 = vector.broadcast %cst_16 : f32 to vector<128x128xf32>
    %41 = arith.maximumf %37, %40 : vector<128x128xf32>
    %42 = arith.mulf %37, %39 : vector<128x128xf32>
    %43 = arith.subf %41, %42 : vector<128x128xf32>
    %44 = math.absf %37 : vector<128x128xf32>
    %cst_17 = arith.constant 0.000000e+00 : f32
    %45 = vector.broadcast %cst_17 : f32 to vector<128x128xf32>
    %46 = arith.subf %45, %44 : vector<128x128xf32>
    %47 = math.exp %46 : vector<128x128xf32>
    %cst_18 = arith.constant 1.000000e+00 : f32
    %48 = vector.broadcast %cst_18 : f32 to vector<128x128xf32>
    %49 = arith.addf %48, %47 : vector<128x128xf32>
    %50 = math.log %49 : vector<128x128xf32>
    %51 = arith.addf %43, %50 : vector<128x128xf32>
    %cst_19 = arith.constant 0.000000e+00 : f32
    %52 = vector.broadcast %cst_19 : f32 to vector<128x128xf32>
    %53 = arith.select %5, %51, %52 : vector<128x128xi1>, vector<128x128xf32>
    %cst_20 = arith.constant dense<0.000000e+00> : vector<128xf32>
    %54 = vector.multi_reduction <add>, %53, %cst_20 [1] : vector<128x128xf32> to vector<128xf32>
    %55 = vector.shape_cast %54 : vector<128xf32> to vector<128x1xf32>
    %56 = vector.broadcast %55 : vector<128x1xf32> to vector<128x128xf32>
    %57 = arith.mulf %56, %10 : vector<128x128xf32>
    %cst_21 = arith.constant dense<0.000000e+00> : vector<128xf32>
    %58 = vector.multi_reduction <add>, %57, %cst_21 [0] : vector<128x128xf32> to vector<128xf32>
    %59 = vector.shape_cast %58 : vector<128xf32> to vector<1x128xf32>
    %c0_22 = arith.constant 0 : index
    %c0_23 = arith.constant 0 : index
    %c0_24 = arith.constant 0 : index
    %60 = vector.load %arg1[%c0_22, %c0_23, %c0_24] : memref<2x8x128xf32, #tpu.memory_space<vmem>>, vector<1x8x128xf32>
    %61 = vector.shape_cast %60 : vector<1x8x128xf32> to vector<8x128xf32>
    %c0_25 = arith.constant 0 : index
    %c0_26 = arith.constant 0 : index
    %c0_27 = arith.constant 0 : index
    %62 = vector.load %arg2[%c0_25, %c0_26, %c0_27] : memref<2x8x128xf32, #tpu.memory_space<vmem>>, vector<1x8x128xf32>
    %63 = vector.shape_cast %62 : vector<1x8x128xf32> to vector<8x128xf32>
    %c0_28 = arith.constant 0 : index
    %c0_29 = arith.constant 0 : index
    %c0_30 = arith.constant 0 : index
    %64 = vector.load %arg3[%c0_28, %c0_29, %c0_30] : memref<2x8x128xf32, #tpu.memory_space<vmem>>, vector<1x8x128xf32>
    %65 = vector.shape_cast %64 : vector<1x8x128xf32> to vector<8x128xf32>
    %c0_31 = arith.constant 0 : index
    %c0_32 = arith.constant 0 : index
    %c0_33 = arith.constant 0 : index
    %66 = vector.load %arg4[%c0_31, %c0_32, %c0_33] : memref<2x8x128xf32, #tpu.memory_space<vmem>>, vector<1x8x128xf32>
    %67 = vector.shape_cast %66 : vector<1x8x128xf32> to vector<8x128xf32>
    %cst_34 = arith.constant 0.000000e+00 : f32
    %68 = vector.broadcast %cst_34 : f32 to vector<128x128xf32>
    %69 = vector.extract_strided_slice %61 {offsets = [0, 0], sizes = [1, 128], strides = [1, 1]} : vector<8x128xf32> to vector<1x128xf32>
    %70 = vector.broadcast %69 : vector<1x128xf32> to vector<128x128xf32>
    %71 = arith.mulf %70, %10 : vector<128x128xf32>
    %cst_35 = arith.constant dense<0.000000e+00> : vector<128xf32>
    %72 = vector.multi_reduction <add>, %71, %cst_35 [1] : vector<128x128xf32> to vector<128xf32>
    %73 = vector.shape_cast %72 : vector<128xf32> to vector<128x1xf32>
    %74 = vector.extract_strided_slice %63 {offsets = [0, 0], sizes = [1, 128], strides = [1, 1]} : vector<8x128xf32> to vector<1x128xf32>
    %75 = vector.broadcast %74 : vector<1x128xf32> to vector<128x128xf32>
    %76 = arith.mulf %75, %10 : vector<128x128xf32>
    %cst_36 = arith.constant dense<0.000000e+00> : vector<128xf32>
    %77 = vector.multi_reduction <add>, %76, %cst_36 [1] : vector<128x128xf32> to vector<128xf32>
    %78 = vector.shape_cast %77 : vector<128xf32> to vector<128x1xf32>
    %79 = vector.extract_strided_slice %65 {offsets = [0, 0], sizes = [1, 128], strides = [1, 1]} : vector<8x128xf32> to vector<1x128xf32>
    %80 = vector.broadcast %73 : vector<128x1xf32> to vector<128x128xf32>
    %81 = vector.broadcast %79 : vector<1x128xf32> to vector<128x128xf32>
    %82 = arith.subf %80, %81 : vector<128x128xf32>
    %83 = math.absf %82 : vector<128x128xf32>
    %84 = arith.addf %68, %83 : vector<128x128xf32>
    %85 = vector.extract_strided_slice %67 {offsets = [0, 0], sizes = [1, 128], strides = [1, 1]} : vector<8x128xf32> to vector<1x128xf32>
    %86 = vector.broadcast %78 : vector<128x1xf32> to vector<128x128xf32>
    %87 = vector.broadcast %85 : vector<1x128xf32> to vector<128x128xf32>
    %88 = arith.subf %86, %87 : vector<128x128xf32>
    %89 = math.absf %88 : vector<128x128xf32>
    %90 = arith.addf %84, %89 : vector<128x128xf32>
    %91 = vector.extract_strided_slice %61 {offsets = [1, 0], sizes = [1, 128], strides = [1, 1]} : vector<8x128xf32> to vector<1x128xf32>
    %92 = vector.broadcast %91 : vector<1x128xf32> to vector<128x128xf32>
    %93 = arith.mulf %92, %10 : vector<128x128xf32>
    %cst_37 = arith.constant dense<0.000000e+00> : vector<128xf32>
    %94 = vector.multi_reduction <add>, %93, %cst_37 [1] : vector<128x128xf32> to vector<128xf32>
    %95 = vector.shape_cast %94 : vector<128xf32> to vector<128x1xf32>
    %96 = vector.extract_strided_slice %63 {offsets = [1, 0], sizes = [1, 128], strides = [1, 1]} : vector<8x128xf32> to vector<1x128xf32>
    %97 = vector.broadcast %96 : vector<1x128xf32> to vector<128x128xf32>
    %98 = arith.mulf %97, %10 : vector<128x128xf32>
    %cst_38 = arith.constant dense<0.000000e+00> : vector<128xf32>
    %99 = vector.multi_reduction <add>, %98, %cst_38 [1] : vector<128x128xf32> to vector<128xf32>
    %100 = vector.shape_cast %99 : vector<128xf32> to vector<128x1xf32>
    %101 = vector.extract_strided_slice %65 {offsets = [1, 0], sizes = [1, 128], strides = [1, 1]} : vector<8x128xf32> to vector<1x128xf32>
    %102 = vector.broadcast %95 : vector<128x1xf32> to vector<128x128xf32>
    %103 = vector.broadcast %101 : vector<1x128xf32> to vector<128x128xf32>
    %104 = arith.subf %102, %103 : vector<128x128xf32>
    %105 = math.absf %104 : vector<128x128xf32>
    %106 = arith.addf %90, %105 : vector<128x128xf32>
    %107 = vector.extract_strided_slice %67 {offsets = [1, 0], sizes = [1, 128], strides = [1, 1]} : vector<8x128xf32> to vector<1x128xf32>
    %108 = vector.broadcast %100 : vector<128x1xf32> to vector<128x128xf32>
    %109 = vector.broadcast %107 : vector<1x128xf32> to vector<128x128xf32>
    %110 = arith.subf %108, %109 : vector<128x128xf32>
    %111 = math.absf %110 : vector<128x128xf32>
    %112 = arith.addf %106, %111 : vector<128x128xf32>
    %113 = vector.extract_strided_slice %61 {offsets = [2, 0], sizes = [1, 128], strides = [1, 1]} : vector<8x128xf32> to vector<1x128xf32>
    %114 = vector.broadcast %113 : vector<1x128xf32> to vector<128x128xf32>
    %115 = arith.mulf %114, %10 : vector<128x128xf32>
    %cst_39 = arith.constant dense<0.000000e+00> : vector<128xf32>
    %116 = vector.multi_reduction <add>, %115, %cst_39 [1] : vector<128x128xf32> to vector<128xf32>
    %117 = vector.shape_cast %116 : vector<128xf32> to vector<128x1xf32>
    %118 = vector.extract_strided_slice %63 {offsets = [2, 0], sizes = [1, 128], strides = [1, 1]} : vector<8x128xf32> to vector<1x128xf32>
    %119 = vector.broadcast %118 : vector<1x128xf32> to vector<128x128xf32>
    %120 = arith.mulf %119, %10 : vector<128x128xf32>
    %cst_40 = arith.constant dense<0.000000e+00> : vector<128xf32>
    %121 = vector.multi_reduction <add>, %120, %cst_40 [1] : vector<128x128xf32> to vector<128xf32>
    %122 = vector.shape_cast %121 : vector<128xf32> to vector<128x1xf32>
    %123 = vector.extract_strided_slice %65 {offsets = [2, 0], sizes = [1, 128], strides = [1, 1]} : vector<8x128xf32> to vector<1x128xf32>
    %124 = vector.broadcast %117 : vector<128x1xf32> to vector<128x128xf32>
    %125 = vector.broadcast %123 : vector<1x128xf32> to vector<128x128xf32>
    %126 = arith.subf %124, %125 : vector<128x128xf32>
    %127 = math.absf %126 : vector<128x128xf32>
    %128 = arith.addf %112, %127 : vector<128x128xf32>
    %129 = vector.extract_strided_slice %67 {offsets = [2, 0], sizes = [1, 128], strides = [1, 1]} : vector<8x128xf32> to vector<1x128xf32>
    %130 = vector.broadcast %122 : vector<128x1xf32> to vector<128x128xf32>
    %131 = vector.broadcast %129 : vector<1x128xf32> to vector<128x128xf32>
    %132 = arith.subf %130, %131 : vector<128x128xf32>
    %133 = math.absf %132 : vector<128x128xf32>
    %134 = arith.addf %128, %133 : vector<128x128xf32>
    %135 = vector.extract_strided_slice %61 {offsets = [3, 0], sizes = [1, 128], strides = [1, 1]} : vector<8x128xf32> to vector<1x128xf32>
    %136 = vector.broadcast %135 : vector<1x128xf32> to vector<128x128xf32>
    %137 = arith.mulf %136, %10 : vector<128x128xf32>
    %cst_41 = arith.constant dense<0.000000e+00> : vector<128xf32>
    %138 = vector.multi_reduction <add>, %137, %cst_41 [1] : vector<128x128xf32> to vector<128xf32>
    %139 = vector.shape_cast %138 : vector<128xf32> to vector<128x1xf32>
    %140 = vector.extract_strided_slice %63 {offsets = [3, 0], sizes = [1, 128], strides = [1, 1]} : vector<8x128xf32> to vector<1x128xf32>
    %141 = vector.broadcast %140 : vector<1x128xf32> to vector<128x128xf32>
    %142 = arith.mulf %141, %10 : vector<128x128xf32>
    %cst_42 = arith.constant dense<0.000000e+00> : vector<128xf32>
    %143 = vector.multi_reduction <add>, %142, %cst_42 [1] : vector<128x128xf32> to vector<128xf32>
    %144 = vector.shape_cast %143 : vector<128xf32> to vector<128x1xf32>
    %145 = vector.extract_strided_slice %65 {offsets = [3, 0], sizes = [1, 128], strides = [1, 1]} : vector<8x128xf32> to vector<1x128xf32>
    %146 = vector.broadcast %139 : vector<128x1xf32> to vector<128x128xf32>
    %147 = vector.broadcast %145 : vector<1x128xf32> to vector<128x128xf32>
    %148 = arith.subf %146, %147 : vector<128x128xf32>
    %149 = math.absf %148 : vector<128x128xf32>
    %150 = arith.addf %134, %149 : vector<128x128xf32>
    %151 = vector.extract_strided_slice %67 {offsets = [3, 0], sizes = [1, 128], strides = [1, 1]} : vector<8x128xf32> to vector<1x128xf32>
    %152 = vector.broadcast %144 : vector<128x1xf32> to vector<128x128xf32>
    %153 = vector.broadcast %151 : vector<1x128xf32> to vector<128x128xf32>
    %154 = arith.subf %152, %153 : vector<128x128xf32>
    %155 = math.absf %154 : vector<128x128xf32>
    %156 = arith.addf %150, %155 : vector<128x128xf32>
    %157 = vector.extract_strided_slice %61 {offsets = [0, 0], sizes = [1, 128], strides = [1, 1]} : vector<8x128xf32> to vector<1x128xf32>
    %158 = vector.extract_strided_slice %61 {offsets = [1, 0], sizes = [1, 128], strides = [1, 1]} : vector<8x128xf32> to vector<1x128xf32>
    %159 = vector.extract_strided_slice %61 {offsets = [2, 0], sizes = [1, 128], strides = [1, 1]} : vector<8x128xf32> to vector<1x128xf32>
    %160 = vector.extract_strided_slice %61 {offsets = [3, 0], sizes = [1, 128], strides = [1, 1]} : vector<8x128xf32> to vector<1x128xf32>
    %161 = vector.extract_strided_slice %65 {offsets = [0, 0], sizes = [1, 128], strides = [1, 1]} : vector<8x128xf32> to vector<1x128xf32>
    %162 = vector.extract_strided_slice %65 {offsets = [1, 0], sizes = [1, 128], strides = [1, 1]} : vector<8x128xf32> to vector<1x128xf32>
    %163 = vector.extract_strided_slice %65 {offsets = [2, 0], sizes = [1, 128], strides = [1, 1]} : vector<8x128xf32> to vector<1x128xf32>
    %164 = vector.extract_strided_slice %65 {offsets = [3, 0], sizes = [1, 128], strides = [1, 1]} : vector<8x128xf32> to vector<1x128xf32>
    %cst_43 = arith.constant 5.000000e-01 : f32
    %165 = vector.broadcast %cst_43 : f32 to vector<1x128xf32>
    %166 = arith.mulf %165, %159 : vector<1x128xf32>
    %167 = arith.subf %157, %166 : vector<1x128xf32>
    %cst_44 = arith.constant 5.000000e-01 : f32
    %168 = vector.broadcast %cst_44 : f32 to vector<1x128xf32>
    %169 = arith.mulf %168, %160 : vector<1x128xf32>
    %170 = arith.subf %158, %169 : vector<1x128xf32>
    %cst_45 = arith.constant 5.000000e-01 : f32
    %171 = vector.broadcast %cst_45 : f32 to vector<1x128xf32>
    %172 = arith.mulf %171, %159 : vector<1x128xf32>
    %173 = arith.addf %157, %172 : vector<1x128xf32>
    %cst_46 = arith.constant 5.000000e-01 : f32
    %174 = vector.broadcast %cst_46 : f32 to vector<1x128xf32>
    %175 = arith.mulf %174, %160 : vector<1x128xf32>
    %176 = arith.addf %158, %175 : vector<1x128xf32>
    %cst_47 = arith.constant 5.000000e-01 : f32
    %177 = vector.broadcast %cst_47 : f32 to vector<1x128xf32>
    %178 = arith.mulf %177, %163 : vector<1x128xf32>
    %179 = arith.subf %161, %178 : vector<1x128xf32>
    %cst_48 = arith.constant 5.000000e-01 : f32
    %180 = vector.broadcast %cst_48 : f32 to vector<1x128xf32>
    %181 = arith.mulf %180, %164 : vector<1x128xf32>
    %182 = arith.subf %162, %181 : vector<1x128xf32>
    %cst_49 = arith.constant 5.000000e-01 : f32
    %183 = vector.broadcast %cst_49 : f32 to vector<1x128xf32>
    %184 = arith.mulf %183, %163 : vector<1x128xf32>
    %185 = arith.addf %161, %184 : vector<1x128xf32>
    %cst_50 = arith.constant 5.000000e-01 : f32
    %186 = vector.broadcast %cst_50 : f32 to vector<1x128xf32>
    %187 = arith.mulf %186, %164 : vector<1x128xf32>
    %188 = arith.addf %162, %187 : vector<1x128xf32>
    %189 = arith.subf %173, %167 : vector<1x128xf32>
    %190 = arith.subf %176, %170 : vector<1x128xf32>
    %191 = arith.mulf %189, %190 : vector<1x128xf32>
    %192 = arith.subf %185, %179 : vector<1x128xf32>
    %193 = arith.subf %188, %182 : vector<1x128xf32>
    %194 = arith.mulf %192, %193 : vector<1x128xf32>
    %195 = arith.maximumf %167, %179 : vector<1x128xf32>
    %196 = arith.maximumf %170, %182 : vector<1x128xf32>
    %197 = arith.minimumf %173, %185 : vector<1x128xf32>
    %198 = arith.minimumf %176, %188 : vector<1x128xf32>
    %199 = arith.subf %197, %195 : vector<1x128xf32>
    %cst_51 = arith.constant 0.000000e+00 : f32
    %200 = vector.broadcast %cst_51 : f32 to vector<1x128xf32>
    %201 = arith.maximumf %199, %200 : vector<1x128xf32>
    %202 = arith.subf %198, %196 : vector<1x128xf32>
    %cst_52 = arith.constant 0.000000e+00 : f32
    %203 = vector.broadcast %cst_52 : f32 to vector<1x128xf32>
    %204 = arith.maximumf %202, %203 : vector<1x128xf32>
    %205 = arith.mulf %201, %204 : vector<1x128xf32>
    %206 = arith.addf %191, %194 : vector<1x128xf32>
    %207 = arith.subf %206, %205 : vector<1x128xf32>
    %cst_53 = arith.constant 9.99999971E-10 : f32
    %208 = vector.broadcast %cst_53 : f32 to vector<1x128xf32>
    %209 = arith.maximumf %207, %208 : vector<1x128xf32>
    %210 = tpu.reciprocal %209 : vector<1x128xf32> -> vector<1x128xf32>
    %211 = arith.mulf %205, %210 : vector<1x128xf32>
    %212 = arith.minimumf %167, %179 : vector<1x128xf32>
    %213 = arith.minimumf %170, %182 : vector<1x128xf32>
    %214 = arith.maximumf %173, %185 : vector<1x128xf32>
    %215 = arith.maximumf %176, %188 : vector<1x128xf32>
    %216 = arith.subf %214, %212 : vector<1x128xf32>
    %217 = arith.subf %215, %213 : vector<1x128xf32>
    %218 = arith.mulf %216, %217 : vector<1x128xf32>
    %cst_54 = arith.constant 9.99999971E-10 : f32
    %219 = vector.broadcast %cst_54 : f32 to vector<1x128xf32>
    %220 = arith.maximumf %218, %219 : vector<1x128xf32>
    %221 = arith.subf %220, %209 : vector<1x128xf32>
    %222 = tpu.reciprocal %220 : vector<1x128xf32> -> vector<1x128xf32>
    %223 = arith.mulf %221, %222 : vector<1x128xf32>
    %224 = arith.subf %211, %223 : vector<1x128xf32>
    %cst_55 = arith.constant 1.000000e+00 : f32
    %225 = vector.broadcast %cst_55 : f32 to vector<1x128xf32>
    %226 = arith.subf %225, %224 : vector<1x128xf32>
    %227 = vector.extract_strided_slice %63 {offsets = [0, 0], sizes = [1, 128], strides = [1, 1]} : vector<8x128xf32> to vector<1x128xf32>
    %228 = vector.extract_strided_slice %63 {offsets = [1, 0], sizes = [1, 128], strides = [1, 1]} : vector<8x128xf32> to vector<1x128xf32>
    %229 = vector.extract_strided_slice %63 {offsets = [2, 0], sizes = [1, 128], strides = [1, 1]} : vector<8x128xf32> to vector<1x128xf32>
    %230 = vector.extract_strided_slice %63 {offsets = [3, 0], sizes = [1, 128], strides = [1, 1]} : vector<8x128xf32> to vector<1x128xf32>
    %231 = vector.extract_strided_slice %67 {offsets = [0, 0], sizes = [1, 128], strides = [1, 1]} : vector<8x128xf32> to vector<1x128xf32>
    %232 = vector.extract_strided_slice %67 {offsets = [1, 0], sizes = [1, 128], strides = [1, 1]} : vector<8x128xf32> to vector<1x128xf32>
    %233 = vector.extract_strided_slice %67 {offsets = [2, 0], sizes = [1, 128], strides = [1, 1]} : vector<8x128xf32> to vector<1x128xf32>
    %234 = vector.extract_strided_slice %67 {offsets = [3, 0], sizes = [1, 128], strides = [1, 1]} : vector<8x128xf32> to vector<1x128xf32>
    %cst_56 = arith.constant 5.000000e-01 : f32
    %235 = vector.broadcast %cst_56 : f32 to vector<1x128xf32>
    %236 = arith.mulf %235, %229 : vector<1x128xf32>
    %237 = arith.subf %227, %236 : vector<1x128xf32>
    %cst_57 = arith.constant 5.000000e-01 : f32
    %238 = vector.broadcast %cst_57 : f32 to vector<1x128xf32>
    %239 = arith.mulf %238, %230 : vector<1x128xf32>
    %240 = arith.subf %228, %239 : vector<1x128xf32>
    %cst_58 = arith.constant 5.000000e-01 : f32
    %241 = vector.broadcast %cst_58 : f32 to vector<1x128xf32>
    %242 = arith.mulf %241, %229 : vector<1x128xf32>
    %243 = arith.addf %227, %242 : vector<1x128xf32>
    %cst_59 = arith.constant 5.000000e-01 : f32
    %244 = vector.broadcast %cst_59 : f32 to vector<1x128xf32>
    %245 = arith.mulf %244, %230 : vector<1x128xf32>
    %246 = arith.addf %228, %245 : vector<1x128xf32>
    %cst_60 = arith.constant 5.000000e-01 : f32
    %247 = vector.broadcast %cst_60 : f32 to vector<1x128xf32>
    %248 = arith.mulf %247, %233 : vector<1x128xf32>
    %249 = arith.subf %231, %248 : vector<1x128xf32>
    %cst_61 = arith.constant 5.000000e-01 : f32
    %250 = vector.broadcast %cst_61 : f32 to vector<1x128xf32>
    %251 = arith.mulf %250, %234 : vector<1x128xf32>
    %252 = arith.subf %232, %251 : vector<1x128xf32>
    %cst_62 = arith.constant 5.000000e-01 : f32
    %253 = vector.broadcast %cst_62 : f32 to vector<1x128xf32>
    %254 = arith.mulf %253, %233 : vector<1x128xf32>
    %255 = arith.addf %231, %254 : vector<1x128xf32>
    %cst_63 = arith.constant 5.000000e-01 : f32
    %256 = vector.broadcast %cst_63 : f32 to vector<1x128xf32>
    %257 = arith.mulf %256, %234 : vector<1x128xf32>
    %258 = arith.addf %232, %257 : vector<1x128xf32>
    %259 = arith.subf %243, %237 : vector<1x128xf32>
    %260 = arith.subf %246, %240 : vector<1x128xf32>
    %261 = arith.mulf %259, %260 : vector<1x128xf32>
    %262 = arith.subf %255, %249 : vector<1x128xf32>
    %263 = arith.subf %258, %252 : vector<1x128xf32>
    %264 = arith.mulf %262, %263 : vector<1x128xf32>
    %265 = arith.maximumf %237, %249 : vector<1x128xf32>
    %266 = arith.maximumf %240, %252 : vector<1x128xf32>
    %267 = arith.minimumf %243, %255 : vector<1x128xf32>
    %268 = arith.minimumf %246, %258 : vector<1x128xf32>
    %269 = arith.subf %267, %265 : vector<1x128xf32>
    %cst_64 = arith.constant 0.000000e+00 : f32
    %270 = vector.broadcast %cst_64 : f32 to vector<1x128xf32>
    %271 = arith.maximumf %269, %270 : vector<1x128xf32>
    %272 = arith.subf %268, %266 : vector<1x128xf32>
    %cst_65 = arith.constant 0.000000e+00 : f32
    %273 = vector.broadcast %cst_65 : f32 to vector<1x128xf32>
    %274 = arith.maximumf %272, %273 : vector<1x128xf32>
    %275 = arith.mulf %271, %274 : vector<1x128xf32>
    %276 = arith.addf %261, %264 : vector<1x128xf32>
    %277 = arith.subf %276, %275 : vector<1x128xf32>
    %cst_66 = arith.constant 9.99999971E-10 : f32
    %278 = vector.broadcast %cst_66 : f32 to vector<1x128xf32>
    %279 = arith.maximumf %277, %278 : vector<1x128xf32>
    %280 = tpu.reciprocal %279 : vector<1x128xf32> -> vector<1x128xf32>
    %281 = arith.mulf %275, %280 : vector<1x128xf32>
    %282 = arith.minimumf %237, %249 : vector<1x128xf32>
    %283 = arith.minimumf %240, %252 : vector<1x128xf32>
    %284 = arith.maximumf %243, %255 : vector<1x128xf32>
    %285 = arith.maximumf %246, %258 : vector<1x128xf32>
    %286 = arith.subf %284, %282 : vector<1x128xf32>
    %287 = arith.subf %285, %283 : vector<1x128xf32>
    %288 = arith.mulf %286, %287 : vector<1x128xf32>
    %cst_67 = arith.constant 9.99999971E-10 : f32
    %289 = vector.broadcast %cst_67 : f32 to vector<1x128xf32>
    %290 = arith.maximumf %288, %289 : vector<1x128xf32>
    %291 = arith.subf %290, %279 : vector<1x128xf32>
    %292 = tpu.reciprocal %290 : vector<1x128xf32> -> vector<1x128xf32>
    %293 = arith.mulf %291, %292 : vector<1x128xf32>
    %294 = arith.subf %281, %293 : vector<1x128xf32>
    %cst_68 = arith.constant 1.000000e+00 : f32
    %295 = vector.broadcast %cst_68 : f32 to vector<1x128xf32>
    %296 = arith.subf %295, %294 : vector<1x128xf32>
    %297 = arith.addf %226, %296 : vector<1x128xf32>
    %cst_69 = arith.constant 1.000000e+00 : f32
    %298 = arith.mulf %cst_69, %35 : f32
    %cst_70 = arith.constant 1.000000e+00 : f32
    %299 = vector.broadcast %cst_70 : f32 to vector<1x128xf32>
    %300 = arith.mulf %299, %59 : vector<1x128xf32>
    %301 = vector.broadcast %298 : f32 to vector<1x128xf32>
    %302 = arith.addf %301, %300 : vector<1x128xf32>
    %cst_71 = arith.constant 1.000000e+00 : f32
    %303 = vector.broadcast %cst_71 : f32 to vector<128x128xf32>
    %304 = arith.mulf %303, %156 : vector<128x128xf32>
    %305 = vector.broadcast %302 : vector<1x128xf32> to vector<128x128xf32>
    %306 = arith.addf %305, %304 : vector<128x128xf32>
    %cst_72 = arith.constant 1.000000e+00 : f32
    %307 = vector.broadcast %cst_72 : f32 to vector<1x128xf32>
    %308 = arith.mulf %307, %297 : vector<1x128xf32>
    %309 = vector.broadcast %308 : vector<1x128xf32> to vector<128x128xf32>
    %310 = arith.addf %306, %309 : vector<128x128xf32>
    %c0_73 = arith.constant 0 : index
    %c0_74 = arith.constant 0 : index
    %c0_75 = arith.constant 0 : index
    %311 = vector.load %arg9[%c0_73, %c0_74, %c0_75] : memref<2x128x128xf32, #tpu.memory_space<vmem>>, vector<1x128x128xf32>
    %312 = vector.shape_cast %311 : vector<1x128x128xf32> to vector<128x128xf32>
    %313 = vector.shape_cast %310 : vector<128x128xf32> to vector<1x128x128xf32>
    tpu.vector_store %arg9[%c0_73, %c0_74, %c0_75], %313 {strides = array<i32>} : memref<2x128x128xf32, #tpu.memory_space<vmem>>, vector<1x128x128xf32>,
    %c1 = arith.constant 1 : index
    %c0_76 = arith.constant 0 : index
    %c0_77 = arith.constant 0 : index
    %314 = vector.load %arg5[%c1, %c0_76, %c0_77] : memref<2x1x128xf32, #tpu.memory_space<vmem>>, vector<1x1x128xf32>
    %315 = vector.shape_cast %314 : vector<1x1x128xf32> to vector<1x128xf32>
    %cst_78 = arith.constant -1.000000e+09 : f32
    %316 = vector.broadcast %cst_78 : f32 to vector<1x128xf32>
    %317 = arith.select %2, %315, %316 : vector<1x128xi1>, vector<1x128xf32>
    %c1_79 = arith.constant 1 : index
    %c0_80 = arith.constant 0 : index
    %c0_81 = arith.constant 0 : index
    %318 = vector.load %arg6[%c1_79, %c0_80, %c0_81] : memref<2x1x128xf32, #tpu.memory_space<vmem>>, vector<1x1x128xf32>
    %319 = vector.shape_cast %318 : vector<1x1x128xf32> to vector<1x128xf32>
    %cst_82 = arith.constant dense<0xFF800000> : vector<1xf32>
    %320 = vector.multi_reduction <maximumf>, %317, %cst_82 [1] : vector<1x128xf32> to vector<1xf32>
    %321 = vector.shape_cast %320 : vector<1xf32> to vector<1x1xf32>
    %322 = vector.broadcast %321 : vector<1x1xf32> to vector<1x128xf32>
    %323 = arith.subf %317, %322 : vector<1x128xf32>
    %324 = math.exp %323 : vector<1x128xf32>
    %cst_83 = arith.constant dense<0.000000e+00> : vector<1xf32>
    %325 = vector.multi_reduction <add>, %324, %cst_83 [1] : vector<1x128xf32> to vector<1xf32>
    %326 = vector.shape_cast %325 : vector<1xf32> to vector<1x1xf32>
    %327 = math.log %326 : vector<1x1xf32>
    %328 = arith.addf %327, %321 : vector<1x1xf32>
    %329 = vector.broadcast %328 : vector<1x1xf32> to vector<1x128xf32>
    %330 = arith.subf %317, %329 : vector<1x128xf32>
    %331 = arith.mulf %319, %330 : vector<1x128xf32>
    %cst_84 = arith.constant 0.000000e+00 : f32
    %332 = vector.broadcast %cst_84 : f32 to vector<1x128xf32>
    %333 = arith.select %2, %331, %332 : vector<1x128xi1>, vector<1x128xf32>
    %334 = vector.shape_cast %333 : vector<1x128xf32> to vector<1x1x128xf32>
    %cst_85 = arith.constant dense<0.000000e+00> : vector<1xf32>
    %335 = vector.multi_reduction <add>, %334, %cst_85 [1, 2] : vector<1x1x128xf32> to vector<1xf32>
    %336 = vector.shape_cast %335 : vector<1xf32> to vector<1x1x1xf32>
    %337 = vector.extract %336[0, 0, 0] : f32 from vector<1x1x1xf32>
    %cst_86 = arith.constant 0.000000e+00 : f32
    %338 = arith.subf %cst_86, %337 : f32
    %c1_87 = arith.constant 1 : index
    %c0_88 = arith.constant 0 : index
    %c0_89 = arith.constant 0 : index
    %339 = vector.load %arg7[%c1_87, %c0_88, %c0_89] : memref<2x128x128xf32, #tpu.memory_space<vmem>>, vector<1x128x128xf32>
    %340 = vector.shape_cast %339 : vector<1x128x128xf32> to vector<128x128xf32>
    %c1_90 = arith.constant 1 : index
    %c0_91 = arith.constant 0 : index
    %c0_92 = arith.constant 0 : index
    %341 = vector.load %arg8[%c1_90, %c0_91, %c0_92] : memref<2x128x128xf32, #tpu.memory_space<vmem>>, vector<1x128x128xf32>
    %342 = vector.shape_cast %341 : vector<1x128x128xf32> to vector<128x128xf32>
    %cst_93 = arith.constant 0.000000e+00 : f32
    %343 = vector.broadcast %cst_93 : f32 to vector<128x128xf32>
    %344 = arith.maximumf %340, %343 : vector<128x128xf32>
    %345 = arith.mulf %340, %342 : vector<128x128xf32>
    %346 = arith.subf %344, %345 : vector<128x128xf32>
    %347 = math.absf %340 : vector<128x128xf32>
    %cst_94 = arith.constant 0.000000e+00 : f32
    %348 = vector.broadcast %cst_94 : f32 to vector<128x128xf32>
    %349 = arith.subf %348, %347 : vector<128x128xf32>
    %350 = math.exp %349 : vector<128x128xf32>
    %cst_95 = arith.constant 1.000000e+00 : f32
    %351 = vector.broadcast %cst_95 : f32 to vector<128x128xf32>
    %352 = arith.addf %351, %350 : vector<128x128xf32>
    %353 = math.log %352 : vector<128x128xf32>
    %354 = arith.addf %346, %353 : vector<128x128xf32>
    %cst_96 = arith.constant 0.000000e+00 : f32
    %355 = vector.broadcast %cst_96 : f32 to vector<128x128xf32>
    %356 = arith.select %5, %354, %355 : vector<128x128xi1>, vector<128x128xf32>
    %cst_97 = arith.constant dense<0.000000e+00> : vector<128xf32>
    %357 = vector.multi_reduction <add>, %356, %cst_97 [1] : vector<128x128xf32> to vector<128xf32>
    %358 = vector.shape_cast %357 : vector<128xf32> to vector<128x1xf32>
    %359 = vector.broadcast %358 : vector<128x1xf32> to vector<128x128xf32>
    %360 = arith.mulf %359, %10 : vector<128x128xf32>
    %cst_98 = arith.constant dense<0.000000e+00> : vector<128xf32>
    %361 = vector.multi_reduction <add>, %360, %cst_98 [0] : vector<128x128xf32> to vector<128xf32>
    %362 = vector.shape_cast %361 : vector<128xf32> to vector<1x128xf32>
    %c1_99 = arith.constant 1 : index
    %c0_100 = arith.constant 0 : index
    %c0_101 = arith.constant 0 : index
    %363 = vector.load %arg1[%c1_99, %c0_100, %c0_101] : memref<2x8x128xf32, #tpu.memory_space<vmem>>, vector<1x8x128xf32>
    %364 = vector.shape_cast %363 : vector<1x8x128xf32> to vector<8x128xf32>
    %c1_102 = arith.constant 1 : index
    %c0_103 = arith.constant 0 : index
    %c0_104 = arith.constant 0 : index
    %365 = vector.load %arg2[%c1_102, %c0_103, %c0_104] : memref<2x8x128xf32, #tpu.memory_space<vmem>>, vector<1x8x128xf32>
    %366 = vector.shape_cast %365 : vector<1x8x128xf32> to vector<8x128xf32>
    %c1_105 = arith.constant 1 : index
    %c0_106 = arith.constant 0 : index
    %c0_107 = arith.constant 0 : index
    %367 = vector.load %arg3[%c1_105, %c0_106, %c0_107] : memref<2x8x128xf32, #tpu.memory_space<vmem>>, vector<1x8x128xf32>
    %368 = vector.shape_cast %367 : vector<1x8x128xf32> to vector<8x128xf32>
    %c1_108 = arith.constant 1 : index
    %c0_109 = arith.constant 0 : index
    %c0_110 = arith.constant 0 : index
    %369 = vector.load %arg4[%c1_108, %c0_109, %c0_110] : memref<2x8x128xf32, #tpu.memory_space<vmem>>, vector<1x8x128xf32>
    %370 = vector.shape_cast %369 : vector<1x8x128xf32> to vector<8x128xf32>
    %cst_111 = arith.constant 0.000000e+00 : f32
    %371 = vector.broadcast %cst_111 : f32 to vector<128x128xf32>
    %372 = vector.extract_strided_slice %364 {offsets = [0, 0], sizes = [1, 128], strides = [1, 1]} : vector<8x128xf32> to vector<1x128xf32>
    %373 = vector.broadcast %372 : vector<1x128xf32> to vector<128x128xf32>
    %374 = arith.mulf %373, %10 : vector<128x128xf32>
    %cst_112 = arith.constant dense<0.000000e+00> : vector<128xf32>
    %375 = vector.multi_reduction <add>, %374, %cst_112 [1] : vector<128x128xf32> to vector<128xf32>
    %376 = vector.shape_cast %375 : vector<128xf32> to vector<128x1xf32>
    %377 = vector.extract_strided_slice %366 {offsets = [0, 0], sizes = [1, 128], strides = [1, 1]} : vector<8x128xf32> to vector<1x128xf32>
    %378 = vector.broadcast %377 : vector<1x128xf32> to vector<128x128xf32>
    %379 = arith.mulf %378, %10 : vector<128x128xf32>
    %cst_113 = arith.constant dense<0.000000e+00> : vector<128xf32>
    %380 = vector.multi_reduction <add>, %379, %cst_113 [1] : vector<128x128xf32> to vector<128xf32>
    %381 = vector.shape_cast %380 : vector<128xf32> to vector<128x1xf32>
    %382 = vector.extract_strided_slice %368 {offsets = [0, 0], sizes = [1, 128], strides = [1, 1]} : vector<8x128xf32> to vector<1x128xf32>
    %383 = vector.broadcast %376 : vector<128x1xf32> to vector<128x128xf32>
    %384 = vector.broadcast %382 : vector<1x128xf32> to vector<128x128xf32>
    %385 = arith.subf %383, %384 : vector<128x128xf32>
    %386 = math.absf %385 : vector<128x128xf32>
    %387 = arith.addf %371, %386 : vector<128x128xf32>
    %388 = vector.extract_strided_slice %370 {offsets = [0, 0], sizes = [1, 128], strides = [1, 1]} : vector<8x128xf32> to vector<1x128xf32>
    %389 = vector.broadcast %381 : vector<128x1xf32> to vector<128x128xf32>
    %390 = vector.broadcast %388 : vector<1x128xf32> to vector<128x128xf32>
    %391 = arith.subf %389, %390 : vector<128x128xf32>
    %392 = math.absf %391 : vector<128x128xf32>
    %393 = arith.addf %387, %392 : vector<128x128xf32>
    %394 = vector.extract_strided_slice %364 {offsets = [1, 0], sizes = [1, 128], strides = [1, 1]} : vector<8x128xf32> to vector<1x128xf32>
    %395 = vector.broadcast %394 : vector<1x128xf32> to vector<128x128xf32>
    %396 = arith.mulf %395, %10 : vector<128x128xf32>
    %cst_114 = arith.constant dense<0.000000e+00> : vector<128xf32>
    %397 = vector.multi_reduction <add>, %396, %cst_114 [1] : vector<128x128xf32> to vector<128xf32>
    %398 = vector.shape_cast %397 : vector<128xf32> to vector<128x1xf32>
    %399 = vector.extract_strided_slice %366 {offsets = [1, 0], sizes = [1, 128], strides = [1, 1]} : vector<8x128xf32> to vector<1x128xf32>
    %400 = vector.broadcast %399 : vector<1x128xf32> to vector<128x128xf32>
    %401 = arith.mulf %400, %10 : vector<128x128xf32>
    %cst_115 = arith.constant dense<0.000000e+00> : vector<128xf32>
    %402 = vector.multi_reduction <add>, %401, %cst_115 [1] : vector<128x128xf32> to vector<128xf32>
    %403 = vector.shape_cast %402 : vector<128xf32> to vector<128x1xf32>
    %404 = vector.extract_strided_slice %368 {offsets = [1, 0], sizes = [1, 128], strides = [1, 1]} : vector<8x128xf32> to vector<1x128xf32>
    %405 = vector.broadcast %398 : vector<128x1xf32> to vector<128x128xf32>
    %406 = vector.broadcast %404 : vector<1x128xf32> to vector<128x128xf32>
    %407 = arith.subf %405, %406 : vector<128x128xf32>
    %408 = math.absf %407 : vector<128x128xf32>
    %409 = arith.addf %393, %408 : vector<128x128xf32>
    %410 = vector.extract_strided_slice %370 {offsets = [1, 0], sizes = [1, 128], strides = [1, 1]} : vector<8x128xf32> to vector<1x128xf32>
    %411 = vector.broadcast %403 : vector<128x1xf32> to vector<128x128xf32>
    %412 = vector.broadcast %410 : vector<1x128xf32> to vector<128x128xf32>
    %413 = arith.subf %411, %412 : vector<128x128xf32>
    %414 = math.absf %413 : vector<128x128xf32>
    %415 = arith.addf %409, %414 : vector<128x128xf32>
    %416 = vector.extract_strided_slice %364 {offsets = [2, 0], sizes = [1, 128], strides = [1, 1]} : vector<8x128xf32> to vector<1x128xf32>
    %417 = vector.broadcast %416 : vector<1x128xf32> to vector<128x128xf32>
    %418 = arith.mulf %417, %10 : vector<128x128xf32>
    %cst_116 = arith.constant dense<0.000000e+00> : vector<128xf32>
    %419 = vector.multi_reduction <add>, %418, %cst_116 [1] : vector<128x128xf32> to vector<128xf32>
    %420 = vector.shape_cast %419 : vector<128xf32> to vector<128x1xf32>
    %421 = vector.extract_strided_slice %366 {offsets = [2, 0], sizes = [1, 128], strides = [1, 1]} : vector<8x128xf32> to vector<1x128xf32>
    %422 = vector.broadcast %421 : vector<1x128xf32> to vector<128x128xf32>
    %423 = arith.mulf %422, %10 : vector<128x128xf32>
    %cst_117 = arith.constant dense<0.000000e+00> : vector<128xf32>
    %424 = vector.multi_reduction <add>, %423, %cst_117 [1] : vector<128x128xf32> to vector<128xf32>
    %425 = vector.shape_cast %424 : vector<128xf32> to vector<128x1xf32>
    %426 = vector.extract_strided_slice %368 {offsets = [2, 0], sizes = [1, 128], strides = [1, 1]} : vector<8x128xf32> to vector<1x128xf32>
    %427 = vector.broadcast %420 : vector<128x1xf32> to vector<128x128xf32>
    %428 = vector.broadcast %426 : vector<1x128xf32> to vector<128x128xf32>
    %429 = arith.subf %427, %428 : vector<128x128xf32>
    %430 = math.absf %429 : vector<128x128xf32>
    %431 = arith.addf %415, %430 : vector<128x128xf32>
    %432 = vector.extract_strided_slice %370 {offsets = [2, 0], sizes = [1, 128], strides = [1, 1]} : vector<8x128xf32> to vector<1x128xf32>
    %433 = vector.broadcast %425 : vector<128x1xf32> to vector<128x128xf32>
    %434 = vector.broadcast %432 : vector<1x128xf32> to vector<128x128xf32>
    %435 = arith.subf %433, %434 : vector<128x128xf32>
    %436 = math.absf %435 : vector<128x128xf32>
    %437 = arith.addf %431, %436 : vector<128x128xf32>
    %438 = vector.extract_strided_slice %364 {offsets = [3, 0], sizes = [1, 128], strides = [1, 1]} : vector<8x128xf32> to vector<1x128xf32>
    %439 = vector.broadcast %438 : vector<1x128xf32> to vector<128x128xf32>
    %440 = arith.mulf %439, %10 : vector<128x128xf32>
    %cst_118 = arith.constant dense<0.000000e+00> : vector<128xf32>
    %441 = vector.multi_reduction <add>, %440, %cst_118 [1] : vector<128x128xf32> to vector<128xf32>
    %442 = vector.shape_cast %441 : vector<128xf32> to vector<128x1xf32>
    %443 = vector.extract_strided_slice %366 {offsets = [3, 0], sizes = [1, 128], strides = [1, 1]} : vector<8x128xf32> to vector<1x128xf32>
    %444 = vector.broadcast %443 : vector<1x128xf32> to vector<128x128xf32>
    %445 = arith.mulf %444, %10 : vector<128x128xf32>
    %cst_119 = arith.constant dense<0.000000e+00> : vector<128xf32>
    %446 = vector.multi_reduction <add>, %445, %cst_119 [1] : vector<128x128xf32> to vector<128xf32>
    %447 = vector.shape_cast %446 : vector<128xf32> to vector<128x1xf32>
    %448 = vector.extract_strided_slice %368 {offsets = [3, 0], sizes = [1, 128], strides = [1, 1]} : vector<8x128xf32> to vector<1x128xf32>
    %449 = vector.broadcast %442 : vector<128x1xf32> to vector<128x128xf32>
    %450 = vector.broadcast %448 : vector<1x128xf32> to vector<128x128xf32>
    %451 = arith.subf %449, %450 : vector<128x128xf32>
    %452 = math.absf %451 : vector<128x128xf32>
    %453 = arith.addf %437, %452 : vector<128x128xf32>
    %454 = vector.extract_strided_slice %370 {offsets = [3, 0], sizes = [1, 128], strides = [1, 1]} : vector<8x128xf32> to vector<1x128xf32>
    %455 = vector.broadcast %447 : vector<128x1xf32> to vector<128x128xf32>
    %456 = vector.broadcast %454 : vector<1x128xf32> to vector<128x128xf32>
    %457 = arith.subf %455, %456 : vector<128x128xf32>
    %458 = math.absf %457 : vector<128x128xf32>
    %459 = arith.addf %453, %458 : vector<128x128xf32>
    %460 = vector.extract_strided_slice %364 {offsets = [0, 0], sizes = [1, 128], strides = [1, 1]} : vector<8x128xf32> to vector<1x128xf32>
    %461 = vector.extract_strided_slice %364 {offsets = [1, 0], sizes = [1, 128], strides = [1, 1]} : vector<8x128xf32> to vector<1x128xf32>
    %462 = vector.extract_strided_slice %364 {offsets = [2, 0], sizes = [1, 128], strides = [1, 1]} : vector<8x128xf32> to vector<1x128xf32>
    %463 = vector.extract_strided_slice %364 {offsets = [3, 0], sizes = [1, 128], strides = [1, 1]} : vector<8x128xf32> to vector<1x128xf32>
    %464 = vector.extract_strided_slice %368 {offsets = [0, 0], sizes = [1, 128], strides = [1, 1]} : vector<8x128xf32> to vector<1x128xf32>
    %465 = vector.extract_strided_slice %368 {offsets = [1, 0], sizes = [1, 128], strides = [1, 1]} : vector<8x128xf32> to vector<1x128xf32>
    %466 = vector.extract_strided_slice %368 {offsets = [2, 0], sizes = [1, 128], strides = [1, 1]} : vector<8x128xf32> to vector<1x128xf32>
    %467 = vector.extract_strided_slice %368 {offsets = [3, 0], sizes = [1, 128], strides = [1, 1]} : vector<8x128xf32> to vector<1x128xf32>
    %cst_120 = arith.constant 5.000000e-01 : f32
    %468 = vector.broadcast %cst_120 : f32 to vector<1x128xf32>
    %469 = arith.mulf %468, %462 : vector<1x128xf32>
    %470 = arith.subf %460, %469 : vector<1x128xf32>
    %cst_121 = arith.constant 5.000000e-01 : f32
    %471 = vector.broadcast %cst_121 : f32 to vector<1x128xf32>
    %472 = arith.mulf %471, %463 : vector<1x128xf32>
    %473 = arith.subf %461, %472 : vector<1x128xf32>
    %cst_122 = arith.constant 5.000000e-01 : f32
    %474 = vector.broadcast %cst_122 : f32 to vector<1x128xf32>
    %475 = arith.mulf %474, %462 : vector<1x128xf32>
    %476 = arith.addf %460, %475 : vector<1x128xf32>
    %cst_123 = arith.constant 5.000000e-01 : f32
    %477 = vector.broadcast %cst_123 : f32 to vector<1x128xf32>
    %478 = arith.mulf %477, %463 : vector<1x128xf32>
    %479 = arith.addf %461, %478 : vector<1x128xf32>
    %cst_124 = arith.constant 5.000000e-01 : f32
    %480 = vector.broadcast %cst_124 : f32 to vector<1x128xf32>
    %481 = arith.mulf %480, %466 : vector<1x128xf32>
    %482 = arith.subf %464, %481 : vector<1x128xf32>
    %cst_125 = arith.constant 5.000000e-01 : f32
    %483 = vector.broadcast %cst_125 : f32 to vector<1x128xf32>
    %484 = arith.mulf %483, %467 : vector<1x128xf32>
    %485 = arith.subf %465, %484 : vector<1x128xf32>
    %cst_126 = arith.constant 5.000000e-01 : f32
    %486 = vector.broadcast %cst_126 : f32 to vector<1x128xf32>
    %487 = arith.mulf %486, %466 : vector<1x128xf32>
    %488 = arith.addf %464, %487 : vector<1x128xf32>
    %cst_127 = arith.constant 5.000000e-01 : f32
    %489 = vector.broadcast %cst_127 : f32 to vector<1x128xf32>
    %490 = arith.mulf %489, %467 : vector<1x128xf32>
    %491 = arith.addf %465, %490 : vector<1x128xf32>
    %492 = arith.subf %476, %470 : vector<1x128xf32>
    %493 = arith.subf %479, %473 : vector<1x128xf32>
    %494 = arith.mulf %492, %493 : vector<1x128xf32>
    %495 = arith.subf %488, %482 : vector<1x128xf32>
    %496 = arith.subf %491, %485 : vector<1x128xf32>
    %497 = arith.mulf %495, %496 : vector<1x128xf32>
    %498 = arith.maximumf %470, %482 : vector<1x128xf32>
    %499 = arith.maximumf %473, %485 : vector<1x128xf32>
    %500 = arith.minimumf %476, %488 : vector<1x128xf32>
    %501 = arith.minimumf %479, %491 : vector<1x128xf32>
    %502 = arith.subf %500, %498 : vector<1x128xf32>
    %cst_128 = arith.constant 0.000000e+00 : f32
    %503 = vector.broadcast %cst_128 : f32 to vector<1x128xf32>
    %504 = arith.maximumf %502, %503 : vector<1x128xf32>
    %505 = arith.subf %501, %499 : vector<1x128xf32>
    %cst_129 = arith.constant 0.000000e+00 : f32
    %506 = vector.broadcast %cst_129 : f32 to vector<1x128xf32>
    %507 = arith.maximumf %505, %506 : vector<1x128xf32>
    %508 = arith.mulf %504, %507 : vector<1x128xf32>
    %509 = arith.addf %494, %497 : vector<1x128xf32>
    %510 = arith.subf %509, %508 : vector<1x128xf32>
    %cst_130 = arith.constant 9.99999971E-10 : f32
    %511 = vector.broadcast %cst_130 : f32 to vector<1x128xf32>
    %512 = arith.maximumf %510, %511 : vector<1x128xf32>
    %513 = tpu.reciprocal %512 : vector<1x128xf32> -> vector<1x128xf32>
    %514 = arith.mulf %508, %513 : vector<1x128xf32>
    %515 = arith.minimumf %470, %482 : vector<1x128xf32>
    %516 = arith.minimumf %473, %485 : vector<1x128xf32>
    %517 = arith.maximumf %476, %488 : vector<1x128xf32>
    %518 = arith.maximumf %479, %491 : vector<1x128xf32>
    %519 = arith.subf %517, %515 : vector<1x128xf32>
    %520 = arith.subf %518, %516 : vector<1x128xf32>
    %521 = arith.mulf %519, %520 : vector<1x128xf32>
    %cst_131 = arith.constant 9.99999971E-10 : f32
    %522 = vector.broadcast %cst_131 : f32 to vector<1x128xf32>
    %523 = arith.maximumf %521, %522 : vector<1x128xf32>
    %524 = arith.subf %523, %512 : vector<1x128xf32>
    %525 = tpu.reciprocal %523 : vector<1x128xf32> -> vector<1x128xf32>
    %526 = arith.mulf %524, %525 : vector<1x128xf32>
    %527 = arith.subf %514, %526 : vector<1x128xf32>
    %cst_132 = arith.constant 1.000000e+00 : f32
    %528 = vector.broadcast %cst_132 : f32 to vector<1x128xf32>
    %529 = arith.subf %528, %527 : vector<1x128xf32>
    %530 = vector.extract_strided_slice %366 {offsets = [0, 0], sizes = [1, 128], strides = [1, 1]} : vector<8x128xf32> to vector<1x128xf32>
    %531 = vector.extract_strided_slice %366 {offsets = [1, 0], sizes = [1, 128], strides = [1, 1]} : vector<8x128xf32> to vector<1x128xf32>
    %532 = vector.extract_strided_slice %366 {offsets = [2, 0], sizes = [1, 128], strides = [1, 1]} : vector<8x128xf32> to vector<1x128xf32>
    %533 = vector.extract_strided_slice %366 {offsets = [3, 0], sizes = [1, 128], strides = [1, 1]} : vector<8x128xf32> to vector<1x128xf32>
    %534 = vector.extract_strided_slice %370 {offsets = [0, 0], sizes = [1, 128], strides = [1, 1]} : vector<8x128xf32> to vector<1x128xf32>
    %535 = vector.extract_strided_slice %370 {offsets = [1, 0], sizes = [1, 128], strides = [1, 1]} : vector<8x128xf32> to vector<1x128xf32>
    %536 = vector.extract_strided_slice %370 {offsets = [2, 0], sizes = [1, 128], strides = [1, 1]} : vector<8x128xf32> to vector<1x128xf32>
    %537 = vector.extract_strided_slice %370 {offsets = [3, 0], sizes = [1, 128], strides = [1, 1]} : vector<8x128xf32> to vector<1x128xf32>
    %cst_133 = arith.constant 5.000000e-01 : f32
    %538 = vector.broadcast %cst_133 : f32 to vector<1x128xf32>
    %539 = arith.mulf %538, %532 : vector<1x128xf32>
    %540 = arith.subf %530, %539 : vector<1x128xf32>
    %cst_134 = arith.constant 5.000000e-01 : f32
    %541 = vector.broadcast %cst_134 : f32 to vector<1x128xf32>
    %542 = arith.mulf %541, %533 : vector<1x128xf32>
    %543 = arith.subf %531, %542 : vector<1x128xf32>
    %cst_135 = arith.constant 5.000000e-01 : f32
    %544 = vector.broadcast %cst_135 : f32 to vector<1x128xf32>
    %545 = arith.mulf %544, %532 : vector<1x128xf32>
    %546 = arith.addf %530, %545 : vector<1x128xf32>
    %cst_136 = arith.constant 5.000000e-01 : f32
    %547 = vector.broadcast %cst_136 : f32 to vector<1x128xf32>
    %548 = arith.mulf %547, %533 : vector<1x128xf32>
    %549 = arith.addf %531, %548 : vector<1x128xf32>
    %cst_137 = arith.constant 5.000000e-01 : f32
    %550 = vector.broadcast %cst_137 : f32 to vector<1x128xf32>
    %551 = arith.mulf %550, %536 : vector<1x128xf32>
    %552 = arith.subf %534, %551 : vector<1x128xf32>
    %cst_138 = arith.constant 5.000000e-01 : f32
    %553 = vector.broadcast %cst_138 : f32 to vector<1x128xf32>
    %554 = arith.mulf %553, %537 : vector<1x128xf32>
    %555 = arith.subf %535, %554 : vector<1x128xf32>
    %cst_139 = arith.constant 5.000000e-01 : f32
    %556 = vector.broadcast %cst_139 : f32 to vector<1x128xf32>
    %557 = arith.mulf %556, %536 : vector<1x128xf32>
    %558 = arith.addf %534, %557 : vector<1x128xf32>
    %cst_140 = arith.constant 5.000000e-01 : f32
    %559 = vector.broadcast %cst_140 : f32 to vector<1x128xf32>
    %560 = arith.mulf %559, %537 : vector<1x128xf32>
    %561 = arith.addf %535, %560 : vector<1x128xf32>
    %562 = arith.subf %546, %540 : vector<1x128xf32>
    %563 = arith.subf %549, %543 : vector<1x128xf32>
    %564 = arith.mulf %562, %563 : vector<1x128xf32>
    %565 = arith.subf %558, %552 : vector<1x128xf32>
    %566 = arith.subf %561, %555 : vector<1x128xf32>
    %567 = arith.mulf %565, %566 : vector<1x128xf32>
    %568 = arith.maximumf %540, %552 : vector<1x128xf32>
    %569 = arith.maximumf %543, %555 : vector<1x128xf32>
    %570 = arith.minimumf %546, %558 : vector<1x128xf32>
    %571 = arith.minimumf %549, %561 : vector<1x128xf32>
    %572 = arith.subf %570, %568 : vector<1x128xf32>
    %cst_141 = arith.constant 0.000000e+00 : f32
    %573 = vector.broadcast %cst_141 : f32 to vector<1x128xf32>
    %574 = arith.maximumf %572, %573 : vector<1x128xf32>
    %575 = arith.subf %571, %569 : vector<1x128xf32>
    %cst_142 = arith.constant 0.000000e+00 : f32
    %576 = vector.broadcast %cst_142 : f32 to vector<1x128xf32>
    %577 = arith.maximumf %575, %576 : vector<1x128xf32>
    %578 = arith.mulf %574, %577 : vector<1x128xf32>
    %579 = arith.addf %564, %567 : vector<1x128xf32>
    %580 = arith.subf %579, %578 : vector<1x128xf32>
    %cst_143 = arith.constant 9.99999971E-10 : f32
    %581 = vector.broadcast %cst_143 : f32 to vector<1x128xf32>
    %582 = arith.maximumf %580, %581 : vector<1x128xf32>
    %583 = tpu.reciprocal %582 : vector<1x128xf32> -> vector<1x128xf32>
    %584 = arith.mulf %578, %583 : vector<1x128xf32>
    %585 = arith.minimumf %540, %552 : vector<1x128xf32>
    %586 = arith.minimumf %543, %555 : vector<1x128xf32>
    %587 = arith.maximumf %546, %558 : vector<1x128xf32>
    %588 = arith.maximumf %549, %561 : vector<1x128xf32>
    %589 = arith.subf %587, %585 : vector<1x128xf32>
    %590 = arith.subf %588, %586 : vector<1x128xf32>
    %591 = arith.mulf %589, %590 : vector<1x128xf32>
    %cst_144 = arith.constant 9.99999971E-10 : f32
    %592 = vector.broadcast %cst_144 : f32 to vector<1x128xf32>
    %593 = arith.maximumf %591, %592 : vector<1x128xf32>
    %594 = arith.subf %593, %582 : vector<1x128xf32>
    %595 = tpu.reciprocal %593 : vector<1x128xf32> -> vector<1x128xf32>
    %596 = arith.mulf %594, %595 : vector<1x128xf32>
    %597 = arith.subf %584, %596 : vector<1x128xf32>
    %cst_145 = arith.constant 1.000000e+00 : f32
    %598 = vector.broadcast %cst_145 : f32 to vector<1x128xf32>
    %599 = arith.subf %598, %597 : vector<1x128xf32>
    %600 = arith.addf %529, %599 : vector<1x128xf32>
    %cst_146 = arith.constant 1.000000e+00 : f32
    %601 = arith.mulf %cst_146, %338 : f32
    %cst_147 = arith.constant 1.000000e+00 : f32
    %602 = vector.broadcast %cst_147 : f32 to vector<1x128xf32>
    %603 = arith.mulf %602, %362 : vector<1x128xf32>
    %604 = vector.broadcast %601 : f32 to vector<1x128xf32>
    %605 = arith.addf %604, %603 : vector<1x128xf32>
    %cst_148 = arith.constant 1.000000e+00 : f32
    %606 = vector.broadcast %cst_148 : f32 to vector<128x128xf32>
    %607 = arith.mulf %606, %459 : vector<128x128xf32>
    %608 = vector.broadcast %605 : vector<1x128xf32> to vector<128x128xf32>
    %609 = arith.addf %608, %607 : vector<128x128xf32>
    %cst_149 = arith.constant 1.000000e+00 : f32
    %610 = vector.broadcast %cst_149 : f32 to vector<1x128xf32>
    %611 = arith.mulf %610, %600 : vector<1x128xf32>
    %612 = vector.broadcast %611 : vector<1x128xf32> to vector<128x128xf32>
    %613 = arith.addf %609, %612 : vector<128x128xf32>
    %c1_150 = arith.constant 1 : index
    %c0_151 = arith.constant 0 : index
    %c0_152 = arith.constant 0 : index
    %614 = vector.load %arg9[%c1_150, %c0_151, %c0_152] : memref<2x128x128xf32, #tpu.memory_space<vmem>>, vector<1x128x128xf32>
    %615 = vector.shape_cast %614 : vector<1x128x128xf32> to vector<128x128xf32>
    %616 = vector.shape_cast %613 : vector<128x128xf32> to vector<1x128x128xf32>
    tpu.vector_store %arg9[%c1_150, %c0_151, %c0_152], %616 {strides = array<i32>} : memref<2x128x128xf32, #tpu.memory_space<vmem>>, vector<1x128x128xf32>,
    return
  }
  func.func @transform_0(%arg0: i32) -> (i32, i32, i32) {
    %c0_i32 = arith.constant 0 : i32
    %c0_i32_0 = arith.constant 0 : i32
    %c0_i32_1 = arith.constant 0 : i32
    return %arg0, %c0_i32, %c0_i32_0 : i32, i32, i32
  }
  func.func @transform_1(%arg0: i32) -> (i32, i32, i32) {
    %c0_i32 = arith.constant 0 : i32
    %c0_i32_0 = arith.constant 0 : i32
    %c0_i32_1 = arith.constant 0 : i32
    return %arg0, %c0_i32, %c0_i32_0 : i32, i32, i32
  }
  func.func @transform_2(%arg0: i32) -> (i32, i32, i32) {
    %c0_i32 = arith.constant 0 : i32
    %c0_i32_0 = arith.constant 0 : i32
    %c0_i32_1 = arith.constant 0 : i32
    return %arg0, %c0_i32, %c0_i32_0 : i32, i32, i32
  }
  func.func @transform_3(%arg0: i32) -> (i32, i32, i32) {
    %c0_i32 = arith.constant 0 : i32
    %c0_i32_0 = arith.constant 0 : i32
    %c0_i32_1 = arith.constant 0 : i32
    return %arg0, %c0_i32, %c0_i32_0 : i32, i32, i32
  }
  func.func @transform_4(%arg0: i32) -> (i32, i32, i32) {
    %c0_i32 = arith.constant 0 : i32
    %c0_i32_0 = arith.constant 0 : i32
    %c0_i32_1 = arith.constant 0 : i32
    return %arg0, %c0_i32, %c0_i32_0 : i32, i32, i32
  }
  func.func @transform_5(%arg0: i32) -> (i32, i32, i32) {
    %c0_i32 = arith.constant 0 : i32
    %c0_i32_0 = arith.constant 0 : i32
    %c0_i32_1 = arith.constant 0 : i32
    return %arg0, %c0_i32, %c0_i32_0 : i32, i32, i32
  }
  func.func @transform_6(%arg0: i32) -> (i32, i32, i32) {
    %c0_i32 = arith.constant 0 : i32
    %c0_i32_0 = arith.constant 0 : i32
    %c0_i32_1 = arith.constant 0 : i32
    return %arg0, %c0_i32, %c0_i32_0 : i32, i32, i32
  }
  func.func @transform_7(%arg0: i32) -> (i32, i32, i32) {
    %c0_i32 = arith.constant 0 : i32
    %c0_i32_0 = arith.constant 0 : i32
    %c0_i32_1 = arith.constant 0 : i32
    return %arg0, %c0_i32, %c0_i32_0 : i32, i32, i32
  }
  func.func @transform_8(%arg0: i32) -> (i32, i32, i32) {
    %c0_i32 = arith.constant 0 : i32
    %c0_i32_0 = arith.constant 0 : i32
    %c0_i32_1 = arith.constant 0 : i32
    return %arg0, %c0_i32, %c0_i32_0 : i32, i32, i32
  }
}

</mosaic_0001>

<llo_original>
// kernel: tpu_custom_call.1
$region0: #{tpu_custom_call.1}
  #allocation0 [shape = 'u32[]', space=smem, size = 0x4, offset = 0x4, fixed_abs, tag = 'smem constant byte address 0x4 - core index']
  #allocation1 [shape = 'u32[144,128]{1,0:T(1,128)}', space=vmem, size = 0x12000, scoped, tag = 'internal scratch']
  %s0 = inlined_call_operand.hbm [shape: f32[4,8,128], index: 0, kind: input, shape index: {}]
  %s1 = inlined_call_operand.hbm [shape: f32[4,8,128], index: 1, kind: input, shape index: {}]
  %s2 = inlined_call_operand.hbm [shape: f32[4,8,128], index: 2, kind: input, shape index: {}]
  %s3 = inlined_call_operand.hbm [shape: f32[4,8,128], index: 3, kind: input, shape index: {}]
  %s4 = inlined_call_operand.vmem [shape: f32[4,1,128], index: 4, kind: input, shape index: {}]
  %s5 = inlined_call_operand.vmem [shape: f32[4,1,128], index: 5, kind: input, shape index: {}]
  %s6 = inlined_call_operand.hbm [shape: f32[4,128,128], index: 6, kind: input, shape index: {}]
  %s7 = inlined_call_operand.hbm [shape: f32[4,128,128], index: 7, kind: input, shape index: {}]
  %s8 = inlined_call_operand.hbm [shape: f32[4,128,128], index: 8, kind: output, shape index: {}]
  %s9 = sld [smem:[#allocation0]]
  $region89: #{tpu_custom_call.1} parent=0
    _
  %s11 = ssub.s32 1, %s9
  %s12 = scalar_select 0, %s11, %s9
  $region1: #{tpu_custom_call.1} parent=0
    #allocation2 [shape = 'u8[16384]{0}', space=vmem, size = 0x4000, scoped, tag = 'input window, operand 0']
    #allocation3 [shape = 's32[2]{0}', space=sflag, size = 0x8, scoped, tag = 'scoped memory for tpu_custom_call.1']
    #allocation4 [shape = 's32[2]{0}', space=sflag, size = 0x8, scoped, tag = 'scoped memory for tpu_custom_call.1']
    #allocation5 [shape = 'u8[16384]{0}', space=vmem, size = 0x4000, scoped, tag = 'input window, operand 1']
    #allocation6 [shape = 's32[2]{0}', space=sflag, size = 0x8, scoped, tag = 'scoped memory for tpu_custom_call.1']
    #allocation7 [shape = 'u8[16384]{0}', space=vmem, size = 0x4000, scoped, tag = 'input window, operand 2']
    #allocation8 [shape = 'u8[16384]{0}', space=vmem, size = 0x4000, scoped, tag = 'input window, operand 3']
    #allocation9 [shape = 's32[2]{0}', space=sflag, size = 0x8, scoped, tag = 'scoped memory for tpu_custom_call.1']
    #allocation10 [shape = 'u8[262144]{0}', space=vmem, size = 0x40000, scoped, tag = 'input window, operand 6']
    #allocation11 [shape = 'u8[262144]{0}', space=vmem, size = 0x40000, scoped, tag = 'input window, operand 7']
    #allocation12 [shape = 's32[2]{0}', space=sflag, size = 0x8, scoped, tag = 'scoped memory for tpu_custom_call.1']
    #allocation13 [shape = 'u8[262144]{0}', space=vmem, size = 0x40000, scoped, tag = 'output window, operand 0']
    %13 = vsyncpa [#allocation3], 0
    %s14 = scalar_lea.sflag [#allocation3], 1
    %15 = vsyncpa %s14, 0
    %16 = vsyncpa [#allocation6], 0
    %s17 = scalar_lea.sflag [#allocation6], 1
    %18 = vsyncpa %s17, 0
    %19 = vsyncpa [#allocation9], 0
    %s20 = scalar_lea.sflag [#allocation9], 1
    %21 = vsyncpa %s20, 0
    %22 = vsyncpa [#allocation12], 0
    %s23 = scalar_lea.sflag [#allocation12], 1
    %24 = vsyncpa %s23, 0
    %25 = vsyncpa [#allocation4], 0
    %s26 = scalar_lea.sflag [#allocation4], 1
    %27 = vsyncpa %s26, 0
    loop: start=0, step=1, limit=4
    $region2: #{tpu_custom_call.1} parent=1 // loop_pre_header
      _
    $region3: #{tpu_custom_call.1} parent=1 // loop_header
      %s29 = sphi 0, %s33
      %p30 = scmp.ge.s32.totalorder %s29, 4
      %s39 = sphi 0, %s41
      %s42 = sphi 0, %s39
      %s43 = sphi 0, %s42
      %s59 = sphi 0, %s43
      %s65 = sphi 0, %s67
      %s68 = sphi 0, %s65
      %s69 = sphi 0, %s68
      %s85 = sphi 0, %s69
      %s91 = sphi 0, %s93
      %s94 = sphi 0, %s91
      %s95 = sphi 0, %s94
      %s111 = sphi 0, %s95
      %s117 = sphi 0, %s119
      %s120 = sphi 0, %s117
      %s121 = sphi 0, %s120
      %s137 = sphi 0, %s121
      %s143 = sphi 0, %s145
      %s146 = sphi 0, %s143
      %s147 = sphi 0, %s146
      %s163 = sphi 0, %s147
      %s169 = sphi 0, %s171
      %s172 = sphi 0, %s169
      %s173 = sphi 0, %s172
      %s189 = sphi 0, %s173
      %s195 = sphi 0, %s197
      %s198 = sphi 0, %s195
      %s199 = sphi 0, %s198
      %s215 = sphi 0, %s199
      %s221 = sphi 0, %s223
      %s224 = sphi 0, %s221
      %s225 = sphi 0, %s224
      %s241 = sphi 0, %s225
      %s247 = sphi 0, %s249
      %s250 = sphi 0, %s247
      %s251 = sphi 0, %s250
      %s267 = sphi 0, %s251
    $region4: #{tpu_custom_call.1} parent=1 // loop_header_branch
      %32 = sbr.rel (%p30) target = $region8
    $region5: #{tpu_custom_call.1} parent=1 // loop_body
      %s34 = ssub.s32 %s29, 1
      %s35 = ssub.s32 %s29, 2
      %s36 = sadd.s32 %s29, 1
      %s37 = ssub.s32 %s29, %s36
      %p38 = scmp.eq.s32.totalorder %s37, 0
      %s40 = sadd.s32 %s39, 1
      %s41 = scalar_select %p38, %s39, %s40
      %p44 = pneg %p38
      %p45 = scmp.eq.s32.totalorder %s29, 1
      %p46 = por %p44, %p45
      %p47 = scmp.ne.s32.totalorder %s39, %s42
      %p48 = scmp.eq.s32.totalorder %s29, 0
      %p49 = por %p47, %p48
      %p50 = scmp.ne.s32.totalorder %s39, %s42
      %p51 = scmp.eq.s32.totalorder %s34, 1
      %p52 = por %p50, %p51
      %p53 = scmp.ne.s32.totalorder %s42, %s43
      %p54 = scmp.eq.s32.totalorder %s34, 0
      %p55 = por %p53, %p54
      %p56 = scmp.ne.s32.totalorder %s42, %s43
      %p57 = scmp.eq.s32.totalorder %s35, 1
      %p58 = por %p56, %p57
      %p60 = scmp.ne.s32.totalorder %s43, %s59
      %p61 = scmp.eq.s32.totalorder %s35, 0
      %p62 = por %p60, %p61
      %s63 = ssub.s32 %s29, %s36
      %p64 = scmp.eq.s32.totalorder %s63, 0
      %s66 = sadd.s32 %s65, 1
      %s67 = scalar_select %p64, %s65, %s66
      %p70 = pneg %p64
      %p71 = scmp.eq.s32.totalorder %s29, 1
      %p72 = por %p70, %p71
      %p73 = scmp.ne.s32.totalorder %s65, %s68
      %p74 = scmp.eq.s32.totalorder %s29, 0
      %p75 = por %p73, %p74
      %p76 = scmp.ne.s32.totalorder %s65, %s68
      %p77 = scmp.eq.s32.totalorder %s34, 1
      %p78 = por %p76, %p77
      %p79 = scmp.ne.s32.totalorder %s68, %s69
      %p80 = scmp.eq.s32.totalorder %s34, 0
      %p81 = por %p79, %p80
      %p82 = scmp.ne.s32.totalorder %s68, %s69
      %p83 = scmp.eq.s32.totalorder %s35, 1
      %p84 = por %p82, %p83
      %p86 = scmp.ne.s32.totalorder %s69, %s85
      %p87 = scmp.eq.s32.totalorder %s35, 0
      %p88 = por %p86, %p87
      %s89 = ssub.s32 %s29, %s36
      %p90 = scmp.eq.s32.totalorder %s89, 0
      %s92 = sadd.s32 %s91, 1
      %s93 = scalar_select %p90, %s91, %s92
      %p96 = pneg %p90
      %p97 = scmp.eq.s32.totalorder %s29, 1
      %p98 = por %p96, %p97
      %p99 = scmp.ne.s32.totalorder %s91, %s94
      %p100 = scmp.eq.s32.totalorder %s29, 0
      %p101 = por %p99, %p100
      %p102 = scmp.ne.s32.totalorder %s91, %s94
      %p103 = scmp.eq.s32.totalorder %s34, 1
      %p104 = por %p102, %p103
      %p105 = scmp.ne.s32.totalorder %s94, %s95
      %p106 = scmp.eq.s32.totalorder %s34, 0
      %p107 = por %p105, %p106
      %p108 = scmp.ne.s32.totalorder %s94, %s95
      %p109 = scmp.eq.s32.totalorder %s35, 1
      %p110 = por %p108, %p109
      %p112 = scmp.ne.s32.totalorder %s95, %s111
      %p113 = scmp.eq.s32.totalorder %s35, 0
      %p114 = por %p112, %p113
      %s115 = ssub.s32 %s29, %s36
      %p116 = scmp.eq.s32.totalorder %s115, 0
      %s118 = sadd.s32 %s117, 1
      %s119 = scalar_select %p116, %s117, %s118
      %p122 = pneg %p116
      %p123 = scmp.eq.s32.totalorder %s29, 1
      %p124 = por %p122, %p123
      %p125 = scmp.ne.s32.totalorder %s117, %s120
      %p126 = scmp.eq.s32.totalorder %s29, 0
      %p127 = por %p125, %p126
      %p128 = scmp.ne.s32.totalorder %s117, %s120
      %p129 = scmp.eq.s32.totalorder %s34, 1
      %p130 = por %p128, %p129
      %p131 = scmp.ne.s32.totalorder %s120, %s121
      %p132 = scmp.eq.s32.totalorder %s34, 0
      %p133 = por %p131, %p132
      %p134 = scmp.ne.s32.totalorder %s120, %s121
      %p135 = scmp.eq.s32.totalorder %s35, 1
      %p136 = por %p134, %p135
      %p138 = scmp.ne.s32.totalorder %s121, %s137
      %p139 = scmp.eq.s32.totalorder %s35, 0
      %p140 = por %p138, %p139
      %s141 = ssub.s32 %s29, %s36
      %p142 = scmp.eq.s32.totalorder %s141, 0
      %s144 = sadd.s32 %s143, 1
      %s145 = scalar_select %p142, %s143, %s144
      %p148 = pneg %p142
      %p149 = scmp.eq.s32.totalorder %s29, 1
      %p150 = por %p148, %p149
      %p151 = scmp.ne.s32.totalorder %s143, %s146
      %p152 = scmp.eq.s32.totalorder %s29, 0
      %p153 = por %p151, %p152
      %p154 = scmp.ne.s32.totalorder %s143, %s146
      %p155 = scmp.eq.s32.totalorder %s34, 1
      %p156 = por %p154, %p155
      %p157 = scmp.ne.s32.totalorder %s146, %s147
      %p158 = scmp.eq.s32.totalorder %s34, 0
      %p159 = por %p157, %p158
      %p160 = scmp.ne.s32.totalorder %s146, %s147
      %p161 = scmp.eq.s32.totalorder %s35, 1
      %p162 = por %p160, %p161
      %p164 = scmp.ne.s32.totalorder %s147, %s163
      %p165 = scmp.eq.s32.totalorder %s35, 0
      %p166 = por %p164, %p165
      %s167 = ssub.s32 %s29, %s36
      %p168 = scmp.eq.s32.totalorder %s167, 0
      %s170 = sadd.s32 %s169, 1
      %s171 = scalar_select %p168, %s169, %s170
      %p174 = pneg %p168
      %p175 = scmp.eq.s32.totalorder %s29, 1
      %p176 = por %p174, %p175
      %p177 = scmp.ne.s32.totalorder %s169, %s172
      %p178 = scmp.eq.s32.totalorder %s29, 0
      %p179 = por %p177, %p178
      %p180 = scmp.ne.s32.totalorder %s169, %s172
      %p181 = scmp.eq.s32.totalorder %s34, 1
      %p182 = por %p180, %p181
      %p183 = scmp.ne.s32.totalorder %s172, %s173
      %p184 = scmp.eq.s32.totalorder %s34, 0
      %p185 = por %p183, %p184
      %p186 = scmp.ne.s32.totalorder %s172, %s173
      %p187 = scmp.eq.s32.totalorder %s35, 1
      %p188 = por %p186, %p187
      %p190 = scmp.ne.s32.totalorder %s173, %s189
      %p191 = scmp.eq.s32.totalorder %s35, 0
      %p192 = por %p190, %p191
      %s193 = ssub.s32 %s29, %s36
      %p194 = scmp.eq.s32.totalorder %s193, 0
      %s196 = sadd.s32 %s195, 1
      %s197 = scalar_select %p194, %s195, %s196
      %p200 = pneg %p194
      %p201 = scmp.eq.s32.totalorder %s29, 1
      %p202 = por %p200, %p201
      %p203 = scmp.ne.s32.totalorder %s195, %s198
      %p204 = scmp.eq.s32.totalorder %s29, 0
      %p205 = por %p203, %p204
      %p206 = scmp.ne.s32.totalorder %s195, %s198
      %p207 = scmp.eq.s32.totalorder %s34, 1
      %p208 = por %p206, %p207
      %p209 = scmp.ne.s32.totalorder %s198, %s199
      %p210 = scmp.eq.s32.totalorder %s34, 0
      %p211 = por %p209, %p210
      %p212 = scmp.ne.s32.totalorder %s198, %s199
      %p213 = scmp.eq.s32.totalorder %s35, 1
      %p214 = por %p212, %p213
      %p216 = scmp.ne.s32.totalorder %s199, %s215
      %p217 = scmp.eq.s32.totalorder %s35, 0
      %p218 = por %p216, %p217
      %s219 = ssub.s32 %s29, %s36
      %p220 = scmp.eq.s32.totalorder %s219, 0
      %s222 = sadd.s32 %s221, 1
      %s223 = scalar_select %p220, %s221, %s222
      %p226 = pneg %p220
      %p227 = scmp.eq.s32.totalorder %s29, 1
      %p228 = por %p226, %p227
      %p229 = scmp.ne.s32.totalorder %s221, %s224
      %p230 = scmp.eq.s32.totalorder %s29, 0
      %p231 = por %p229, %p230
      %p232 = scmp.ne.s32.totalorder %s221, %s224
      %p233 = scmp.eq.s32.totalorder %s34, 1
      %p234 = por %p232, %p233
      %p235 = scmp.ne.s32.totalorder %s224, %s225
      %p236 = scmp.eq.s32.totalorder %s34, 0
      %p237 = por %p235, %p236
      %p238 = scmp.ne.s32.totalorder %s224, %s225
      %p239 = scmp.eq.s32.totalorder %s35, 1
      %p240 = por %p238, %p239
      %p242 = scmp.ne.s32.totalorder %s225, %s241
      %p243 = scmp.eq.s32.totalorder %s35, 0
      %p244 = por %p242, %p243
      %s245 = ssub.s32 %s29, %s36
      %p246 = scmp.eq.s32.totalorder %s245, 0
      %s248 = sadd.s32 %s247, 1
      %s249 = scalar_select %p246, %s247, %s248
      %p252 = pneg %p246
      %p253 = scmp.eq.s32.totalorder %s29, 1
      %p254 = por %p252, %p253
      %p255 = scmp.ne.s32.totalorder %s247, %s250
      %p256 = scmp.eq.s32.totalorder %s29, 0
      %p257 = por %p255, %p256
      %p258 = scmp.ne.s32.totalorder %s247, %s250
      %p259 = scmp.eq.s32.totalorder %s34, 1
      %p260 = por %p258, %p259
      %p261 = scmp.ne.s32.totalorder %s250, %s251
      %p262 = scmp.eq.s32.totalorder %s34, 0
      %p263 = por %p261, %p262
      %p264 = scmp.ne.s32.totalorder %s250, %s251
      %p265 = scmp.eq.s32.totalorder %s35, 1
      %p266 = por %p264, %p265
      %p268 = scmp.ne.s32.totalorder %s251, %s267
      %p269 = scmp.eq.s32.totalorder %s35, 0
      %p270 = por %p268, %p269
      %p271 = scmp.le.s32.totalorder 1, %s29
      %p272 = scmp.lt.s32.totalorder %s29, 3
      %p273 = pnand %p271, %p272
      %p274 = pneg %p273
      // Predicated region
      $region9: #{tpu_custom_call.1} parent=5 // pred_check
        _
      $region10: #{tpu_custom_call.1} parent=5 // pred_check_branch
        %276 = sbr.rel (%p273) target = $region12
      $region11: #{tpu_custom_call.1} parent=5 // pred_region
        %s277 = ssub.s32 %s29, 1
      $region12: #{tpu_custom_call.1} parent=5 // pred_fallthru
        _
      %p278 = scmp.lt.s32.totalorder %s29, 2
      // Predicated region
      $region13: #{tpu_custom_call.1} parent=5 // pred_check
        %p279 = pneg %p278
      $region14: #{tpu_custom_call.1} parent=5 // pred_check_branch
        %281 = sbr.rel (%p279) target = $region16
      $region15: #{tpu_custom_call.1} parent=5 // pred_region
        // Predicated region
        $region17: #{tpu_custom_call.1} parent=15 // pred_check
          %p282 = pneg %p49
        $region18: #{tpu_custom_call.1} parent=15 // pred_check_branch
          %284 = sbr.rel (%p282) target = $region20
        $region19: #{tpu_custom_call.1} parent=15 // pred_region
          %s285 = sand.u32 %s39, 1
          %s286 = scalar_lea.sflag [#allocation3], %s285
          %s287 = sand.u32 %s39, 1
          %s288 = smul.addr %s287, 16
          %s289 = scalar_lea.vmem [#allocation2], %s288
          %s290 = smul.u32 2, %s29
          %s292 = ssub.s32 256, 256
          %293 = vsyncadd %s286, %s292
          %s294 = smul.addr %s290, 128
          %s295 = scalar_lea.hbm %s0, %s294
          %s296 = sshll.u32 %s289, 4
          %s297 = int_to_ptr.vmem [resolvable:$true] %s296
          %302 = dma.hbm_to_vmem [thread:$0]  %s295, 256, %s297, %s286, 128, 128, 8
        $region20: #{tpu_custom_call.1} parent=15 // pred_fallthru
          _
        // Predicated region
        $region21: #{tpu_custom_call.1} parent=15 // pred_check
          %p303 = pneg %p75
        $region22: #{tpu_custom_call.1} parent=15 // pred_check_branch
          %305 = sbr.rel (%p303) target = $region24
        $region23: #{tpu_custom_call.1} parent=15 // pred_region
          %s306 = sand.u32 %s29, 1
          %s307 = scalar_lea.sflag [#allocation6], %s306
          %s308 = sand.u32 %s65, 1
          %s309 = smul.addr %s308, 16
          %s310 = scalar_lea.vmem [#allocation5], %s309
          %s311 = smul.u32 2, %s29
          %s313 = ssub.s32 256, 256
          %314 = vsyncadd %s307, %s313
          %s315 = smul.addr %s311, 128
          %s316 = scalar_lea.hbm %s1, %s315
          %s317 = sshll.u32 %s310, 4
          %s318 = int_to_ptr.vmem [resolvable:$true] %s317
          %323 = dma.hbm_to_vmem [thread:$0]  %s316, 256, %s318, %s307, 128, 128, 8
        $region24: #{tpu_custom_call.1} parent=15 // pred_fallthru
          _
        // Predicated region
        $region25: #{tpu_custom_call.1} parent=15 // pred_check
          %p324 = pneg %p101
        $region26: #{tpu_custom_call.1} parent=15 // pred_check_branch
          %326 = sbr.rel (%p324) target = $region28
        $region27: #{tpu_custom_call.1} parent=15 // pred_region
          %s327 = sand.u32 %s29, 1
          %s328 = scalar_lea.sflag [#allocation6], %s327
          %s329 = sand.u32 %s91, 1
          %s330 = smul.addr %s329, 16
          %s331 = scalar_lea.vmem [#allocation7], %s330
          %s332 = smul.u32 2, %s29
          %s334 = ssub.s32 256, 256
          %335 = vsyncadd %s328, %s334
          %s336 = smul.addr %s332, 128
          %s337 = scalar_lea.hbm %s2, %s336
          %s338 = sshll.u32 %s331, 4
          %s339 = int_to_ptr.vmem [resolvable:$true] %s338
          %344 = dma.hbm_to_vmem [thread:$0]  %s337, 256, %s339, %s328, 128, 128, 8
        $region28: #{tpu_custom_call.1} parent=15 // pred_fallthru
          _
        // Predicated region
        $region29: #{tpu_custom_call.1} parent=15 // pred_check
          %p345 = pneg %p127
        $region30: #{tpu_custom_call.1} parent=15 // pred_check_branch
          %347 = sbr.rel (%p345) target = $region32
        $region31: #{tpu_custom_call.1} parent=15 // pred_region
          %s348 = sand.u32 %s29, 1
          %s349 = scalar_lea.sflag [#allocation9], %s348
          %s350 = sand.u32 %s117, 1
          %s351 = smul.addr %s350, 16
          %s352 = scalar_lea.vmem [#allocation8], %s351
          %s353 = smul.u32 2, %s29
          %s355 = ssub.s32 256, 256
          %356 = vsyncadd %s349, %s355
          %s357 = smul.addr %s353, 128
          %s358 = scalar_lea.hbm %s3, %s357
          %s359 = sshll.u32 %s352, 4
          %s360 = int_to_ptr.vmem [resolvable:$true] %s359
          %365 = dma.hbm_to_vmem [thread:$0]  %s358, 256, %s360, %s349, 128, 128, 8
        $region32: #{tpu_custom_call.1} parent=15 // pred_fallthru
          _
        // Predicated region
        $region33: #{tpu_custom_call.1} parent=15 // pred_check
          %p366 = pneg %p153
        $region34: #{tpu_custom_call.1} parent=15 // pred_check_branch
          %368 = sbr.rel (%p366) target = $region36
        $region35: #{tpu_custom_call.1} parent=15 // pred_region
          %s369 = smul.u32 2, %s29
          %p370 = scmp.lt.s32.totalorder %s369, 3
          %s371 = scalar_select %p370, %s369, 3
          %s372 = scalar_lea.vmem %s4, %s371
          %s373 = smul.u32 2, %s29
        $region36: #{tpu_custom_call.1} parent=15 // pred_fallthru
          _
        // Predicated region
        $region37: #{tpu_custom_call.1} parent=15 // pred_check
          %p374 = pneg %p179
        $region38: #{tpu_custom_call.1} parent=15 // pred_check_branch
          %376 = sbr.rel (%p374) target = $region40
        $region39: #{tpu_custom_call.1} parent=15 // pred_region
          %s377 = smul.u32 2, %s29
          %p378 = scmp.lt.s32.totalorder %s377, 3
          %s379 = scalar_select %p378, %s377, 3
          %s380 = scalar_lea.vmem %s5, %s379
          %s381 = smul.u32 2, %s29
        $region40: #{tpu_custom_call.1} parent=15 // pred_fallthru
          _
        // Predicated region
        $region41: #{tpu_custom_call.1} parent=15 // pred_check
          %p382 = pneg %p205
        $region42: #{tpu_custom_call.1} parent=15 // pred_check_branch
          %384 = sbr.rel (%p382) target = $region44
        $region43: #{tpu_custom_call.1} parent=15 // pred_region
          %s385 = sand.u32 %s29, 1
          %s386 = scalar_lea.sflag [#allocation9], %s385
          %s387 = sand.u32 %s195, 1
          %s388 = smul.addr %s387, 256
          %s389 = scalar_lea.vmem [#allocation10], %s388
          %s390 = smul.u32 2, %s29
          %s392 = ssub.s32 4096, 4096
          %393 = vsyncadd %s386, %s392
          %s394 = smul.addr %s390, 16
          %s395 = smul.addr %s394, 128
          %s396 = scalar_lea.hbm %s6, %s395
          %s397 = sshll.u32 %s389, 4
          %s398 = int_to_ptr.vmem [resolvable:$true] %s397
          %403 = dma.hbm_to_vmem [thread:$0]  %s396, 4096, %s398, %s386, 128, 128, 8
        $region44: #{tpu_custom_call.1} parent=15 // pred_fallthru
          _
        // Predicated region
        $region45: #{tpu_custom_call.1} parent=15 // pred_check
          %p404 = pneg %p231
        $region46: #{tpu_custom_call.1} parent=15 // pred_check_branch
          %406 = sbr.rel (%p404) target = $region48
        $region47: #{tpu_custom_call.1} parent=15 // pred_region
          %s407 = sand.u32 %s221, 1
          %s408 = scalar_lea.sflag [#allocation12], %s407
          %s409 = sand.u32 %s221, 1
          %s410 = smul.addr %s409, 256
          %s411 = scalar_lea.vmem [#allocation11], %s410
          %s412 = smul.u32 2, %s29
          %s414 = ssub.s32 4096, 4096
          %415 = vsyncadd %s408, %s414
          %s416 = smul.addr %s412, 16
          %s417 = smul.addr %s416, 128
          %s418 = scalar_lea.hbm %s7, %s417
          %s419 = sshll.u32 %s411, 4
          %s420 = int_to_ptr.vmem [resolvable:$true] %s419
          %425 = dma.hbm_to_vmem [thread:$0]  %s418, 4096, %s420, %s408, 128, 128, 8
        $region48: #{tpu_custom_call.1} parent=15 // pred_fallthru
          _
      $region16: #{tpu_custom_call.1} parent=5 // pred_fallthru
        _
      %p426 = scmp.le.s32.totalorder 1, %s29
      %p427 = scmp.lt.s32.totalorder %s29, 3
      %p428 = pnand %p426, %p427
      %p429 = pneg %p428
      // Predicated region
      $region49: #{tpu_custom_call.1} parent=5 // pred_check
        _
      $region50: #{tpu_custom_call.1} parent=5 // pred_check_branch
        %431 = sbr.rel (%p428) target = $region52
      $region51: #{tpu_custom_call.1} parent=5 // pred_region
        %s432 = ssub.s32 %s29, 1
        %s433 = sand.u32 %s42, 1
        %s434 = scalar_lea.sflag [#allocation3], %s433
        %s435 = sand.u32 %s42, 1
        %s436 = smul.addr %s435, 16
        %s437 = scalar_lea.vmem [#allocation2], %s436
        // Predicated region
        $region53: #{tpu_custom_call.1} parent=51 // pred_check
          %p438 = pneg %p55
        $region54: #{tpu_custom_call.1} parent=51 // pred_check_branch
          %440 = sbr.rel (%p438) target = $region56
        $region55: #{tpu_custom_call.1} parent=51 // pred_region
          %441 = dma.done %s434, 256
        $region56: #{tpu_custom_call.1} parent=51 // pred_fallthru
          _
        %s442 = sand.u32 %s34, 1
        %s443 = scalar_lea.sflag [#allocation6], %s442
        %s444 = sand.u32 %s68, 1
        %s445 = smul.addr %s444, 16
        %s446 = scalar_lea.vmem [#allocation5], %s445
        // Predicated region
        $region57: #{tpu_custom_call.1} parent=51 // pred_check
          %p447 = pneg %p81
        $region58: #{tpu_custom_call.1} parent=51 // pred_check_branch
          %449 = sbr.rel (%p447) target = $region60
        $region59: #{tpu_custom_call.1} parent=51 // pred_region
          %450 = dma.done %s443, 256
        $region60: #{tpu_custom_call.1} parent=51 // pred_fallthru
          _
        %s451 = sand.u32 %s34, 1
        %s452 = scalar_lea.sflag [#allocation6], %s451
        %s453 = sand.u32 %s94, 1
        %s454 = smul.addr %s453, 16
        %s455 = scalar_lea.vmem [#allocation7], %s454
        // Predicated region
        $region61: #{tpu_custom_call.1} parent=51 // pred_check
          %p456 = pneg %p107
        $region62: #{tpu_custom_call.1} parent=51 // pred_check_branch
          %458 = sbr.rel (%p456) target = $region64
        $region63: #{tpu_custom_call.1} parent=51 // pred_region
          %459 = dma.done %s452, 256
        $region64: #{tpu_custom_call.1} parent=51 // pred_fallthru
          _
        %s460 = sand.u32 %s34, 1
        %s461 = scalar_lea.sflag [#allocation9], %s460
        %s462 = sand.u32 %s120, 1
        %s463 = smul.addr %s462, 16
        %s464 = scalar_lea.vmem [#allocation8], %s463
        // Predicated region
        $region65: #{tpu_custom_call.1} parent=51 // pred_check
          %p465 = pneg %p133
        $region66: #{tpu_custom_call.1} parent=51 // pred_check_branch
          %467 = sbr.rel (%p465) target = $region68
        $region67: #{tpu_custom_call.1} parent=51 // pred_region
          %468 = dma.done %s461, 256
        $region68: #{tpu_custom_call.1} parent=51 // pred_fallthru
          _
        %s469 = sand.u32 %s34, 1
        %s470 = scalar_lea.sflag [#allocation9], %s469
        %s471 = sand.u32 %s198, 1
        %s472 = smul.addr %s471, 256
        %s473 = scalar_lea.vmem [#allocation10], %s472
        // Predicated region
        $region69: #{tpu_custom_call.1} parent=51 // pred_check
          %p474 = pneg %p211
        $region70: #{tpu_custom_call.1} parent=51 // pred_check_branch
          %476 = sbr.rel (%p474) target = $region72
        $region71: #{tpu_custom_call.1} parent=51 // pred_region
          %477 = dma.done %s470, 4096
        $region72: #{tpu_custom_call.1} parent=51 // pred_fallthru
          _
        %s478 = sand.u32 %s224, 1
        %s479 = scalar_lea.sflag [#allocation12], %s478
        %s480 = sand.u32 %s224, 1
        %s481 = smul.addr %s480, 256
        %s482 = scalar_lea.vmem [#allocation11], %s481
        // Predicated region
        $region73: #{tpu_custom_call.1} parent=51 // pred_check
          %p483 = pneg %p237
        $region74: #{tpu_custom_call.1} parent=51 // pred_check_branch
          %485 = sbr.rel (%p483) target = $region76
        $region75: #{tpu_custom_call.1} parent=51 // pred_region
          %486 = dma.done %s479, 4096
        $region76: #{tpu_custom_call.1} parent=51 // pred_fallthru
          _
        %s487 = sand.u32 %s42, 1
        %s488 = scalar_lea.sflag [#allocation3], %s487
        %s489 = sand.u32 %s42, 1
        %s490 = smul.addr %s489, 16
        %s491 = scalar_lea.vmem [#allocation2], %s490
        %p492 = pneg %p55
        %p493 = pneg %p52
        %s494 = sand.u32 %s34, 1
        %s495 = scalar_lea.sflag [#allocation6], %s494
        %s496 = sand.u32 %s68, 1
        %s497 = smul.addr %s496, 16
        %s498 = scalar_lea.vmem [#allocation5], %s497
        %p499 = pneg %p81
        %p500 = pneg %p78
        %s501 = sand.u32 %s34, 1
        %s502 = scalar_lea.sflag [#allocation6], %s501
        %s503 = sand.u32 %s94, 1
        %s504 = smul.addr %s503, 16
        %s505 = scalar_lea.vmem [#allocation7], %s504
        %p506 = pneg %p107
        %p507 = pneg %p104
        %s508 = sand.u32 %s34, 1
        %s509 = scalar_lea.sflag [#allocation9], %s508
        %s510 = sand.u32 %s120, 1
        %s511 = smul.addr %s510, 16
        %s512 = scalar_lea.vmem [#allocation8], %s511
        %p513 = pneg %p133
        %p514 = pneg %p130
        %s515 = smul.u32 2, %s34
        %p516 = scmp.lt.s32.totalorder %s515, 3
        %s517 = scalar_select %p516, %s515, 3
        %s518 = scalar_lea.vmem %s4, %s517
        %p519 = pneg %p159
        %p520 = pneg %p156
        %s521 = smul.u32 2, %s34
        %p522 = scmp.lt.s32.totalorder %s521, 3
        %s523 = scalar_select %p522, %s521, 3
        %s524 = scalar_lea.vmem %s5, %s523
        %p525 = pneg %p185
        %p526 = pneg %p182
        %s527 = sand.u32 %s34, 1
        %s528 = scalar_lea.sflag [#allocation9], %s527
        %s529 = sand.u32 %s198, 1
        %s530 = smul.addr %s529, 256
        %s531 = scalar_lea.vmem [#allocation10], %s530
        %p532 = pneg %p211
        %p533 = pneg %p208
        %s534 = sand.u32 %s224, 1
        %s535 = scalar_lea.sflag [#allocation12], %s534
        %s536 = sand.u32 %s224, 1
        %s537 = smul.addr %s536, 256
        %s538 = scalar_lea.vmem [#allocation11], %s537
        %p539 = pneg %p237
        %p540 = pneg %p234
        %p541 = pneg %p263
        %p542 = pneg %p260
        %s543 = sand.u32 %s250, 1
        %s544 = scalar_lea.sflag [#allocation4], %s543
        %s545 = sand.u32 %s250, 1
        %s546 = smul.addr %s545, 256
        %s547 = scalar_lea.vmem [#allocation13], %s546
        %s548 = smul.u32 2, %s34
        %s549 = smul.u32 2, %s34
        %s550 = smul.u32 2, %s34
        %s551 = smul.u32 2, %s34
        %s552 = smul.u32 2, %s34
        %p553 = scmp.lt.s32.totalorder %s552, 3
        %s554 = scalar_select %p553, %s552, 3
        %s555 = scalar_lea.vmem %s4, %s554
        %s556 = smul.u32 2, %s34
        %s557 = smul.u32 2, %s34
        %p558 = scmp.lt.s32.totalorder %s557, 3
        %s559 = scalar_select %p558, %s557, 3
        %s560 = scalar_lea.vmem %s5, %s559
        %s561 = smul.u32 2, %s34
        %s562 = smul.u32 2, %s34
        %s563 = smul.u32 2, %s34
        %s564 = smul.u32 2, %s34
        %v565 = vlaneseq
        %v566 = vand.u32 %v565, 127
        %vm567 = vcmp.lt.s32.totalorder %v566, 8
        %vm568 = vcmp.lt.s32.totalorder %v566, 16
        %v569 = vlaneseq
        %v570 = vshrl.u32 %v569, 7
        %v571 = vadd.s32 %v570, 8
        %v572 = vadd.s32 %v570, 16
        %v573 = vadd.s32 %v570, 24
        %v574 = vadd.s32 %v570, 32
        %v575 = vadd.s32 %v570, 40
        %v576 = vadd.s32 %v570, 48
        %v577 = vadd.s32 %v570, 56
        %v578 = vadd.s32 %v570, 64
        %v579 = vadd.s32 %v570, 72
        %v580 = vadd.s32 %v570, 80
        %v581 = vadd.s32 %v570, 88
        %v582 = vadd.s32 %v570, 96
        %v583 = vadd.s32 %v570, 104
        %v584 = vadd.s32 %v570, 112
        %v585 = vadd.s32 %v570, 120
        %vm586 = vcmp.eq.s32.totalorder %v570, %v566
        %vm587 = vcmp.eq.s32.totalorder %v571, %v566
        %vm588 = vcmp.eq.s32.totalorder %v572, %v566
        %vm589 = vcmp.eq.s32.totalorder %v573, %v566
        %vm590 = vcmp.eq.s32.totalorder %v574, %v566
        %vm591 = vcmp.eq.s32.totalorder %v575, %v566
        %vm592 = vcmp.eq.s32.totalorder %v576, %v566
        %vm593 = vcmp.eq.s32.totalorder %v577, %v566
        %vm594 = vcmp.eq.s32.totalorder %v578, %v566
        %vm595 = vcmp.eq.s32.totalorder %v579, %v566
        %vm596 = vcmp.eq.s32.totalorder %v580, %v566
        %vm597 = vcmp.eq.s32.totalorder %v581, %v566
        %vm598 = vcmp.eq.s32.totalorder %v582, %v566
        %vm599 = vcmp.eq.s32.totalorder %v583, %v566
        %vm600 = vcmp.eq.s32.totalorder %v584, %v566
        %vm601 = vcmp.eq.s32.totalorder %v585, %v566
        %v602 = vsel %vm586, 1, 0
        %v603 = vsel %vm587, 1, 0
        %v604 = vsel %vm588, 1, 0
        %v605 = vsel %vm589, 1, 0
        %v606 = vsel %vm590, 1, 0
        %v607 = vsel %vm591, 1, 0
        %v608 = vsel %vm592, 1, 0
        %v609 = vsel %vm593, 1, 0
        %v610 = vsel %vm594, 1, 0
        %v611 = vsel %vm595, 1, 0
        %v612 = vsel %vm596, 1, 0
        %v613 = vsel %vm597, 1, 0
        %v614 = vsel %vm598, 1, 0
        %v615 = vsel %vm599, 1, 0
        %v616 = vsel %vm600, 1, 0
        %v617 = vsel %vm601, 1, 0
        %v618 = vcvt.s32.f32 %v602
        %v619 = vcvt.s32.f32 %v603
        %v620 = vcvt.s32.f32 %v604
        %v621 = vcvt.s32.f32 %v605
        %v622 = vcvt.s32.f32 %v606
        %v623 = vcvt.s32.f32 %v607
        %v624 = vcvt.s32.f32 %v608
        %v625 = vcvt.s32.f32 %v609
        %v626 = vcvt.s32.f32 %v610
        %v627 = vcvt.s32.f32 %v611
        %v628 = vcvt.s32.f32 %v612
        %v629 = vcvt.s32.f32 %v613
        %v630 = vcvt.s32.f32 %v614
        %v631 = vcvt.s32.f32 %v615
        %v632 = vcvt.s32.f32 %v616
        %v633 = vcvt.s32.f32 %v617
        %v634 = vld [vmem:[%s555] sm:$0x1]
        %v635 = vsel %vm567, %v634, -1e+09
        %v636 = vld [vmem:[%s560] sm:$0x1]
        %vm637 = vcmask 1040384
        %v638 = vsel %vm637, %v635, -inf
        %639 = vmax.xlane.f32.xlu0 %v638
        %v640 = vpop.xlane.xlu0 %639
        %v641 = vsub.f32 %v635, %v640
        %v642 = vmul.f32 %v641, 1.442695
        %v643 = vpow.pop %v642
        %v644 = vsel %vm637, %v643, 0.0
        %645 = vadd.xlane.f32.xlu0 %v644
        %v646 = vpop.xlane.xlu0 %645
        %v647 = vlog2.pop %v646
        %v648 = vmul.f32 %v647, 0.6931472
        %v649 = vadd.f32 %v648, %v640
        %v650 = vsub.f32 %v635, %v649
        %v651 = vmul.f32 %v636, %v650
        %v652 = vsel %vm567, %v651, 0.0
        %v653 = vsel %vm637, %v652, 0.0
        %654 = vadd.xlane.f32.xlu0 %v653
        %v655 = vpop.xlane.xlu0 %654
        %v656 = vrot.slane %v655, 4
        %v657 = vadd.f32 %v655, %v656
        %v658 = vrot.slane %v657, 2
        %v659 = vadd.f32 %v657, %v658
        %v660 = vrot.slane %v659, 1
        %v661 = vadd.f32 %v659, %v660
        %s662 = vtos %v661
        %s663 = ssub.f32 0.0, %s662
        %v664 = vld [vmem:[%s473] sm:$0xff]
        %v665 = vld [vmem:[%s473 + $0x8] sm:$0xff]
        %v666 = vld [vmem:[%s473 + $0x10] sm:$0xff]
        %v667 = vld [vmem:[%s473 + $0x18] sm:$0xff]
        %v668 = vld [vmem:[%s473 + $0x20] sm:$0xff]
        %v669 = vld [vmem:[%s473 + $0x28] sm:$0xff]
        %v670 = vld [vmem:[%s473 + $0x30] sm:$0xff]
        %v671 = vld [vmem:[%s473 + $0x38] sm:$0xff]
        %v672 = vld [vmem:[%s473 + $0x40] sm:$0xff]
        %v673 = vld [vmem:[%s473 + $0x48] sm:$0xff]
        %v674 = vld [vmem:[%s473 + $0x50] sm:$0xff]
        %v675 = vld [vmem:[%s473 + $0x58] sm:$0xff]
        %v676 = vld [vmem:[%s473 + $0x60] sm:$0xff]
        %v677 = vld [vmem:[%s473 + $0x68] sm:$0xff]
        %v678 = vld [vmem:[%s473 + $0x70] sm:$0xff]
        %v679 = vld [vmem:[%s473 + $0x78] sm:$0xff]
        %v680 = vld [vmem:[%s482] sm:$0xff]
        %v681 = vld [vmem:[%s482 + $0x8] sm:$0xff]
        %v682 = vld [vmem:[%s482 + $0x10] sm:$0xff]
        %v683 = vld [vmem:[%s482 + $0x18] sm:$0xff]
        %v684 = vld [vmem:[%s482 + $0x20] sm:$0xff]
        %v685 = vld [vmem:[%s482 + $0x28] sm:$0xff]
        %v686 = vld [vmem:[%s482 + $0x30] sm:$0xff]
        %v687 = vld [vmem:[%s482 + $0x38] sm:$0xff]
        %v688 = vld [vmem:[%s482 + $0x40] sm:$0xff]
        %v689 = vld [vmem:[%s482 + $0x48] sm:$0xff]
        %v690 = vld [vmem:[%s482 + $0x50] sm:$0xff]
        %v691 = vld [vmem:[%s482 + $0x58] sm:$0xff]
        %v692 = vld [vmem:[%s482 + $0x60] sm:$0xff]
        %v693 = vld [vmem:[%s482 + $0x68] sm:$0xff]
        %v694 = vld [vmem:[%s482 + $0x70] sm:$0xff]
        %v695 = vld [vmem:[%s482 + $0x78] sm:$0xff]
        %v696 = vmax.f32 %v664, 0.0
        %v697 = vmax.f32 %v665, 0.0
        %v698 = vmax.f32 %v666, 0.0
        %v699 = vmax.f32 %v667, 0.0
        %v700 = vmax.f32 %v668, 0.0
        %v701 = vmax.f32 %v669, 0.0
        %v702 = vmax.f32 %v670, 0.0
        %v703 = vmax.f32 %v671, 0.0
        %v704 = vmax.f32 %v672, 0.0
        %v705 = vmax.f32 %v673, 0.0
        %v706 = vmax.f32 %v674, 0.0
        %v707 = vmax.f32 %v675, 0.0
        %v708 = vmax.f32 %v676, 0.0
        %v709 = vmax.f32 %v677, 0.0
        %v710 = vmax.f32 %v678, 0.0
        %v711 = vmax.f32 %v679, 0.0
        %v712 = vmul.f32 %v664, %v680
        %v713 = vmul.f32 %v665, %v681
        %v714 = vmul.f32 %v666, %v682
        %v715 = vmul.f32 %v667, %v683
        %v716 = vmul.f32 %v668, %v684
        %v717 = vmul.f32 %v669, %v685
        %v718 = vmul.f32 %v670, %v686
        %v719 = vmul.f32 %v671, %v687
        %v720 = vmul.f32 %v672, %v688
        %v721 = vmul.f32 %v673, %v689
        %v722 = vmul.f32 %v674, %v690
        %v723 = vmul.f32 %v675, %v691
        %v724 = vmul.f32 %v676, %v692
        %v725 = vmul.f32 %v677, %v693
        %v726 = vmul.f32 %v678, %v694
        %v727 = vmul.f32 %v679, %v695
        %v728 = vsub.f32 %v696, %v712
        %v729 = vsub.f32 %v697, %v713
        %v730 = vsub.f32 %v698, %v714
        %v731 = vsub.f32 %v699, %v715
        %v732 = vsub.f32 %v700, %v716
        %v733 = vsub.f32 %v701, %v717
        %v734 = vsub.f32 %v702, %v718
        %v735 = vsub.f32 %v703, %v719
        %v736 = vsub.f32 %v704, %v720
        %v737 = vsub.f32 %v705, %v721
        %v738 = vsub.f32 %v706, %v722
        %v739 = vsub.f32 %v707, %v723
        %v740 = vsub.f32 %v708, %v724
        %v741 = vsub.f32 %v709, %v725
        %v742 = vsub.f32 %v710, %v726
        %v743 = vsub.f32 %v711, %v727
        %v744 = vand.u32 2147483647, %v664
        %v745 = vand.u32 2147483647, %v665
        %v746 = vand.u32 2147483647, %v666
        %v747 = vand.u32 2147483647, %v667
        %v748 = vand.u32 2147483647, %v668
        %v749 = vand.u32 2147483647, %v669
        %v750 = vand.u32 2147483647, %v670
        %v751 = vand.u32 2147483647, %v671
        %v752 = vand.u32 2147483647, %v672
        %v753 = vand.u32 2147483647, %v673
        %v754 = vand.u32 2147483647, %v674
        %v755 = vand.u32 2147483647, %v675
        %v756 = vand.u32 2147483647, %v676
        %v757 = vand.u32 2147483647, %v677
        %v758 = vand.u32 2147483647, %v678
        %v759 = vand.u32 2147483647, %v679
        %v760 = vsub.f32 0.0, %v744
        %v761 = vsub.f32 0.0, %v745
        %v762 = vsub.f32 0.0, %v746
        %v763 = vsub.f32 0.0, %v747
        %v764 = vsub.f32 0.0, %v748
        %v765 = vsub.f32 0.0, %v749
        %v766 = vsub.f32 0.0, %v750
        %v767 = vsub.f32 0.0, %v751
        %v768 = vsub.f32 0.0, %v752
        %v769 = vsub.f32 0.0, %v753
        %v770 = vsub.f32 0.0, %v754
        %v771 = vsub.f32 0.0, %v755
        %v772 = vsub.f32 0.0, %v756
        %v773 = vsub.f32 0.0, %v757
        %v774 = vsub.f32 0.0, %v758
        %v775 = vsub.f32 0.0, %v759
        %v776 = vmul.f32 %v760, 1.442695
        %v777 = vpow.pop %v776
        %v778 = vmul.f32 %v761, 1.442695
        %v779 = vpow.pop %v778
        %v780 = vmul.f32 %v762, 1.442695
        %v781 = vpow.pop %v780
        %v782 = vmul.f32 %v763, 1.442695
        %v783 = vpow.pop %v782
        %v784 = vmul.f32 %v764, 1.442695
        %v785 = vpow.pop %v784
        %v786 = vmul.f32 %v765, 1.442695
        %v787 = vpow.pop %v786
        %v788 = vmul.f32 %v766, 1.442695
        %v789 = vpow.pop %v788
        %v790 = vmul.f32 %v767, 1.442695
        %v791 = vpow.pop %v790
        %v792 = vmul.f32 %v768, 1.442695
        %v793 = vpow.pop %v792
        %v794 = vmul.f32 %v769, 1.442695
        %v795 = vpow.pop %v794
        %v796 = vmul.f32 %v770, 1.442695
        %v797 = vpow.pop %v796
        %v798 = vmul.f32 %v771, 1.442695
        %v799 = vpow.pop %v798
        %v800 = vmul.f32 %v772, 1.442695
        %v801 = vpow.pop %v800
        %v802 = vmul.f32 %v773, 1.442695
        %v803 = vpow.pop %v802
        %v804 = vmul.f32 %v774, 1.442695
        %v805 = vpow.pop %v804
        %v806 = vmul.f32 %v775, 1.442695
        %v807 = vpow.pop %v806
        %v808 = vadd.f32 %v777, 1.0
        %v809 = vadd.f32 %v779, 1.0
        %v810 = vadd.f32 %v781, 1.0
        %v811 = vadd.f32 %v783, 1.0
        %v812 = vadd.f32 %v785, 1.0
        %v813 = vadd.f32 %v787, 1.0
        %v814 = vadd.f32 %v789, 1.0
        %v815 = vadd.f32 %v791, 1.0
        %v816 = vadd.f32 %v793, 1.0
        %v817 = vadd.f32 %v795, 1.0
        %v818 = vadd.f32 %v797, 1.0
        %v819 = vadd.f32 %v799, 1.0
        %v820 = vadd.f32 %v801, 1.0
        %v821 = vadd.f32 %v803, 1.0
        %v822 = vadd.f32 %v805, 1.0
        %v823 = vadd.f32 %v807, 1.0
        %v824 = vlog2.pop %v808
        %v825 = vmul.f32 %v824, 0.6931472
        %v826 = vlog2.pop %v809
        %v827 = vmul.f32 %v826, 0.6931472
        %v828 = vlog2.pop %v810
        %v829 = vmul.f32 %v828, 0.6931472
        %v830 = vlog2.pop %v811
        %v831 = vmul.f32 %v830, 0.6931472
        %v832 = vlog2.pop %v812
        %v833 = vmul.f32 %v832, 0.6931472
        %v834 = vlog2.pop %v813
        %v835 = vmul.f32 %v834, 0.6931472
        %v836 = vlog2.pop %v814
        %v837 = vmul.f32 %v836, 0.6931472
        %v838 = vlog2.pop %v815
        %v839 = vmul.f32 %v838, 0.6931472
        %v840 = vlog2.pop %v816
        %v841 = vmul.f32 %v840, 0.6931472
        %v842 = vlog2.pop %v817
        %v843 = vmul.f32 %v842, 0.6931472
        %v844 = vlog2.pop %v818
        %v845 = vmul.f32 %v844, 0.6931472
        %v846 = vlog2.pop %v819
        %v847 = vmul.f32 %v846, 0.6931472
        %v848 = vlog2.pop %v820
        %v849 = vmul.f32 %v848, 0.6931472
        %v850 = vlog2.pop %v821
        %v851 = vmul.f32 %v850, 0.6931472
        %v852 = vlog2.pop %v822
        %v853 = vmul.f32 %v852, 0.6931472
        %v854 = vlog2.pop %v823
        %v855 = vmul.f32 %v854, 0.6931472
        %v856 = vadd.f32 %v728, %v825
        %v857 = vadd.f32 %v729, %v827
        %v858 = vadd.f32 %v730, %v829
        %v859 = vadd.f32 %v731, %v831
        %v860 = vadd.f32 %v732, %v833
        %v861 = vadd.f32 %v733, %v835
        %v862 = vadd.f32 %v734, %v837
        %v863 = vadd.f32 %v735, %v839
        %v864 = vadd.f32 %v736, %v841
        %v865 = vadd.f32 %v737, %v843
        %v866 = vadd.f32 %v738, %v845
        %v867 = vadd.f32 %v739, %v847
        %v868 = vadd.f32 %v740, %v849
        %v869 = vadd.f32 %v741, %v851
        %v870 = vadd.f32 %v742, %v853
        %v871 = vadd.f32 %v743, %v855
        %v872 = vsel %vm568, %v856, 0.0
        %v873 = vsel %vm568, %v857, 0.0
        %v874 = vsel %vm568, %v858, 0.0
        %v875 = vsel %vm568, %v859, 0.0
        %v876 = vsel %vm568, %v860, 0.0
        %v877 = vsel %vm568, %v861, 0.0
        %v878 = vsel %vm568, %v862, 0.0
        %v879 = vsel %vm568, %v863, 0.0
        %v880 = vsel %vm568, %v864, 0.0
        %v881 = vsel %vm568, %v865, 0.0
        %v882 = vsel %vm568, %v866, 0.0
        %v883 = vsel %vm568, %v867, 0.0
        %v884 = vsel %vm568, %v868, 0.0
        %v885 = vsel %vm568, %v869, 0.0
        %v886 = vsel %vm568, %v870, 0.0
        %v887 = vsel %vm568, %v871, 0.0
        %888 = vadd.xlane.f32.xlu0 %v872
        %v889 = vpop.xlane.xlu0 %888
        %890 = vadd.xlane.f32.xlu0 %v873
        %v891 = vpop.xlane.xlu0 %890
        %892 = vadd.xlane.f32.xlu0 %v874
        %v893 = vpop.xlane.xlu0 %892
        %894 = vadd.xlane.f32.xlu0 %v875
        %v895 = vpop.xlane.xlu0 %894
        %896 = vadd.xlane.f32.xlu0 %v876
        %v897 = vpop.xlane.xlu0 %896
        %898 = vadd.xlane.f32.xlu0 %v877
        %v899 = vpop.xlane.xlu0 %898
        %900 = vadd.xlane.f32.xlu0 %v878
        %v901 = vpop.xlane.xlu0 %900
        %902 = vadd.xlane.f32.xlu0 %v879
        %v903 = vpop.xlane.xlu0 %902
        %904 = vadd.xlane.f32.xlu0 %v880
        %v905 = vpop.xlane.xlu0 %904
        %906 = vadd.xlane.f32.xlu0 %v881
        %v907 = vpop.xlane.xlu0 %906
        %908 = vadd.xlane.f32.xlu0 %v882
        %v909 = vpop.xlane.xlu0 %908
        %910 = vadd.xlane.f32.xlu0 %v883
        %v911 = vpop.xlane.xlu0 %910
        %912 = vadd.xlane.f32.xlu0 %v884
        %v913 = vpop.xlane.xlu0 %912
        %914 = vadd.xlane.f32.xlu0 %v885
        %v915 = vpop.xlane.xlu0 %914
        %916 = vadd.xlane.f32.xlu0 %v886
        %v917 = vpop.xlane.xlu0 %916
        %918 = vadd.xlane.f32.xlu0 %v887
        %v919 = vpop.xlane.xlu0 %918
        %v920 = vmul.f32 %v889, %v618
        %v921 = vmul.f32 %v891, %v619
        %v922 = vmul.f32 %v893, %v620
        %v923 = vmul.f32 %v895, %v621
        %v924 = vmul.f32 %v897, %v622
        %v925 = vmul.f32 %v899, %v623
        %v926 = vmul.f32 %v901, %v624
        %v927 = vmul.f32 %v903, %v625
        %v928 = vmul.f32 %v905, %v626
        %v929 = vmul.f32 %v907, %v627
        %v930 = vmul.f32 %v909, %v628
        %v931 = vmul.f32 %v911, %v629
        %v932 = vmul.f32 %v913, %v630
        %v933 = vmul.f32 %v915, %v631
        %v934 = vmul.f32 %v917, %v632
        %v935 = vmul.f32 %v919, %v633
        %v936 = vadd.f32 %v920, %v921
        %v937 = vadd.f32 %v936, %v922
        %v938 = vadd.f32 %v937, %v923
        %v939 = vadd.f32 %v938, %v924
        %v940 = vadd.f32 %v939, %v925
        %v941 = vadd.f32 %v940, %v926
        %v942 = vadd.f32 %v941, %v927
        %v943 = vadd.f32 %v942, %v928
        %v944 = vadd.f32 %v943, %v929
        %v945 = vadd.f32 %v944, %v930
        %v946 = vadd.f32 %v945, %v931
        %v947 = vadd.f32 %v946, %v932
        %v948 = vadd.f32 %v947, %v933
        %v949 = vadd.f32 %v948, %v934
        %v950 = vadd.f32 %v949, %v935
        %v951 = vrot.slane %v950, 4
        %v952 = vadd.f32 %v950, %v951
        %v953 = vrot.slane %v952, 2
        %v954 = vadd.f32 %v952, %v953
        %v955 = vrot.slane %v954, 1
        %v956 = vadd.f32 %v954, %v955
        %v957 = vld [vmem:[%s437] sm:$0xff]
        %v958 = vld [vmem:[%s446] sm:$0xff]
        %v959 = vld [vmem:[%s455] sm:$0xff]
        %v960 = vld [vmem:[%s464] sm:$0xff]
        %v961 = vlaneseq
        %v962 = vshrl.u32 %v961, 7
        %v963 = vsub.s32 0, %v962
        %v964 = vrot.slane %v957, %v963
        %v965 = vmul.f32 %v964, %v618
        %v966 = vmul.f32 %v964, %v619
        %v967 = vmul.f32 %v964, %v620
        %v968 = vmul.f32 %v964, %v621
        %v969 = vmul.f32 %v964, %v622
        %v970 = vmul.f32 %v964, %v623
        %v971 = vmul.f32 %v964, %v624
        %v972 = vmul.f32 %v964, %v625
        %v973 = vmul.f32 %v964, %v626
        %v974 = vmul.f32 %v964, %v627
        %v975 = vmul.f32 %v964, %v628
        %v976 = vmul.f32 %v964, %v629
        %v977 = vmul.f32 %v964, %v630
        %v978 = vmul.f32 %v964, %v631
        %v979 = vmul.f32 %v964, %v632
        %v980 = vmul.f32 %v964, %v633
        %981 = vadd.xlane.f32.xlu0 %v965
        %v982 = vpop.xlane.xlu0 %981
        %983 = vadd.xlane.f32.xlu0 %v966
        %v984 = vpop.xlane.xlu0 %983
        %985 = vadd.xlane.f32.xlu0 %v967
        %v986 = vpop.xlane.xlu0 %985
        %987 = vadd.xlane.f32.xlu0 %v968
        %v988 = vpop.xlane.xlu0 %987
        %989 = vadd.xlane.f32.xlu0 %v969
        %v990 = vpop.xlane.xlu0 %989
        %991 = vadd.xlane.f32.xlu0 %v970
        %v992 = vpop.xlane.xlu0 %991
        %993 = vadd.xlane.f32.xlu0 %v971
        %v994 = vpop.xlane.xlu0 %993
        %995 = vadd.xlane.f32.xlu0 %v972
        %v996 = vpop.xlane.xlu0 %995
        %997 = vadd.xlane.f32.xlu0 %v973
        %v998 = vpop.xlane.xlu0 %997
        %999 = vadd.xlane.f32.xlu0 %v974
        %v1000 = vpop.xlane.xlu0 %999
        %1001 = vadd.xlane.f32.xlu0 %v975
        %v1002 = vpop.xlane.xlu0 %1001
        %1003 = vadd.xlane.f32.xlu0 %v976
        %v1004 = vpop.xlane.xlu0 %1003
        %1005 = vadd.xlane.f32.xlu0 %v977
        %v1006 = vpop.xlane.xlu0 %1005
        %1007 = vadd.xlane.f32.xlu0 %v978
        %v1008 = vpop.xlane.xlu0 %1007
        %1009 = vadd.xlane.f32.xlu0 %v979
        %v1010 = vpop.xlane.xlu0 %1009
        %1011 = vadd.xlane.f32.xlu0 %v980
        %v1012 = vpop.xlane.xlu0 %1011
        %v1013 = vlaneseq
        %v1014 = vshrl.u32 %v1013, 7
        %v1015 = vsub.s32 0, %v1014
        %v1016 = vrot.slane %v958, %v1015
        %v1017 = vmul.f32 %v1016, %v618
        %v1018 = vmul.f32 %v1016, %v619
        %v1019 = vmul.f32 %v1016, %v620
        %v1020 = vmul.f32 %v1016, %v621
        %v1021 = vmul.f32 %v1016, %v622
        %v1022 = vmul.f32 %v1016, %v623
        %v1023 = vmul.f32 %v1016, %v624
        %v1024 = vmul.f32 %v1016, %v625
        %v1025 = vmul.f32 %v1016, %v626
        %v1026 = vmul.f32 %v1016, %v627
        %v1027 = vmul.f32 %v1016, %v628
        %v1028 = vmul.f32 %v1016, %v629
        %v1029 = vmul.f32 %v1016, %v630
        %v1030 = vmul.f32 %v1016, %v631
        %v1031 = vmul.f32 %v1016, %v632
        %v1032 = vmul.f32 %v1016, %v633
        %1033 = vadd.xlane.f32.xlu0 %v1017
        %v1034 = vpop.xlane.xlu0 %1033
        %1035 = vadd.xlane.f32.xlu0 %v1018
        %v1036 = vpop.xlane.xlu0 %1035
        %1037 = vadd.xlane.f32.xlu0 %v1019
        %v1038 = vpop.xlane.xlu0 %1037
        %1039 = vadd.xlane.f32.xlu0 %v1020
        %v1040 = vpop.xlane.xlu0 %1039
        %1041 = vadd.xlane.f32.xlu0 %v1021
        %v1042 = vpop.xlane.xlu0 %1041
        %1043 = vadd.xlane.f32.xlu0 %v1022
        %v1044 = vpop.xlane.xlu0 %1043
        %1045 = vadd.xlane.f32.xlu0 %v1023
        %v1046 = vpop.xlane.xlu0 %1045
        %1047 = vadd.xlane.f32.xlu0 %v1024
        %v1048 = vpop.xlane.xlu0 %1047
        %1049 = vadd.xlane.f32.xlu0 %v1025
        %v1050 = vpop.xlane.xlu0 %1049
        %1051 = vadd.xlane.f32.xlu0 %v1026
        %v1052 = vpop.xlane.xlu0 %1051
        %1053 = vadd.xlane.f32.xlu0 %v1027
        %v1054 = vpop.xlane.xlu0 %1053
        %1055 = vadd.xlane.f32.xlu0 %v1028
        %v1056 = vpop.xlane.xlu0 %1055
        %1057 = vadd.xlane.f32.xlu0 %v1029
        %v1058 = vpop.xlane.xlu0 %1057
        %1059 = vadd.xlane.f32.xlu0 %v1030
        %v1060 = vpop.xlane.xlu0 %1059
        %1061 = vadd.xlane.f32.xlu0 %v1031
        %v1062 = vpop.xlane.xlu0 %1061
        %1063 = vadd.xlane.f32.xlu0 %v1032
        %v1064 = vpop.xlane.xlu0 %1063
        %v1065 = vlaneseq
        %v1066 = vshrl.u32 %v1065, 7
        %v1067 = vsub.s32 0, %v1066
        %v1068 = vrot.slane %v959, %v1067
        %v1069 = vsub.f32 %v982, %v1068
        %v1070 = vsub.f32 %v984, %v1068
        %v1071 = vsub.f32 %v986, %v1068
        %v1072 = vsub.f32 %v988, %v1068
        %v1073 = vsub.f32 %v990, %v1068
        %v1074 = vsub.f32 %v992, %v1068
        %v1075 = vsub.f32 %v994, %v1068
        %v1076 = vsub.f32 %v996, %v1068
        %v1077 = vsub.f32 %v998, %v1068
        %v1078 = vsub.f32 %v1000, %v1068
        %v1079 = vsub.f32 %v1002, %v1068
        %v1080 = vsub.f32 %v1004, %v1068
        %v1081 = vsub.f32 %v1006, %v1068
        %v1082 = vsub.f32 %v1008, %v1068
        %v1083 = vsub.f32 %v1010, %v1068
        %v1084 = vsub.f32 %v1012, %v1068
        %v1085 = vand.u32 2147483647, %v1069
        %v1086 = vand.u32 2147483647, %v1070
        %v1087 = vand.u32 2147483647, %v1071
        %v1088 = vand.u32 2147483647, %v1072
        %v1089 = vand.u32 2147483647, %v1073
        %v1090 = vand.u32 2147483647, %v1074
        %v1091 = vand.u32 2147483647, %v1075
        %v1092 = vand.u32 2147483647, %v1076
        %v1093 = vand.u32 2147483647, %v1077
        %v1094 = vand.u32 2147483647, %v1078
        %v1095 = vand.u32 2147483647, %v1079
        %v1096 = vand.u32 2147483647, %v1080
        %v1097 = vand.u32 2147483647, %v1081
        %v1098 = vand.u32 2147483647, %v1082
        %v1099 = vand.u32 2147483647, %v1083
        %v1100 = vand.u32 2147483647, %v1084
        %v1101 = vadd.f32 %v1085, 0.0
        %v1102 = vadd.f32 %v1086, 0.0
        %v1103 = vadd.f32 %v1087, 0.0
        %v1104 = vadd.f32 %v1088, 0.0
        %v1105 = vadd.f32 %v1089, 0.0
        %v1106 = vadd.f32 %v1090, 0.0
        %v1107 = vadd.f32 %v1091, 0.0
        %v1108 = vadd.f32 %v1092, 0.0
        %v1109 = vadd.f32 %v1093, 0.0
        %v1110 = vadd.f32 %v1094, 0.0
        %v1111 = vadd.f32 %v1095, 0.0
        %v1112 = vadd.f32 %v1096, 0.0
        %v1113 = vadd.f32 %v1097, 0.0
        %v1114 = vadd.f32 %v1098, 0.0
        %v1115 = vadd.f32 %v1099, 0.0
        %v1116 = vadd.f32 %v1100, 0.0
        %v1117 = vlaneseq
        %v1118 = vshrl.u32 %v1117, 7
        %v1119 = vsub.s32 0, %v1118
        %v1120 = vrot.slane %v960, %v1119
        %v1121 = vsub.f32 %v1034, %v1120
        %v1122 = vsub.f32 %v1036, %v1120
        %v1123 = vsub.f32 %v1038, %v1120
        %v1124 = vsub.f32 %v1040, %v1120
        %v1125 = vsub.f32 %v1042, %v1120
        %v1126 = vsub.f32 %v1044, %v1120
        %v1127 = vsub.f32 %v1046, %v1120
        %v1128 = vsub.f32 %v1048, %v1120
        %v1129 = vsub.f32 %v1050, %v1120
        %v1130 = vsub.f32 %v1052, %v1120
        %v1131 = vsub.f32 %v1054, %v1120
        %v1132 = vsub.f32 %v1056, %v1120
        %v1133 = vsub.f32 %v1058, %v1120
        %v1134 = vsub.f32 %v1060, %v1120
        %v1135 = vsub.f32 %v1062, %v1120
        %v1136 = vsub.f32 %v1064, %v1120
        %v1137 = vand.u32 2147483647, %v1121
        %v1138 = vand.u32 2147483647, %v1122
        %v1139 = vand.u32 2147483647, %v1123
        %v1140 = vand.u32 2147483647, %v1124
        %v1141 = vand.u32 2147483647, %v1125
        %v1142 = vand.u32 2147483647, %v1126
        %v1143 = vand.u32 2147483647, %v1127
        %v1144 = vand.u32 2147483647, %v1128
        %v1145 = vand.u32 2147483647, %v1129
        %v1146 = vand.u32 2147483647, %v1130
        %v1147 = vand.u32 2147483647, %v1131
        %v1148 = vand.u32 2147483647, %v1132
        %v1149 = vand.u32 2147483647, %v1133
        %v1150 = vand.u32 2147483647, %v1134
        %v1151 = vand.u32 2147483647, %v1135
        %v1152 = vand.u32 2147483647, %v1136
        %v1153 = vadd.f32 %v1101, %v1137
        %v1154 = vadd.f32 %v1102, %v1138
        %v1155 = vadd.f32 %v1103, %v1139
        %v1156 = vadd.f32 %v1104, %v1140
        %v1157 = vadd.f32 %v1105, %v1141
        %v1158 = vadd.f32 %v1106, %v1142
        %v1159 = vadd.f32 %v1107, %v1143
        %v1160 = vadd.f32 %v1108, %v1144
        %v1161 = vadd.f32 %v1109, %v1145
        %v1162 = vadd.f32 %v1110, %v1146
        %v1163 = vadd.f32 %v1111, %v1147
        %v1164 = vadd.f32 %v1112, %v1148
        %v1165 = vadd.f32 %v1113, %v1149
        %v1166 = vadd.f32 %v1114, %v1150
        %v1167 = vadd.f32 %v1115, %v1151
        %v1168 = vadd.f32 %v1116, %v1152
        %v1169 = vlaneseq
        %v1170 = vshrl.u32 %v1169, 7
        %v1171 = vsub.s32 1, %v1170
        %v1172 = vrot.slane %v957, %v1171
        %v1173 = vmul.f32 %v1172, %v618
        %v1174 = vmul.f32 %v1172, %v619
        %v1175 = vmul.f32 %v1172, %v620
        %v1176 = vmul.f32 %v1172, %v621
        %v1177 = vmul.f32 %v1172, %v622
        %v1178 = vmul.f32 %v1172, %v623
        %v1179 = vmul.f32 %v1172, %v624
        %v1180 = vmul.f32 %v1172, %v625
        %v1181 = vmul.f32 %v1172, %v626
        %v1182 = vmul.f32 %v1172, %v627
        %v1183 = vmul.f32 %v1172, %v628
        %v1184 = vmul.f32 %v1172, %v629
        %v1185 = vmul.f32 %v1172, %v630
        %v1186 = vmul.f32 %v1172, %v631
        %v1187 = vmul.f32 %v1172, %v632
        %v1188 = vmul.f32 %v1172, %v633
        %1189 = vadd.xlane.f32.xlu0 %v1173
        %v1190 = vpop.xlane.xlu0 %1189
        %1191 = vadd.xlane.f32.xlu0 %v1174
        %v1192 = vpop.xlane.xlu0 %1191
        %1193 = vadd.xlane.f32.xlu0 %v1175
        %v1194 = vpop.xlane.xlu0 %1193
        %1195 = vadd.xlane.f32.xlu0 %v1176
        %v1196 = vpop.xlane.xlu0 %1195
        %1197 = vadd.xlane.f32.xlu0 %v1177
        %v1198 = vpop.xlane.xlu0 %1197
        %1199 = vadd.xlane.f32.xlu0 %v1178
        %v1200 = vpop.xlane.xlu0 %1199
        %1201 = vadd.xlane.f32.xlu0 %v1179
        %v1202 = vpop.xlane.xlu0 %1201
        %1203 = vadd.xlane.f32.xlu0 %v1180
        %v1204 = vpop.xlane.xlu0 %1203
        %1205 = vadd.xlane.f32.xlu0 %v1181
        %v1206 = vpop.xlane.xlu0 %1205
        %1207 = vadd.xlane.f32.xlu0 %v1182
        %v1208 = vpop.xlane.xlu0 %1207
        %1209 = vadd.xlane.f32.xlu0 %v1183
        %v1210 = vpop.xlane.xlu0 %1209
        %1211 = vadd.xlane.f32.xlu0 %v1184
        %v1212 = vpop.xlane.xlu0 %1211
        %1213 = vadd.xlane.f32.xlu0 %v1185
        %v1214 = vpop.xlane.xlu0 %1213
        %1215 = vadd.xlane.f32.xlu0 %v1186
        %v1216 = vpop.xlane.xlu0 %1215
        %1217 = vadd.xlane.f32.xlu0 %v1187
        %v1218 = vpop.xlane.xlu0 %1217
        %1219 = vadd.xlane.f32.xlu0 %v1188
        %v1220 = vpop.xlane.xlu0 %1219
        %v1221 = vlaneseq
        %v1222 = vshrl.u32 %v1221, 7
        %v1223 = vsub.s32 1, %v1222
        %v1224 = vrot.slane %v958, %v1223
        %v1225 = vmul.f32 %v1224, %v618
        %v1226 = vmul.f32 %v1224, %v619
        %v1227 = vmul.f32 %v1224, %v620
        %v1228 = vmul.f32 %v1224, %v621
        %v1229 = vmul.f32 %v1224, %v622
        %v1230 = vmul.f32 %v1224, %v623
        %v1231 = vmul.f32 %v1224, %v624
        %v1232 = vmul.f32 %v1224, %v625
        %v1233 = vmul.f32 %v1224, %v626
        %v1234 = vmul.f32 %v1224, %v627
        %v1235 = vmul.f32 %v1224, %v628
        %v1236 = vmul.f32 %v1224, %v629
        %v1237 = vmul.f32 %v1224, %v630
        %v1238 = vmul.f32 %v1224, %v631
        %v1239 = vmul.f32 %v1224, %v632
        %v1240 = vmul.f32 %v1224, %v633
        %1241 = vadd.xlane.f32.xlu0 %v1225
        %v1242 = vpop.xlane.xlu0 %1241
        %1243 = vadd.xlane.f32.xlu0 %v1226
        %v1244 = vpop.xlane.xlu0 %1243
        %1245 = vadd.xlane.f32.xlu0 %v1227
        %v1246 = vpop.xlane.xlu0 %1245
        %1247 = vadd.xlane.f32.xlu0 %v1228
        %v1248 = vpop.xlane.xlu0 %1247
        %1249 = vadd.xlane.f32.xlu0 %v1229
        %v1250 = vpop.xlane.xlu0 %1249
        %1251 = vadd.xlane.f32.xlu0 %v1230
        %v1252 = vpop.xlane.xlu0 %1251
        %1253 = vadd.xlane.f32.xlu0 %v1231
        %v1254 = vpop.xlane.xlu0 %1253
        %1255 = vadd.xlane.f32.xlu0 %v1232
        %v1256 = vpop.xlane.xlu0 %1255
        %1257 = vadd.xlane.f32.xlu0 %v1233
        %v1258 = vpop.xlane.xlu0 %1257
        %1259 = vadd.xlane.f32.xlu0 %v1234
        %v1260 = vpop.xlane.xlu0 %1259
        %1261 = vadd.xlane.f32.xlu0 %v1235
        %v1262 = vpop.xlane.xlu0 %1261
        %1263 = vadd.xlane.f32.xlu0 %v1236
        %v1264 = vpop.xlane.xlu0 %1263
        %1265 = vadd.xlane.f32.xlu0 %v1237
        %v1266 = vpop.xlane.xlu0 %1265
        %1267 = vadd.xlane.f32.xlu0 %v1238
        %v1268 = vpop.xlane.xlu0 %1267
        %1269 = vadd.xlane.f32.xlu0 %v1239
        %v1270 = vpop.xlane.xlu0 %1269
        %1271 = vadd.xlane.f32.xlu0 %v1240
        %v1272 = vpop.xlane.xlu0 %1271
        %v1273 = vlaneseq
        %v1274 = vshrl.u32 %v1273, 7
        %v1275 = vsub.s32 1, %v1274
        %v1276 = vrot.slane %v959, %v1275
        %v1277 = vsub.f32 %v1190, %v1276
        %v1278 = vsub.f32 %v1192, %v1276
        %v1279 = vsub.f32 %v1194, %v1276
        %v1280 = vsub.f32 %v1196, %v1276
        %v1281 = vsub.f32 %v1198, %v1276
        %v1282 = vsub.f32 %v1200, %v1276
        %v1283 = vsub.f32 %v1202, %v1276
        %v1284 = vsub.f32 %v1204, %v1276
        %v1285 = vsub.f32 %v1206, %v1276
        %v1286 = vsub.f32 %v1208, %v1276
        %v1287 = vsub.f32 %v1210, %v1276
        %v1288 = vsub.f32 %v1212, %v1276
        %v1289 = vsub.f32 %v1214, %v1276
        %v1290 = vsub.f32 %v1216, %v1276
        %v1291 = vsub.f32 %v1218, %v1276
        %v1292 = vsub.f32 %v1220, %v1276
        %v1293 = vand.u32 2147483647, %v1277
        %v1294 = vand.u32 2147483647, %v1278
        %v1295 = vand.u32 2147483647, %v1279
        %v1296 = vand.u32 2147483647, %v1280
        %v1297 = vand.u32 2147483647, %v1281
        %v1298 = vand.u32 2147483647, %v1282
        %v1299 = vand.u32 2147483647, %v1283
        %v1300 = vand.u32 2147483647, %v1284
        %v1301 = vand.u32 2147483647, %v1285
        %v1302 = vand.u32 2147483647, %v1286
        %v1303 = vand.u32 2147483647, %v1287
        %v1304 = vand.u32 2147483647, %v1288
        %v1305 = vand.u32 2147483647, %v1289
        %v1306 = vand.u32 2147483647, %v1290
        %v1307 = vand.u32 2147483647, %v1291
        %v1308 = vand.u32 2147483647, %v1292
        %v1309 = vadd.f32 %v1153, %v1293
        %v1310 = vadd.f32 %v1154, %v1294
        %v1311 = vadd.f32 %v1155, %v1295
        %v1312 = vadd.f32 %v1156, %v1296
        %v1313 = vadd.f32 %v1157, %v1297
        %v1314 = vadd.f32 %v1158, %v1298
        %v1315 = vadd.f32 %v1159, %v1299
        %v1316 = vadd.f32 %v1160, %v1300
        %v1317 = vadd.f32 %v1161, %v1301
        %v1318 = vadd.f32 %v1162, %v1302
        %v1319 = vadd.f32 %v1163, %v1303
        %v1320 = vadd.f32 %v1164, %v1304
        %v1321 = vadd.f32 %v1165, %v1305
        %v1322 = vadd.f32 %v1166, %v1306
        %v1323 = vadd.f32 %v1167, %v1307
        %v1324 = vadd.f32 %v1168, %v1308
        %v1325 = vlaneseq
        %v1326 = vshrl.u32 %v1325, 7
        %v1327 = vsub.s32 1, %v1326
        %v1328 = vrot.slane %v960, %v1327
        %v1329 = vsub.f32 %v1242, %v1328
        %v1330 = vsub.f32 %v1244, %v1328
        %v1331 = vsub.f32 %v1246, %v1328
        %v1332 = vsub.f32 %v1248, %v1328
        %v1333 = vsub.f32 %v1250, %v1328
        %v1334 = vsub.f32 %v1252, %v1328
        %v1335 = vsub.f32 %v1254, %v1328
        %v1336 = vsub.f32 %v1256, %v1328
        %v1337 = vsub.f32 %v1258, %v1328
        %v1338 = vsub.f32 %v1260, %v1328
        %v1339 = vsub.f32 %v1262, %v1328
        %v1340 = vsub.f32 %v1264, %v1328
        %v1341 = vsub.f32 %v1266, %v1328
        %v1342 = vsub.f32 %v1268, %v1328
        %v1343 = vsub.f32 %v1270, %v1328
        %v1344 = vsub.f32 %v1272, %v1328
        %v1345 = vand.u32 2147483647, %v1329
        %v1346 = vand.u32 2147483647, %v1330
        %v1347 = vand.u32 2147483647, %v1331
        %v1348 = vand.u32 2147483647, %v1332
        %v1349 = vand.u32 2147483647, %v1333
        %v1350 = vand.u32 2147483647, %v1334
        %v1351 = vand.u32 2147483647, %v1335
        %v1352 = vand.u32 2147483647, %v1336
        %v1353 = vand.u32 2147483647, %v1337
        %v1354 = vand.u32 2147483647, %v1338
        %v1355 = vand.u32 2147483647, %v1339
        %v1356 = vand.u32 2147483647, %v1340
        %v1357 = vand.u32 2147483647, %v1341
        %v1358 = vand.u32 2147483647, %v1342
        %v1359 = vand.u32 2147483647, %v1343
        %v1360 = vand.u32 2147483647, %v1344
        %v1361 = vadd.f32 %v1309, %v1345
        %v1362 = vadd.f32 %v1310, %v1346
        %v1363 = vadd.f32 %v1311, %v1347
        %v1364 = vadd.f32 %v1312, %v1348
        %v1365 = vadd.f32 %v1313, %v1349
        %v1366 = vadd.f32 %v1314, %v1350
        %v1367 = vadd.f32 %v1315, %v1351
        %v1368 = vadd.f32 %v1316, %v1352
        %v1369 = vadd.f32 %v1317, %v1353
        %v1370 = vadd.f32 %v1318, %v1354
        %v1371 = vadd.f32 %v1319, %v1355
        %v1372 = vadd.f32 %v1320, %v1356
        %v1373 = vadd.f32 %v1321, %v1357
        %v1374 = vadd.f32 %v1322, %v1358
        %v1375 = vadd.f32 %v1323, %v1359
        %v1376 = vadd.f32 %v1324, %v1360
        %v1377 = vlaneseq
        %v1378 = vshrl.u32 %v1377, 7
        %v1379 = vsub.s32 2, %v1378
        %v1380 = vrot.slane %v957, %v1379
        %v1381 = vmul.f32 %v1380, %v618
        %v1382 = vmul.f32 %v1380, %v619
        %v1383 = vmul.f32 %v1380, %v620
        %v1384 = vmul.f32 %v1380, %v621
        %v1385 = vmul.f32 %v1380, %v622
        %v1386 = vmul.f32 %v1380, %v623
        %v1387 = vmul.f32 %v1380, %v624
        %v1388 = vmul.f32 %v1380, %v625
        %v1389 = vmul.f32 %v1380, %v626
        %v1390 = vmul.f32 %v1380, %v627
        %v1391 = vmul.f32 %v1380, %v628
        %v1392 = vmul.f32 %v1380, %v629
        %v1393 = vmul.f32 %v1380, %v630
        %v1394 = vmul.f32 %v1380, %v631
        %v1395 = vmul.f32 %v1380, %v632
        %v1396 = vmul.f32 %v1380, %v633
        %1397 = vadd.xlane.f32.xlu0 %v1381
        %v1398 = vpop.xlane.xlu0 %1397
        %1399 = vadd.xlane.f32.xlu0 %v1382
        %v1400 = vpop.xlane.xlu0 %1399
        %1401 = vadd.xlane.f32.xlu0 %v1383
        %v1402 = vpop.xlane.xlu0 %1401
        %1403 = vadd.xlane.f32.xlu0 %v1384
        %v1404 = vpop.xlane.xlu0 %1403
        %1405 = vadd.xlane.f32.xlu0 %v1385
        %v1406 = vpop.xlane.xlu0 %1405
        %1407 = vadd.xlane.f32.xlu0 %v1386
        %v1408 = vpop.xlane.xlu0 %1407
        %1409 = vadd.xlane.f32.xlu0 %v1387
        %v1410 = vpop.xlane.xlu0 %1409
        %1411 = vadd.xlane.f32.xlu0 %v1388
        %v1412 = vpop.xlane.xlu0 %1411
        %1413 = vadd.xlane.f32.xlu0 %v1389
        %v1414 = vpop.xlane.xlu0 %1413
        %1415 = vadd.xlane.f32.xlu0 %v1390
        %v1416 = vpop.xlane.xlu0 %1415
        %1417 = vadd.xlane.f32.xlu0 %v1391
        %v1418 = vpop.xlane.xlu0 %1417
        %1419 = vadd.xlane.f32.xlu0 %v1392
        %v1420 = vpop.xlane.xlu0 %1419
        %1421 = vadd.xlane.f32.xlu0 %v1393
        %v1422 = vpop.xlane.xlu0 %1421
        %1423 = vadd.xlane.f32.xlu0 %v1394
        %v1424 = vpop.xlane.xlu0 %1423
        %1425 = vadd.xlane.f32.xlu0 %v1395
        %v1426 = vpop.xlane.xlu0 %1425
        %1427 = vadd.xlane.f32.xlu0 %v1396
        %v1428 = vpop.xlane.xlu0 %1427
        %v1429 = vlaneseq
        %v1430 = vshrl.u32 %v1429, 7
        %v1431 = vsub.s32 2, %v1430
        %v1432 = vrot.slane %v958, %v1431
        %v1433 = vmul.f32 %v1432, %v618
        %v1434 = vmul.f32 %v1432, %v619
        %v1435 = vmul.f32 %v1432, %v620
        %v1436 = vmul.f32 %v1432, %v621
        %v1437 = vmul.f32 %v1432, %v622
        %v1438 = vmul.f32 %v1432, %v623
        %v1439 = vmul.f32 %v1432, %v624
        %v1440 = vmul.f32 %v1432, %v625
        %v1441 = vmul.f32 %v1432, %v626
        %v1442 = vmul.f32 %v1432, %v627
        %v1443 = vmul.f32 %v1432, %v628
        %v1444 = vmul.f32 %v1432, %v629
        %v1445 = vmul.f32 %v1432, %v630
        %v1446 = vmul.f32 %v1432, %v631
        %v1447 = vmul.f32 %v1432, %v632
        %v1448 = vmul.f32 %v1432, %v633
        %1449 = vadd.xlane.f32.xlu0 %v1433
        %v1450 = vpop.xlane.xlu0 %1449
        %1451 = vadd.xlane.f32.xlu0 %v1434
        %v1452 = vpop.xlane.xlu0 %1451
        %1453 = vadd.xlane.f32.xlu0 %v1435
        %v1454 = vpop.xlane.xlu0 %1453
        %1455 = vadd.xlane.f32.xlu0 %v1436
        %v1456 = vpop.xlane.xlu0 %1455
        %1457 = vadd.xlane.f32.xlu0 %v1437
        %v1458 = vpop.xlane.xlu0 %1457
        %1459 = vadd.xlane.f32.xlu0 %v1438
        %v1460 = vpop.xlane.xlu0 %1459
        %1461 = vadd.xlane.f32.xlu0 %v1439
        %v1462 = vpop.xlane.xlu0 %1461
        %1463 = vadd.xlane.f32.xlu0 %v1440
        %v1464 = vpop.xlane.xlu0 %1463
        %1465 = vadd.xlane.f32.xlu0 %v1441
        %v1466 = vpop.xlane.xlu0 %1465
        %1467 = vadd.xlane.f32.xlu0 %v1442
        %v1468 = vpop.xlane.xlu0 %1467
        %1469 = vadd.xlane.f32.xlu0 %v1443
        %v1470 = vpop.xlane.xlu0 %1469
        %1471 = vadd.xlane.f32.xlu0 %v1444
        %v1472 = vpop.xlane.xlu0 %1471
        %1473 = vadd.xlane.f32.xlu0 %v1445
        %v1474 = vpop.xlane.xlu0 %1473
        %1475 = vadd.xlane.f32.xlu0 %v1446
        %v1476 = vpop.xlane.xlu0 %1475
        %1477 = vadd.xlane.f32.xlu0 %v1447
        %v1478 = vpop.xlane.xlu0 %1477
        %1479 = vadd.xlane.f32.xlu0 %v1448
        %v1480 = vpop.xlane.xlu0 %1479
        %v1481 = vlaneseq
        %v1482 = vshrl.u32 %v1481, 7
        %v1483 = vsub.s32 2, %v1482
        %v1484 = vrot.slane %v959, %v1483
        %v1485 = vsub.f32 %v1398, %v1484
        %v1486 = vsub.f32 %v1400, %v1484
        %v1487 = vsub.f32 %v1402, %v1484
        %v1488 = vsub.f32 %v1404, %v1484
        %v1489 = vsub.f32 %v1406, %v1484
        %v1490 = vsub.f32 %v1408, %v1484
        %v1491 = vsub.f32 %v1410, %v1484
        %v1492 = vsub.f32 %v1412, %v1484
        %v1493 = vsub.f32 %v1414, %v1484
        %v1494 = vsub.f32 %v1416, %v1484
        %v1495 = vsub.f32 %v1418, %v1484
        %v1496 = vsub.f32 %v1420, %v1484
        %v1497 = vsub.f32 %v1422, %v1484
        %v1498 = vsub.f32 %v1424, %v1484
        %v1499 = vsub.f32 %v1426, %v1484
        %v1500 = vsub.f32 %v1428, %v1484
        %v1501 = vand.u32 2147483647, %v1485
        %v1502 = vand.u32 2147483647, %v1486
        %v1503 = vand.u32 2147483647, %v1487
        %v1504 = vand.u32 2147483647, %v1488
        %v1505 = vand.u32 2147483647, %v1489
        %v1506 = vand.u32 2147483647, %v1490
        %v1507 = vand.u32 2147483647, %v1491
        %v1508 = vand.u32 2147483647, %v1492
        %v1509 = vand.u32 2147483647, %v1493
        %v1510 = vand.u32 2147483647, %v1494
        %v1511 = vand.u32 2147483647, %v1495
        %v1512 = vand.u32 2147483647, %v1496
        %v1513 = vand.u32 2147483647, %v1497
        %v1514 = vand.u32 2147483647, %v1498
        %v1515 = vand.u32 2147483647, %v1499
        %v1516 = vand.u32 2147483647, %v1500
        %v1517 = vadd.f32 %v1361, %v1501
        %v1518 = vadd.f32 %v1362, %v1502
        %v1519 = vadd.f32 %v1363, %v1503
        %v1520 = vadd.f32 %v1364, %v1504
        %v1521 = vadd.f32 %v1365, %v1505
        %v1522 = vadd.f32 %v1366, %v1506
        %v1523 = vadd.f32 %v1367, %v1507
        %v1524 = vadd.f32 %v1368, %v1508
        %v1525 = vadd.f32 %v1369, %v1509
        %v1526 = vadd.f32 %v1370, %v1510
        %v1527 = vadd.f32 %v1371, %v1511
        %v1528 = vadd.f32 %v1372, %v1512
        %v1529 = vadd.f32 %v1373, %v1513
        %v1530 = vadd.f32 %v1374, %v1514
        %v1531 = vadd.f32 %v1375, %v1515
        %v1532 = vadd.f32 %v1376, %v1516
        %v1533 = vlaneseq
        %v1534 = vshrl.u32 %v1533, 7
        %v1535 = vsub.s32 2, %v1534
        %v1536 = vrot.slane %v960, %v1535
        %v1537 = vsub.f32 %v1450, %v1536
        %v1538 = vsub.f32 %v1452, %v1536
        %v1539 = vsub.f32 %v1454, %v1536
        %v1540 = vsub.f32 %v1456, %v1536
        %v1541 = vsub.f32 %v1458, %v1536
        %v1542 = vsub.f32 %v1460, %v1536
        %v1543 = vsub.f32 %v1462, %v1536
        %v1544 = vsub.f32 %v1464, %v1536
        %v1545 = vsub.f32 %v1466, %v1536
        %v1546 = vsub.f32 %v1468, %v1536
        %v1547 = vsub.f32 %v1470, %v1536
        %v1548 = vsub.f32 %v1472, %v1536
        %v1549 = vsub.f32 %v1474, %v1536
        %v1550 = vsub.f32 %v1476, %v1536
        %v1551 = vsub.f32 %v1478, %v1536
        %v1552 = vsub.f32 %v1480, %v1536
        %v1553 = vand.u32 2147483647, %v1537
        %v1554 = vand.u32 2147483647, %v1538
        %v1555 = vand.u32 2147483647, %v1539
        %v1556 = vand.u32 2147483647, %v1540
        %v1557 = vand.u32 2147483647, %v1541
        %v1558 = vand.u32 2147483647, %v1542
        %v1559 = vand.u32 2147483647, %v1543
        %v1560 = vand.u32 2147483647, %v1544
        %v1561 = vand.u32 2147483647, %v1545
        %v1562 = vand.u32 2147483647, %v1546
        %v1563 = vand.u32 2147483647, %v1547
        %v1564 = vand.u32 2147483647, %v1548
        %v1565 = vand.u32 2147483647, %v1549
        %v1566 = vand.u32 2147483647, %v1550
        %v1567 = vand.u32 2147483647, %v1551
        %v1568 = vand.u32 2147483647, %v1552
        %v1569 = vadd.f32 %v1517, %v1553
        %v1570 = vadd.f32 %v1518, %v1554
        %v1571 = vadd.f32 %v1519, %v1555
        %v1572 = vadd.f32 %v1520, %v1556
        %v1573 = vadd.f32 %v1521, %v1557
        %v1574 = vadd.f32 %v1522, %v1558
        %v1575 = vadd.f32 %v1523, %v1559
        %v1576 = vadd.f32 %v1524, %v1560
        %v1577 = vadd.f32 %v1525, %v1561
        %v1578 = vadd.f32 %v1526, %v1562
        %v1579 = vadd.f32 %v1527, %v1563
        %v1580 = vadd.f32 %v1528, %v1564
        %v1581 = vadd.f32 %v1529, %v1565
        %v1582 = vadd.f32 %v1530, %v1566
        %v1583 = vadd.f32 %v1531, %v1567
        %v1584 = vadd.f32 %v1532, %v1568
        %v1585 = vlaneseq
        %v1586 = vshrl.u32 %v1585, 7
        %v1587 = vsub.s32 3, %v1586
        %v1588 = vrot.slane %v957, %v1587
        %v1589 = vmul.f32 %v1588, %v618
        %v1590 = vmul.f32 %v1588, %v619
        %v1591 = vmul.f32 %v1588, %v620
        %v1592 = vmul.f32 %v1588, %v621
        %v1593 = vmul.f32 %v1588, %v622
        %v1594 = vmul.f32 %v1588, %v623
        %v1595 = vmul.f32 %v1588, %v624
        %v1596 = vmul.f32 %v1588, %v625
        %v1597 = vmul.f32 %v1588, %v626
        %v1598 = vmul.f32 %v1588, %v627
        %v1599 = vmul.f32 %v1588, %v628
        %v1600 = vmul.f32 %v1588, %v629
        %v1601 = vmul.f32 %v1588, %v630
        %v1602 = vmul.f32 %v1588, %v631
        %v1603 = vmul.f32 %v1588, %v632
        %v1604 = vmul.f32 %v1588, %v633
        %1605 = vadd.xlane.f32.xlu0 %v1589
        %v1606 = vpop.xlane.xlu0 %1605
        %1607 = vadd.xlane.f32.xlu0 %v1590
        %v1608 = vpop.xlane.xlu0 %1607
        %1609 = vadd.xlane.f32.xlu0 %v1591
        %v1610 = vpop.xlane.xlu0 %1609
        %1611 = vadd.xlane.f32.xlu0 %v1592
        %v1612 = vpop.xlane.xlu0 %1611
        %1613 = vadd.xlane.f32.xlu0 %v1593
        %v1614 = vpop.xlane.xlu0 %1613
        %1615 = vadd.xlane.f32.xlu0 %v1594
        %v1616 = vpop.xlane.xlu0 %1615
        %1617 = vadd.xlane.f32.xlu0 %v1595
        %v1618 = vpop.xlane.xlu0 %1617
        %1619 = vadd.xlane.f32.xlu0 %v1596
        %v1620 = vpop.xlane.xlu0 %1619
        %1621 = vadd.xlane.f32.xlu0 %v1597
        %v1622 = vpop.xlane.xlu0 %1621
        %1623 = vadd.xlane.f32.xlu0 %v1598
        %v1624 = vpop.xlane.xlu0 %1623
        %1625 = vadd.xlane.f32.xlu0 %v1599
        %v1626 = vpop.xlane.xlu0 %1625
        %1627 = vadd.xlane.f32.xlu0 %v1600
        %v1628 = vpop.xlane.xlu0 %1627
        %1629 = vadd.xlane.f32.xlu0 %v1601
        %v1630 = vpop.xlane.xlu0 %1629
        %1631 = vadd.xlane.f32.xlu0 %v1602
        %v1632 = vpop.xlane.xlu0 %1631
        %1633 = vadd.xlane.f32.xlu0 %v1603
        %v1634 = vpop.xlane.xlu0 %1633
        %1635 = vadd.xlane.f32.xlu0 %v1604
        %v1636 = vpop.xlane.xlu0 %1635
        %v1637 = vlaneseq
        %v1638 = vshrl.u32 %v1637, 7
        %v1639 = vsub.s32 3, %v1638
        %v1640 = vrot.slane %v958, %v1639
        %v1641 = vmul.f32 %v1640, %v618
        %v1642 = vmul.f32 %v1640, %v619
        %v1643 = vmul.f32 %v1640, %v620
        %v1644 = vmul.f32 %v1640, %v621
        %v1645 = vmul.f32 %v1640, %v622
        %v1646 = vmul.f32 %v1640, %v623
        %v1647 = vmul.f32 %v1640, %v624
        %v1648 = vmul.f32 %v1640, %v625
        %v1649 = vmul.f32 %v1640, %v626
        %v1650 = vmul.f32 %v1640, %v627
        %v1651 = vmul.f32 %v1640, %v628
        %v1652 = vmul.f32 %v1640, %v629
        %v1653 = vmul.f32 %v1640, %v630
        %v1654 = vmul.f32 %v1640, %v631
        %v1655 = vmul.f32 %v1640, %v632
        %v1656 = vmul.f32 %v1640, %v633
        %1657 = vadd.xlane.f32.xlu0 %v1641
        %v1658 = vpop.xlane.xlu0 %1657
        %1659 = vadd.xlane.f32.xlu0 %v1642
        %v1660 = vpop.xlane.xlu0 %1659
        %1661 = vadd.xlane.f32.xlu0 %v1643
        %v1662 = vpop.xlane.xlu0 %1661
        %1663 = vadd.xlane.f32.xlu0 %v1644
        %v1664 = vpop.xlane.xlu0 %1663
        %1665 = vadd.xlane.f32.xlu0 %v1645
        %v1666 = vpop.xlane.xlu0 %1665
        %1667 = vadd.xlane.f32.xlu0 %v1646
        %v1668 = vpop.xlane.xlu0 %1667
        %1669 = vadd.xlane.f32.xlu0 %v1647
        %v1670 = vpop.xlane.xlu0 %1669
        %1671 = vadd.xlane.f32.xlu0 %v1648
        %v1672 = vpop.xlane.xlu0 %1671
        %1673 = vadd.xlane.f32.xlu0 %v1649
        %v1674 = vpop.xlane.xlu0 %1673
        %1675 = vadd.xlane.f32.xlu0 %v1650
        %v1676 = vpop.xlane.xlu0 %1675
        %1677 = vadd.xlane.f32.xlu0 %v1651
        %v1678 = vpop.xlane.xlu0 %1677
        %1679 = vadd.xlane.f32.xlu0 %v1652
        %v1680 = vpop.xlane.xlu0 %1679
        %1681 = vadd.xlane.f32.xlu0 %v1653
        %v1682 = vpop.xlane.xlu0 %1681
        %1683 = vadd.xlane.f32.xlu0 %v1654
        %v1684 = vpop.xlane.xlu0 %1683
        %1685 = vadd.xlane.f32.xlu0 %v1655
        %v1686 = vpop.xlane.xlu0 %1685
        %1687 = vadd.xlane.f32.xlu0 %v1656
        %v1688 = vpop.xlane.xlu0 %1687
        %v1689 = vlaneseq
        %v1690 = vshrl.u32 %v1689, 7
        %v1691 = vsub.s32 3, %v1690
        %v1692 = vrot.slane %v959, %v1691
        %v1693 = vsub.f32 %v1606, %v1692
        %v1694 = vsub.f32 %v1608, %v1692
        %v1695 = vsub.f32 %v1610, %v1692
        %v1696 = vsub.f32 %v1612, %v1692
        %v1697 = vsub.f32 %v1614, %v1692
        %v1698 = vsub.f32 %v1616, %v1692
        %v1699 = vsub.f32 %v1618, %v1692
        %v1700 = vsub.f32 %v1620, %v1692
        %v1701 = vsub.f32 %v1622, %v1692
        %v1702 = vsub.f32 %v1624, %v1692
        %v1703 = vsub.f32 %v1626, %v1692
        %v1704 = vsub.f32 %v1628, %v1692
        %v1705 = vsub.f32 %v1630, %v1692
        %v1706 = vsub.f32 %v1632, %v1692
        %v1707 = vsub.f32 %v1634, %v1692
        %v1708 = vsub.f32 %v1636, %v1692
        %v1709 = vand.u32 2147483647, %v1693
        %v1710 = vand.u32 2147483647, %v1694
        %v1711 = vand.u32 2147483647, %v1695
        %v1712 = vand.u32 2147483647, %v1696
        %v1713 = vand.u32 2147483647, %v1697
        %v1714 = vand.u32 2147483647, %v1698
        %v1715 = vand.u32 2147483647, %v1699
        %v1716 = vand.u32 2147483647, %v1700
        %v1717 = vand.u32 2147483647, %v1701
        %v1718 = vand.u32 2147483647, %v1702
        %v1719 = vand.u32 2147483647, %v1703
        %v1720 = vand.u32 2147483647, %v1704
        %v1721 = vand.u32 2147483647, %v1705
        %v1722 = vand.u32 2147483647, %v1706
        %v1723 = vand.u32 2147483647, %v1707
        %v1724 = vand.u32 2147483647, %v1708
        %v1725 = vadd.f32 %v1569, %v1709
        %v1726 = vadd.f32 %v1570, %v1710
        %v1727 = vadd.f32 %v1571, %v1711
        %v1728 = vadd.f32 %v1572, %v1712
        %v1729 = vadd.f32 %v1573, %v1713
        %v1730 = vadd.f32 %v1574, %v1714
        %v1731 = vadd.f32 %v1575, %v1715
        %v1732 = vadd.f32 %v1576, %v1716
        %v1733 = vadd.f32 %v1577, %v1717
        %v1734 = vadd.f32 %v1578, %v1718
        %v1735 = vadd.f32 %v1579, %v1719
        %v1736 = vadd.f32 %v1580, %v1720
        %v1737 = vadd.f32 %v1581, %v1721
        %v1738 = vadd.f32 %v1582, %v1722
        %v1739 = vadd.f32 %v1583, %v1723
        %v1740 = vadd.f32 %v1584, %v1724
        %v1741 = vlaneseq
        %v1742 = vshrl.u32 %v1741, 7
        %v1743 = vsub.s32 3, %v1742
        %v1744 = vrot.slane %v960, %v1743
        %v1745 = vsub.f32 %v1658, %v1744
        %v1746 = vsub.f32 %v1660, %v1744
        %v1747 = vsub.f32 %v1662, %v1744
        %v1748 = vsub.f32 %v1664, %v1744
        %v1749 = vsub.f32 %v1666, %v1744
        %v1750 = vsub.f32 %v1668, %v1744
        %v1751 = vsub.f32 %v1670, %v1744
        %v1752 = vsub.f32 %v1672, %v1744
        %v1753 = vsub.f32 %v1674, %v1744
        %v1754 = vsub.f32 %v1676, %v1744
        %v1755 = vsub.f32 %v1678, %v1744
        %v1756 = vsub.f32 %v1680, %v1744
        %v1757 = vsub.f32 %v1682, %v1744
        %v1758 = vsub.f32 %v1684, %v1744
        %v1759 = vsub.f32 %v1686, %v1744
        %v1760 = vsub.f32 %v1688, %v1744
        %v1761 = vand.u32 2147483647, %v1745
        %v1762 = vand.u32 2147483647, %v1746
        %v1763 = vand.u32 2147483647, %v1747
        %v1764 = vand.u32 2147483647, %v1748
        %v1765 = vand.u32 2147483647, %v1749
        %v1766 = vand.u32 2147483647, %v1750
        %v1767 = vand.u32 2147483647, %v1751
        %v1768 = vand.u32 2147483647, %v1752
        %v1769 = vand.u32 2147483647, %v1753
        %v1770 = vand.u32 2147483647, %v1754
        %v1771 = vand.u32 2147483647, %v1755
        %v1772 = vand.u32 2147483647, %v1756
        %v1773 = vand.u32 2147483647, %v1757
        %v1774 = vand.u32 2147483647, %v1758
        %v1775 = vand.u32 2147483647, %v1759
        %v1776 = vand.u32 2147483647, %v1760
        %v1777 = vadd.f32 %v1725, %v1761
        %v1778 = vadd.f32 %v1726, %v1762
        %v1779 = vadd.f32 %v1727, %v1763
        %v1780 = vadd.f32 %v1728, %v1764
        %v1781 = vadd.f32 %v1729, %v1765
        %v1782 = vadd.f32 %v1730, %v1766
        %v1783 = vadd.f32 %v1731, %v1767
        %v1784 = vadd.f32 %v1732, %v1768
        %v1785 = vadd.f32 %v1733, %v1769
        %v1786 = vadd.f32 %v1734, %v1770
        %v1787 = vadd.f32 %v1735, %v1771
        %v1788 = vadd.f32 %v1736, %v1772
        %v1789 = vadd.f32 %v1737, %v1773
        %v1790 = vadd.f32 %v1738, %v1774
        %v1791 = vadd.f32 %v1739, %v1775
        %v1792 = vadd.f32 %v1740, %v1776
        %v1793 = vmul.f32 %v957, 0.5
        %v1795 = vrot.slane %v1793, 2
        %v1797 = vsub.f32 %v957, %v1795
        %v1798 = vadd.f32 %v957, %v1795
        %v1799 = vmul.f32 %v959, 0.5
        %v1801 = vrot.slane %v1799, 2
        %v1803 = vsub.f32 %v959, %v1801
        %v1804 = vadd.f32 %v959, %v1801
        %v1805 = vsub.f32 %v1798, %v1797
        %v1807 = vrot.slane %v1805, 1
        %v1809 = vmul.f32 %v1805, %v1807
        %v1810 = vsub.f32 %v1804, %v1803
        %v1812 = vrot.slane %v1810, 1
        %v1814 = vmul.f32 %v1810, %v1812
        %v1815 = vmax.f32 %v1797, %v1803
        %v1816 = vmin.f32 %v1798, %v1804
        %v1817 = vsub.f32 %v1816, %v1815
        %v1818 = vmax.f32 %v1817, 0.0
        %v1820 = vrot.slane %v1818, 1
        %v1822 = vmul.f32 %v1818, %v1820
        %v1823 = vadd.f32 %v1809, %v1814
        %v1824 = vsub.f32 %v1823, %v1822
        %v1825 = vmax.f32 %v1824, 1e-09
        %v1826 = vrcp.pop %v1825
        %v1827 = vmul.f32 %v1822, %v1826
        %v1828 = vmin.f32 %v1797, %v1803
        %v1829 = vmax.f32 %v1798, %v1804
        %v1830 = vsub.f32 %v1829, %v1828
        %v1832 = vrot.slane %v1830, 1
        %v1834 = vmul.f32 %v1830, %v1832
        %v1835 = vmax.f32 %v1834, 1e-09
        %v1836 = vsub.f32 %v1835, %v1825
        %v1837 = vrcp.pop %v1835
        %v1838 = vmul.f32 %v1836, %v1837
        %v1839 = vsub.f32 %v1827, %v1838
        %v1840 = vsub.f32 1.0, %v1839
        %v1841 = vmul.f32 %v958, 0.5
        %v1843 = vrot.slane %v1841, 2
        %v1845 = vsub.f32 %v958, %v1843
        %v1846 = vadd.f32 %v958, %v1843
        %v1847 = vmul.f32 %v960, 0.5
        %v1849 = vrot.slane %v1847, 2
        %v1851 = vsub.f32 %v960, %v1849
        %v1852 = vadd.f32 %v960, %v1849
        %v1853 = vsub.f32 %v1846, %v1845
        %v1855 = vrot.slane %v1853, 1
        %v1857 = vmul.f32 %v1853, %v1855
        %v1858 = vsub.f32 %v1852, %v1851
        %v1860 = vrot.slane %v1858, 1
        %v1862 = vmul.f32 %v1858, %v1860
        %v1863 = vmax.f32 %v1845, %v1851
        %v1864 = vmin.f32 %v1846, %v1852
        %v1865 = vsub.f32 %v1864, %v1863
        %v1866 = vmax.f32 %v1865, 0.0
        %v1868 = vrot.slane %v1866, 1
        %v1870 = vmul.f32 %v1866, %v1868
        %v1871 = vadd.f32 %v1857, %v1862
        %v1872 = vsub.f32 %v1871, %v1870
        %v1873 = vmax.f32 %v1872, 1e-09
        %v1874 = vrcp.pop %v1873
        %v1875 = vmul.f32 %v1870, %v1874
        %v1876 = vmin.f32 %v1845, %v1851
        %v1877 = vmax.f32 %v1846, %v1852
        %v1878 = vsub.f32 %v1877, %v1876
        %v1880 = vrot.slane %v1878, 1
        %v1882 = vmul.f32 %v1878, %v1880
        %v1883 = vmax.f32 %v1882, 1e-09
        %v1884 = vsub.f32 %v1883, %v1873
        %v1885 = vrcp.pop %v1883
        %v1886 = vmul.f32 %v1884, %v1885
        %v1887 = vsub.f32 %v1875, %v1886
        %v1888 = vsub.f32 1.0, %v1887
        %v1889 = vadd.f32 %v1840, %v1888
        %v1890 = vstv %s663
        %v1891 = vadd.f32 %v1890, %v956
        %v1892 = vadd.f32 %v1891, %v1777
        %v1893 = vadd.f32 %v1891, %v1778
        %v1894 = vadd.f32 %v1891, %v1779
        %v1895 = vadd.f32 %v1891, %v1780
        %v1896 = vadd.f32 %v1891, %v1781
        %v1897 = vadd.f32 %v1891, %v1782
        %v1898 = vadd.f32 %v1891, %v1783
        %v1899 = vadd.f32 %v1891, %v1784
        %v1900 = vadd.f32 %v1891, %v1785
        %v1901 = vadd.f32 %v1891, %v1786
        %v1902 = vadd.f32 %v1891, %v1787
        %v1903 = vadd.f32 %v1891, %v1788
        %v1904 = vadd.f32 %v1891, %v1789
        %v1905 = vadd.f32 %v1891, %v1790
        %v1906 = vadd.f32 %v1891, %v1791
        %v1907 = vadd.f32 %v1891, %v1792
        %v1908 = vlaneseq
        %v1909 = vshrl.u32 %v1908, 7
        %v1910 = vsub.s32 0, %v1909
        %v1911 = vrot.slane %v1889, %v1910
        %v1912 = vadd.f32 %v1892, %v1911
        %v1913 = vadd.f32 %v1893, %v1911
        %v1914 = vadd.f32 %v1894, %v1911
        %v1915 = vadd.f32 %v1895, %v1911
        %v1916 = vadd.f32 %v1896, %v1911
        %v1917 = vadd.f32 %v1897, %v1911
        %v1918 = vadd.f32 %v1898, %v1911
        %v1919 = vadd.f32 %v1899, %v1911
        %v1920 = vadd.f32 %v1900, %v1911
        %v1921 = vadd.f32 %v1901, %v1911
        %v1922 = vadd.f32 %v1902, %v1911
        %v1923 = vadd.f32 %v1903, %v1911
        %v1924 = vadd.f32 %v1904, %v1911
        %v1925 = vadd.f32 %v1905, %v1911
        %v1926 = vadd.f32 %v1906, %v1911
        %v1927 = vadd.f32 %v1907, %v1911
        %1928 = vst [vmem:[%s547] sm:$0xff] %v1912
        %1929 = vst [vmem:[%s547 + $0x8] sm:$0xff] %v1913
        %1930 = vst [vmem:[%s547 + $0x10] sm:$0xff] %v1914
        %1931 = vst [vmem:[%s547 + $0x18] sm:$0xff] %v1915
        %1932 = vst [vmem:[%s547 + $0x20] sm:$0xff] %v1916
        %1933 = vst [vmem:[%s547 + $0x28] sm:$0xff] %v1917
        %1934 = vst [vmem:[%s547 + $0x30] sm:$0xff] %v1918
        %1935 = vst [vmem:[%s547 + $0x38] sm:$0xff] %v1919
        %1936 = vst [vmem:[%s547 + $0x40] sm:$0xff] %v1920
        %1937 = vst [vmem:[%s547 + $0x48] sm:$0xff] %v1921
        %1938 = vst [vmem:[%s547 + $0x50] sm:$0xff] %v1922
        %1939 = vst [vmem:[%s547 + $0x58] sm:$0xff] %v1923
        %1940 = vst [vmem:[%s547 + $0x60] sm:$0xff] %v1924
        %1941 = vst [vmem:[%s547 + $0x68] sm:$0xff] %v1925
        %1942 = vst [vmem:[%s547 + $0x70] sm:$0xff] %v1926
        %1943 = vst [vmem:[%s547 + $0x78] sm:$0xff] %v1927
        %s1944 = scalar_lea.vmem %s555, 1
        %v1945 = vld [vmem:[%s1944] sm:$0x1]
        %v1946 = vsel %vm567, %v1945, -1e+09
        %s1947 = scalar_lea.vmem %s560, 1
        %v1948 = vld [vmem:[%s1947] sm:$0x1]
        %v1949 = vsel %vm637, %v1946, -inf
        %1950 = vmax.xlane.f32.xlu0 %v1949
        %v1951 = vpop.xlane.xlu0 %1950
        %v1952 = vsub.f32 %v1946, %v1951
        %v1953 = vmul.f32 %v1952, 1.442695
        %v1954 = vpow.pop %v1953
        %v1955 = vsel %vm637, %v1954, 0.0
        %1956 = vadd.xlane.f32.xlu0 %v1955
        %v1957 = vpop.xlane.xlu0 %1956
        %v1958 = vlog2.pop %v1957
        %v1959 = vmul.f32 %v1958, 0.6931472
        %v1960 = vadd.f32 %v1959, %v1951
        %v1961 = vsub.f32 %v1946, %v1960
        %v1962 = vmul.f32 %v1948, %v1961
        %v1963 = vsel %vm567, %v1962, 0.0
        %v1964 = vsel %vm637, %v1963, 0.0
        %1965 = vadd.xlane.f32.xlu0 %v1964
        %v1966 = vpop.xlane.xlu0 %1965
        %v1967 = vrot.slane %v1966, 4
        %v1968 = vadd.f32 %v1966, %v1967
        %v1969 = vrot.slane %v1968, 2
        %v1970 = vadd.f32 %v1968, %v1969
        %v1971 = vrot.slane %v1970, 1
        %v1972 = vadd.f32 %v1970, %v1971
        %s1973 = vtos %v1972
        %s1974 = ssub.f32 0.0, %s1973
        %s1975 = scalar_lea.vmem %s473, 128 [#allocation10]
        %v1976 = vld [vmem:[%s1975] sm:$0xff]
        %v1977 = vld [vmem:[%s1975 + $0x8] sm:$0xff]
        %v1978 = vld [vmem:[%s1975 + $0x10] sm:$0xff]
        %v1979 = vld [vmem:[%s1975 + $0x18] sm:$0xff]
        %v1980 = vld [vmem:[%s1975 + $0x20] sm:$0xff]
        %v1981 = vld [vmem:[%s1975 + $0x28] sm:$0xff]
        %v1982 = vld [vmem:[%s1975 + $0x30] sm:$0xff]
        %v1983 = vld [vmem:[%s1975 + $0x38] sm:$0xff]
        %v1984 = vld [vmem:[%s1975 + $0x40] sm:$0xff]
        %v1985 = vld [vmem:[%s1975 + $0x48] sm:$0xff]
        %v1986 = vld [vmem:[%s1975 + $0x50] sm:$0xff]
        %v1987 = vld [vmem:[%s1975 + $0x58] sm:$0xff]
        %v1988 = vld [vmem:[%s1975 + $0x60] sm:$0xff]
        %v1989 = vld [vmem:[%s1975 + $0x68] sm:$0xff]
        %v1990 = vld [vmem:[%s1975 + $0x70] sm:$0xff]
        %v1991 = vld [vmem:[%s1975 + $0x78] sm:$0xff]
        %s1992 = scalar_lea.vmem %s482, 128 [#allocation11]
        %v1993 = vld [vmem:[%s1992] sm:$0xff]
        %v1994 = vld [vmem:[%s1992 + $0x8] sm:$0xff]
        %v1995 = vld [vmem:[%s1992 + $0x10] sm:$0xff]
        %v1996 = vld [vmem:[%s1992 + $0x18] sm:$0xff]
        %v1997 = vld [vmem:[%s1992 + $0x20] sm:$0xff]
        %v1998 = vld [vmem:[%s1992 + $0x28] sm:$0xff]
        %v1999 = vld [vmem:[%s1992 + $0x30] sm:$0xff]
        %v2000 = vld [vmem:[%s1992 + $0x38] sm:$0xff]
        %v2001 = vld [vmem:[%s1992 + $0x40] sm:$0xff]
        %v2002 = vld [vmem:[%s1992 + $0x48] sm:$0xff]
        %v2003 = vld [vmem:[%s1992 + $0x50] sm:$0xff]
        %v2004 = vld [vmem:[%s1992 + $0x58] sm:$0xff]
        %v2005 = vld [vmem:[%s1992 + $0x60] sm:$0xff]
        %v2006 = vld [vmem:[%s1992 + $0x68] sm:$0xff]
        %v2007 = vld [vmem:[%s1992 + $0x70] sm:$0xff]
        %v2008 = vld [vmem:[%s1992 + $0x78] sm:$0xff]
        %v2009 = vmax.f32 %v1976, 0.0
        %v2010 = vmax.f32 %v1977, 0.0
        %v2011 = vmax.f32 %v1978, 0.0
        %v2012 = vmax.f32 %v1979, 0.0
        %v2013 = vmax.f32 %v1980, 0.0
        %v2014 = vmax.f32 %v1981, 0.0
        %v2015 = vmax.f32 %v1982, 0.0
        %v2016 = vmax.f32 %v1983, 0.0
        %v2017 = vmax.f32 %v1984, 0.0
        %v2018 = vmax.f32 %v1985, 0.0
        %v2019 = vmax.f32 %v1986, 0.0
        %v2020 = vmax.f32 %v1987, 0.0
        %v2021 = vmax.f32 %v1988, 0.0
        %v2022 = vmax.f32 %v1989, 0.0
        %v2023 = vmax.f32 %v1990, 0.0
        %v2024 = vmax.f32 %v1991, 0.0
        %v2025 = vmul.f32 %v1976, %v1993
        %v2026 = vmul.f32 %v1977, %v1994
        %v2027 = vmul.f32 %v1978, %v1995
        %v2028 = vmul.f32 %v1979, %v1996
        %v2029 = vmul.f32 %v1980, %v1997
        %v2030 = vmul.f32 %v1981, %v1998
        %v2031 = vmul.f32 %v1982, %v1999
        %v2032 = vmul.f32 %v1983, %v2000
        %v2033 = vmul.f32 %v1984, %v2001
        %v2034 = vmul.f32 %v1985, %v2002
        %v2035 = vmul.f32 %v1986, %v2003
        %v2036 = vmul.f32 %v1987, %v2004
        %v2037 = vmul.f32 %v1988, %v2005
        %v2038 = vmul.f32 %v1989, %v2006
        %v2039 = vmul.f32 %v1990, %v2007
        %v2040 = vmul.f32 %v1991, %v2008
        %v2041 = vsub.f32 %v2009, %v2025
        %v2042 = vsub.f32 %v2010, %v2026
        %v2043 = vsub.f32 %v2011, %v2027
        %v2044 = vsub.f32 %v2012, %v2028
        %v2045 = vsub.f32 %v2013, %v2029
        %v2046 = vsub.f32 %v2014, %v2030
        %v2047 = vsub.f32 %v2015, %v2031
        %v2048 = vsub.f32 %v2016, %v2032
        %v2049 = vsub.f32 %v2017, %v2033
        %v2050 = vsub.f32 %v2018, %v2034
        %v2051 = vsub.f32 %v2019, %v2035
        %v2052 = vsub.f32 %v2020, %v2036
        %v2053 = vsub.f32 %v2021, %v2037
        %v2054 = vsub.f32 %v2022, %v2038
        %v2055 = vsub.f32 %v2023, %v2039
        %v2056 = vsub.f32 %v2024, %v2040
        %v2057 = vand.u32 2147483647, %v1976
        %v2058 = vand.u32 2147483647, %v1977
        %v2059 = vand.u32 2147483647, %v1978
        %v2060 = vand.u32 2147483647, %v1979
        %v2061 = vand.u32 2147483647, %v1980
        %v2062 = vand.u32 2147483647, %v1981
        %v2063 = vand.u32 2147483647, %v1982
        %v2064 = vand.u32 2147483647, %v1983
        %v2065 = vand.u32 2147483647, %v1984
        %v2066 = vand.u32 2147483647, %v1985
        %v2067 = vand.u32 2147483647, %v1986
        %v2068 = vand.u32 2147483647, %v1987
        %v2069 = vand.u32 2147483647, %v1988
        %v2070 = vand.u32 2147483647, %v1989
        %v2071 = vand.u32 2147483647, %v1990
        %v2072 = vand.u32 2147483647, %v1991
        %v2073 = vsub.f32 0.0, %v2057
        %v2074 = vsub.f32 0.0, %v2058
        %v2075 = vsub.f32 0.0, %v2059
        %v2076 = vsub.f32 0.0, %v2060
        %v2077 = vsub.f32 0.0, %v2061
        %v2078 = vsub.f32 0.0, %v2062
        %v2079 = vsub.f32 0.0, %v2063
        %v2080 = vsub.f32 0.0, %v2064
        %v2081 = vsub.f32 0.0, %v2065
        %v2082 = vsub.f32 0.0, %v2066
        %v2083 = vsub.f32 0.0, %v2067
        %v2084 = vsub.f32 0.0, %v2068
        %v2085 = vsub.f32 0.0, %v2069
        %v2086 = vsub.f32 0.0, %v2070
        %v2087 = vsub.f32 0.0, %v2071
        %v2088 = vsub.f32 0.0, %v2072
        %v2089 = vmul.f32 %v2073, 1.442695
        %v2090 = vpow.pop %v2089
        %v2091 = vmul.f32 %v2074, 1.442695
        %v2092 = vpow.pop %v2091
        %v2093 = vmul.f32 %v2075, 1.442695
        %v2094 = vpow.pop %v2093
        %v2095 = vmul.f32 %v2076, 1.442695
        %v2096 = vpow.pop %v2095
        %v2097 = vmul.f32 %v2077, 1.442695
        %v2098 = vpow.pop %v2097
        %v2099 = vmul.f32 %v2078, 1.442695
        %v2100 = vpow.pop %v2099
        %v2101 = vmul.f32 %v2079, 1.442695
        %v2102 = vpow.pop %v2101
        %v2103 = vmul.f32 %v2080, 1.442695
        %v2104 = vpow.pop %v2103
        %v2105 = vmul.f32 %v2081, 1.442695
        %v2106 = vpow.pop %v2105
        %v2107 = vmul.f32 %v2082, 1.442695
        %v2108 = vpow.pop %v2107
        %v2109 = vmul.f32 %v2083, 1.442695
        %v2110 = vpow.pop %v2109
        %v2111 = vmul.f32 %v2084, 1.442695
        %v2112 = vpow.pop %v2111
        %v2113 = vmul.f32 %v2085, 1.442695
        %v2114 = vpow.pop %v2113
        %v2115 = vmul.f32 %v2086, 1.442695
        %v2116 = vpow.pop %v2115
        %v2117 = vmul.f32 %v2087, 1.442695
        %v2118 = vpow.pop %v2117
        %v2119 = vmul.f32 %v2088, 1.442695
        %v2120 = vpow.pop %v2119
        %v2121 = vadd.f32 %v2090, 1.0
        %v2122 = vadd.f32 %v2092, 1.0
        %v2123 = vadd.f32 %v2094, 1.0
        %v2124 = vadd.f32 %v2096, 1.0
        %v2125 = vadd.f32 %v2098, 1.0
        %v2126 = vadd.f32 %v2100, 1.0
        %v2127 = vadd.f32 %v2102, 1.0
        %v2128 = vadd.f32 %v2104, 1.0
        %v2129 = vadd.f32 %v2106, 1.0
        %v2130 = vadd.f32 %v2108, 1.0
        %v2131 = vadd.f32 %v2110, 1.0
        %v2132 = vadd.f32 %v2112, 1.0
        %v2133 = vadd.f32 %v2114, 1.0
        %v2134 = vadd.f32 %v2116, 1.0
        %v2135 = vadd.f32 %v2118, 1.0
        %v2136 = vadd.f32 %v2120, 1.0
        %v2137 = vlog2.pop %v2121
        %v2138 = vmul.f32 %v2137, 0.6931472
        %v2139 = vlog2.pop %v2122
        %v2140 = vmul.f32 %v2139, 0.6931472
        %v2141 = vlog2.pop %v2123
        %v2142 = vmul.f32 %v2141, 0.6931472
        %v2143 = vlog2.pop %v2124
        %v2144 = vmul.f32 %v2143, 0.6931472
        %v2145 = vlog2.pop %v2125
        %v2146 = vmul.f32 %v2145, 0.6931472
        %v2147 = vlog2.pop %v2126
        %v2148 = vmul.f32 %v2147, 0.6931472
        %v2149 = vlog2.pop %v2127
        %v2150 = vmul.f32 %v2149, 0.6931472
        %v2151 = vlog2.pop %v2128
        %v2152 = vmul.f32 %v2151, 0.6931472
        %v2153 = vlog2.pop %v2129
        %v2154 = vmul.f32 %v2153, 0.6931472
        %v2155 = vlog2.pop %v2130
        %v2156 = vmul.f32 %v2155, 0.6931472
        %v2157 = vlog2.pop %v2131
        %v2158 = vmul.f32 %v2157, 0.6931472
        %v2159 = vlog2.pop %v2132
        %v2160 = vmul.f32 %v2159, 0.6931472
        %v2161 = vlog2.pop %v2133
        %v2162 = vmul.f32 %v2161, 0.6931472
        %v2163 = vlog2.pop %v2134
        %v2164 = vmul.f32 %v2163, 0.6931472
        %v2165 = vlog2.pop %v2135
        %v2166 = vmul.f32 %v2165, 0.6931472
        %v2167 = vlog2.pop %v2136
        %v2168 = vmul.f32 %v2167, 0.6931472
        %v2169 = vadd.f32 %v2041, %v2138
        %v2170 = vadd.f32 %v2042, %v2140
        %v2171 = vadd.f32 %v2043, %v2142
        %v2172 = vadd.f32 %v2044, %v2144
        %v2173 = vadd.f32 %v2045, %v2146
        %v2174 = vadd.f32 %v2046, %v2148
        %v2175 = vadd.f32 %v2047, %v2150
        %v2176 = vadd.f32 %v2048, %v2152
        %v2177 = vadd.f32 %v2049, %v2154
        %v2178 = vadd.f32 %v2050, %v2156
        %v2179 = vadd.f32 %v2051, %v2158
        %v2180 = vadd.f32 %v2052, %v2160
        %v2181 = vadd.f32 %v2053, %v2162
        %v2182 = vadd.f32 %v2054, %v2164
        %v2183 = vadd.f32 %v2055, %v2166
        %v2184 = vadd.f32 %v2056, %v2168
        %v2185 = vsel %vm568, %v2169, 0.0
        %v2186 = vsel %vm568, %v2170, 0.0
        %v2187 = vsel %vm568, %v2171, 0.0
        %v2188 = vsel %vm568, %v2172, 0.0
        %v2189 = vsel %vm568, %v2173, 0.0
        %v2190 = vsel %vm568, %v2174, 0.0
        %v2191 = vsel %vm568, %v2175, 0.0
        %v2192 = vsel %vm568, %v2176, 0.0
        %v2193 = vsel %vm568, %v2177, 0.0
        %v2194 = vsel %vm568, %v2178, 0.0
        %v2195 = vsel %vm568, %v2179, 0.0
        %v2196 = vsel %vm568, %v2180, 0.0
        %v2197 = vsel %vm568, %v2181, 0.0
        %v2198 = vsel %vm568, %v2182, 0.0
        %v2199 = vsel %vm568, %v2183, 0.0
        %v2200 = vsel %vm568, %v2184, 0.0
        %2201 = vadd.xlane.f32.xlu0 %v2185
        %v2202 = vpop.xlane.xlu0 %2201
        %2203 = vadd.xlane.f32.xlu0 %v2186
        %v2204 = vpop.xlane.xlu0 %2203
        %2205 = vadd.xlane.f32.xlu0 %v2187
        %v2206 = vpop.xlane.xlu0 %2205
        %2207 = vadd.xlane.f32.xlu0 %v2188
        %v2208 = vpop.xlane.xlu0 %2207
        %2209 = vadd.xlane.f32.xlu0 %v2189
        %v2210 = vpop.xlane.xlu0 %2209
        %2211 = vadd.xlane.f32.xlu0 %v2190
        %v2212 = vpop.xlane.xlu0 %2211
        %2213 = vadd.xlane.f32.xlu0 %v2191
        %v2214 = vpop.xlane.xlu0 %2213
        %2215 = vadd.xlane.f32.xlu0 %v2192
        %v2216 = vpop.xlane.xlu0 %2215
        %2217 = vadd.xlane.f32.xlu0 %v2193
        %v2218 = vpop.xlane.xlu0 %2217
        %2219 = vadd.xlane.f32.xlu0 %v2194
        %v2220 = vpop.xlane.xlu0 %2219
        %2221 = vadd.xlane.f32.xlu0 %v2195
        %v2222 = vpop.xlane.xlu0 %2221
        %2223 = vadd.xlane.f32.xlu0 %v2196
        %v2224 = vpop.xlane.xlu0 %2223
        %2225 = vadd.xlane.f32.xlu0 %v2197
        %v2226 = vpop.xlane.xlu0 %2225
        %2227 = vadd.xlane.f32.xlu0 %v2198
        %v2228 = vpop.xlane.xlu0 %2227
        %2229 = vadd.xlane.f32.xlu0 %v2199
        %v2230 = vpop.xlane.xlu0 %2229
        %2231 = vadd.xlane.f32.xlu0 %v2200
        %v2232 = vpop.xlane.xlu0 %2231
        %v2233 = vmul.f32 %v2202, %v618
        %v2234 = vmul.f32 %v2204, %v619
        %v2235 = vmul.f32 %v2206, %v620
        %v2236 = vmul.f32 %v2208, %v621
        %v2237 = vmul.f32 %v2210, %v622
        %v2238 = vmul.f32 %v2212, %v623
        %v2239 = vmul.f32 %v2214, %v624
        %v2240 = vmul.f32 %v2216, %v625
        %v2241 = vmul.f32 %v2218, %v626
        %v2242 = vmul.f32 %v2220, %v627
        %v2243 = vmul.f32 %v2222, %v628
        %v2244 = vmul.f32 %v2224, %v629
        %v2245 = vmul.f32 %v2226, %v630
        %v2246 = vmul.f32 %v2228, %v631
        %v2247 = vmul.f32 %v2230, %v632
        %v2248 = vmul.f32 %v2232, %v633
        %v2249 = vadd.f32 %v2233, %v2234
        %v2250 = vadd.f32 %v2249, %v2235
        %v2251 = vadd.f32 %v2250, %v2236
        %v2252 = vadd.f32 %v2251, %v2237
        %v2253 = vadd.f32 %v2252, %v2238
        %v2254 = vadd.f32 %v2253, %v2239
        %v2255 = vadd.f32 %v2254, %v2240
        %v2256 = vadd.f32 %v2255, %v2241
        %v2257 = vadd.f32 %v2256, %v2242
        %v2258 = vadd.f32 %v2257, %v2243
        %v2259 = vadd.f32 %v2258, %v2244
        %v2260 = vadd.f32 %v2259, %v2245
        %v2261 = vadd.f32 %v2260, %v2246
        %v2262 = vadd.f32 %v2261, %v2247
        %v2263 = vadd.f32 %v2262, %v2248
        %v2264 = vrot.slane %v2263, 4
        %v2265 = vadd.f32 %v2263, %v2264
        %v2266 = vrot.slane %v2265, 2
        %v2267 = vadd.f32 %v2265, %v2266
        %v2268 = vrot.slane %v2267, 1
        %v2269 = vadd.f32 %v2267, %v2268
        %s2270 = scalar_lea.vmem %s437, 8 [#allocation2]
        %v2271 = vld [vmem:[%s2270] sm:$0xff]
        %s2272 = scalar_lea.vmem %s446, 8 [#allocation5]
        %v2273 = vld [vmem:[%s2272] sm:$0xff]
        %s2274 = scalar_lea.vmem %s455, 8 [#allocation7]
        %v2275 = vld [vmem:[%s2274] sm:$0xff]
        %s2276 = scalar_lea.vmem %s464, 8 [#allocation8]
        %v2277 = vld [vmem:[%s2276] sm:$0xff]
        %v2278 = vlaneseq
        %v2279 = vshrl.u32 %v2278, 7
        %v2280 = vsub.s32 0, %v2279
        %v2281 = vrot.slane %v2271, %v2280
        %v2282 = vmul.f32 %v2281, %v618
        %v2283 = vmul.f32 %v2281, %v619
        %v2284 = vmul.f32 %v2281, %v620
        %v2285 = vmul.f32 %v2281, %v621
        %v2286 = vmul.f32 %v2281, %v622
        %v2287 = vmul.f32 %v2281, %v623
        %v2288 = vmul.f32 %v2281, %v624
        %v2289 = vmul.f32 %v2281, %v625
        %v2290 = vmul.f32 %v2281, %v626
        %v2291 = vmul.f32 %v2281, %v627
        %v2292 = vmul.f32 %v2281, %v628
        %v2293 = vmul.f32 %v2281, %v629
        %v2294 = vmul.f32 %v2281, %v630
        %v2295 = vmul.f32 %v2281, %v631
        %v2296 = vmul.f32 %v2281, %v632
        %v2297 = vmul.f32 %v2281, %v633
        %2298 = vadd.xlane.f32.xlu0 %v2282
        %v2299 = vpop.xlane.xlu0 %2298
        %2300 = vadd.xlane.f32.xlu0 %v2283
        %v2301 = vpop.xlane.xlu0 %2300
        %2302 = vadd.xlane.f32.xlu0 %v2284
        %v2303 = vpop.xlane.xlu0 %2302
        %2304 = vadd.xlane.f32.xlu0 %v2285
        %v2305 = vpop.xlane.xlu0 %2304
        %2306 = vadd.xlane.f32.xlu0 %v2286
        %v2307 = vpop.xlane.xlu0 %2306
        %2308 = vadd.xlane.f32.xlu0 %v2287
        %v2309 = vpop.xlane.xlu0 %2308
        %2310 = vadd.xlane.f32.xlu0 %v2288
        %v2311 = vpop.xlane.xlu0 %2310
        %2312 = vadd.xlane.f32.xlu0 %v2289
        %v2313 = vpop.xlane.xlu0 %2312
        %2314 = vadd.xlane.f32.xlu0 %v2290
        %v2315 = vpop.xlane.xlu0 %2314
        %2316 = vadd.xlane.f32.xlu0 %v2291
        %v2317 = vpop.xlane.xlu0 %2316
        %2318 = vadd.xlane.f32.xlu0 %v2292
        %v2319 = vpop.xlane.xlu0 %2318
        %2320 = vadd.xlane.f32.xlu0 %v2293
        %v2321 = vpop.xlane.xlu0 %2320
        %2322 = vadd.xlane.f32.xlu0 %v2294
        %v2323 = vpop.xlane.xlu0 %2322
        %2324 = vadd.xlane.f32.xlu0 %v2295
        %v2325 = vpop.xlane.xlu0 %2324
        %2326 = vadd.xlane.f32.xlu0 %v2296
        %v2327 = vpop.xlane.xlu0 %2326
        %2328 = vadd.xlane.f32.xlu0 %v2297
        %v2329 = vpop.xlane.xlu0 %2328
        %v2330 = vlaneseq
        %v2331 = vshrl.u32 %v2330, 7
        %v2332 = vsub.s32 0, %v2331
        %v2333 = vrot.slane %v2273, %v2332
        %v2334 = vmul.f32 %v2333, %v618
        %v2335 = vmul.f32 %v2333, %v619
        %v2336 = vmul.f32 %v2333, %v620
        %v2337 = vmul.f32 %v2333, %v621
        %v2338 = vmul.f32 %v2333, %v622
        %v2339 = vmul.f32 %v2333, %v623
        %v2340 = vmul.f32 %v2333, %v624
        %v2341 = vmul.f32 %v2333, %v625
        %v2342 = vmul.f32 %v2333, %v626
        %v2343 = vmul.f32 %v2333, %v627
        %v2344 = vmul.f32 %v2333, %v628
        %v2345 = vmul.f32 %v2333, %v629
        %v2346 = vmul.f32 %v2333, %v630
        %v2347 = vmul.f32 %v2333, %v631
        %v2348 = vmul.f32 %v2333, %v632
        %v2349 = vmul.f32 %v2333, %v633
        %2350 = vadd.xlane.f32.xlu0 %v2334
        %v2351 = vpop.xlane.xlu0 %2350
        %2352 = vadd.xlane.f32.xlu0 %v2335
        %v2353 = vpop.xlane.xlu0 %2352
        %2354 = vadd.xlane.f32.xlu0 %v2336
        %v2355 = vpop.xlane.xlu0 %2354
        %2356 = vadd.xlane.f32.xlu0 %v2337
        %v2357 = vpop.xlane.xlu0 %2356
        %2358 = vadd.xlane.f32.xlu0 %v2338
        %v2359 = vpop.xlane.xlu0 %2358
        %2360 = vadd.xlane.f32.xlu0 %v2339
        %v2361 = vpop.xlane.xlu0 %2360
        %2362 = vadd.xlane.f32.xlu0 %v2340
        %v2363 = vpop.xlane.xlu0 %2362
        %2364 = vadd.xlane.f32.xlu0 %v2341
        %v2365 = vpop.xlane.xlu0 %2364
        %2366 = vadd.xlane.f32.xlu0 %v2342
        %v2367 = vpop.xlane.xlu0 %2366
        %2368 = vadd.xlane.f32.xlu0 %v2343
        %v2369 = vpop.xlane.xlu0 %2368
        %2370 = vadd.xlane.f32.xlu0 %v2344
        %v2371 = vpop.xlane.xlu0 %2370
        %2372 = vadd.xlane.f32.xlu0 %v2345
        %v2373 = vpop.xlane.xlu0 %2372
        %2374 = vadd.xlane.f32.xlu0 %v2346
        %v2375 = vpop.xlane.xlu0 %2374
        %2376 = vadd.xlane.f32.xlu0 %v2347
        %v2377 = vpop.xlane.xlu0 %2376
        %2378 = vadd.xlane.f32.xlu0 %v2348
        %v2379 = vpop.xlane.xlu0 %2378
        %2380 = vadd.xlane.f32.xlu0 %v2349
        %v2381 = vpop.xlane.xlu0 %2380
        %v2382 = vlaneseq
        %v2383 = vshrl.u32 %v2382, 7
        %v2384 = vsub.s32 0, %v2383
        %v2385 = vrot.slane %v2275, %v2384
        %v2386 = vsub.f32 %v2299, %v2385
        %v2387 = vsub.f32 %v2301, %v2385
        %v2388 = vsub.f32 %v2303, %v2385
        %v2389 = vsub.f32 %v2305, %v2385
        %v2390 = vsub.f32 %v2307, %v2385
        %v2391 = vsub.f32 %v2309, %v2385
        %v2392 = vsub.f32 %v2311, %v2385
        %v2393 = vsub.f32 %v2313, %v2385
        %v2394 = vsub.f32 %v2315, %v2385
        %v2395 = vsub.f32 %v2317, %v2385
        %v2396 = vsub.f32 %v2319, %v2385
        %v2397 = vsub.f32 %v2321, %v2385
        %v2398 = vsub.f32 %v2323, %v2385
        %v2399 = vsub.f32 %v2325, %v2385
        %v2400 = vsub.f32 %v2327, %v2385
        %v2401 = vsub.f32 %v2329, %v2385
        %v2402 = vand.u32 2147483647, %v2386
        %v2403 = vand.u32 2147483647, %v2387
        %v2404 = vand.u32 2147483647, %v2388
        %v2405 = vand.u32 2147483647, %v2389
        %v2406 = vand.u32 2147483647, %v2390
        %v2407 = vand.u32 2147483647, %v2391
        %v2408 = vand.u32 2147483647, %v2392
        %v2409 = vand.u32 2147483647, %v2393
        %v2410 = vand.u32 2147483647, %v2394
        %v2411 = vand.u32 2147483647, %v2395
        %v2412 = vand.u32 2147483647, %v2396
        %v2413 = vand.u32 2147483647, %v2397
        %v2414 = vand.u32 2147483647, %v2398
        %v2415 = vand.u32 2147483647, %v2399
        %v2416 = vand.u32 2147483647, %v2400
        %v2417 = vand.u32 2147483647, %v2401
        %v2418 = vadd.f32 %v2402, 0.0
        %v2419 = vadd.f32 %v2403, 0.0
        %v2420 = vadd.f32 %v2404, 0.0
        %v2421 = vadd.f32 %v2405, 0.0
        %v2422 = vadd.f32 %v2406, 0.0
        %v2423 = vadd.f32 %v2407, 0.0
        %v2424 = vadd.f32 %v2408, 0.0
        %v2425 = vadd.f32 %v2409, 0.0
        %v2426 = vadd.f32 %v2410, 0.0
        %v2427 = vadd.f32 %v2411, 0.0
        %v2428 = vadd.f32 %v2412, 0.0
        %v2429 = vadd.f32 %v2413, 0.0
        %v2430 = vadd.f32 %v2414, 0.0
        %v2431 = vadd.f32 %v2415, 0.0
        %v2432 = vadd.f32 %v2416, 0.0
        %v2433 = vadd.f32 %v2417, 0.0
        %v2434 = vlaneseq
        %v2435 = vshrl.u32 %v2434, 7
        %v2436 = vsub.s32 0, %v2435
        %v2437 = vrot.slane %v2277, %v2436
        %v2438 = vsub.f32 %v2351, %v2437
        %v2439 = vsub.f32 %v2353, %v2437
        %v2440 = vsub.f32 %v2355, %v2437
        %v2441 = vsub.f32 %v2357, %v2437
        %v2442 = vsub.f32 %v2359, %v2437
        %v2443 = vsub.f32 %v2361, %v2437
        %v2444 = vsub.f32 %v2363, %v2437
        %v2445 = vsub.f32 %v2365, %v2437
        %v2446 = vsub.f32 %v2367, %v2437
        %v2447 = vsub.f32 %v2369, %v2437
        %v2448 = vsub.f32 %v2371, %v2437
        %v2449 = vsub.f32 %v2373, %v2437
        %v2450 = vsub.f32 %v2375, %v2437
        %v2451 = vsub.f32 %v2377, %v2437
        %v2452 = vsub.f32 %v2379, %v2437
        %v2453 = vsub.f32 %v2381, %v2437
        %v2454 = vand.u32 2147483647, %v2438
        %v2455 = vand.u32 2147483647, %v2439
        %v2456 = vand.u32 2147483647, %v2440
        %v2457 = vand.u32 2147483647, %v2441
        %v2458 = vand.u32 2147483647, %v2442
        %v2459 = vand.u32 2147483647, %v2443
        %v2460 = vand.u32 2147483647, %v2444
        %v2461 = vand.u32 2147483647, %v2445
        %v2462 = vand.u32 2147483647, %v2446
        %v2463 = vand.u32 2147483647, %v2447
        %v2464 = vand.u32 2147483647, %v2448
        %v2465 = vand.u32 2147483647, %v2449
        %v2466 = vand.u32 2147483647, %v2450
        %v2467 = vand.u32 2147483647, %v2451
        %v2468 = vand.u32 2147483647, %v2452
        %v2469 = vand.u32 2147483647, %v2453
        %v2470 = vadd.f32 %v2418, %v2454
        %v2471 = vadd.f32 %v2419, %v2455
        %v2472 = vadd.f32 %v2420, %v2456
        %v2473 = vadd.f32 %v2421, %v2457
        %v2474 = vadd.f32 %v2422, %v2458
        %v2475 = vadd.f32 %v2423, %v2459
        %v2476 = vadd.f32 %v2424, %v2460
        %v2477 = vadd.f32 %v2425, %v2461
        %v2478 = vadd.f32 %v2426, %v2462
        %v2479 = vadd.f32 %v2427, %v2463
        %v2480 = vadd.f32 %v2428, %v2464
        %v2481 = vadd.f32 %v2429, %v2465
        %v2482 = vadd.f32 %v2430, %v2466
        %v2483 = vadd.f32 %v2431, %v2467
        %v2484 = vadd.f32 %v2432, %v2468
        %v2485 = vadd.f32 %v2433, %v2469
        %v2486 = vlaneseq
        %v2487 = vshrl.u32 %v2486, 7
        %v2488 = vsub.s32 1, %v2487
        %v2489 = vrot.slane %v2271, %v2488
        %v2490 = vmul.f32 %v2489, %v618
        %v2491 = vmul.f32 %v2489, %v619
        %v2492 = vmul.f32 %v2489, %v620
        %v2493 = vmul.f32 %v2489, %v621
        %v2494 = vmul.f32 %v2489, %v622
        %v2495 = vmul.f32 %v2489, %v623
        %v2496 = vmul.f32 %v2489, %v624
        %v2497 = vmul.f32 %v2489, %v625
        %v2498 = vmul.f32 %v2489, %v626
        %v2499 = vmul.f32 %v2489, %v627
        %v2500 = vmul.f32 %v2489, %v628
        %v2501 = vmul.f32 %v2489, %v629
        %v2502 = vmul.f32 %v2489, %v630
        %v2503 = vmul.f32 %v2489, %v631
        %v2504 = vmul.f32 %v2489, %v632
        %v2505 = vmul.f32 %v2489, %v633
        %2506 = vadd.xlane.f32.xlu0 %v2490
        %v2507 = vpop.xlane.xlu0 %2506
        %2508 = vadd.xlane.f32.xlu0 %v2491
        %v2509 = vpop.xlane.xlu0 %2508
        %2510 = vadd.xlane.f32.xlu0 %v2492
        %v2511 = vpop.xlane.xlu0 %2510
        %2512 = vadd.xlane.f32.xlu0 %v2493
        %v2513 = vpop.xlane.xlu0 %2512
        %2514 = vadd.xlane.f32.xlu0 %v2494
        %v2515 = vpop.xlane.xlu0 %2514
        %2516 = vadd.xlane.f32.xlu0 %v2495
        %v2517 = vpop.xlane.xlu0 %2516
        %2518 = vadd.xlane.f32.xlu0 %v2496
        %v2519 = vpop.xlane.xlu0 %2518
        %2520 = vadd.xlane.f32.xlu0 %v2497
        %v2521 = vpop.xlane.xlu0 %2520
        %2522 = vadd.xlane.f32.xlu0 %v2498
        %v2523 = vpop.xlane.xlu0 %2522
        %2524 = vadd.xlane.f32.xlu0 %v2499
        %v2525 = vpop.xlane.xlu0 %2524
        %2526 = vadd.xlane.f32.xlu0 %v2500
        %v2527 = vpop.xlane.xlu0 %2526
        %2528 = vadd.xlane.f32.xlu0 %v2501
        %v2529 = vpop.xlane.xlu0 %2528
        %2530 = vadd.xlane.f32.xlu0 %v2502
        %v2531 = vpop.xlane.xlu0 %2530
        %2532 = vadd.xlane.f32.xlu0 %v2503
        %v2533 = vpop.xlane.xlu0 %2532
        %2534 = vadd.xlane.f32.xlu0 %v2504
        %v2535 = vpop.xlane.xlu0 %2534
        %2536 = vadd.xlane.f32.xlu0 %v2505
        %v2537 = vpop.xlane.xlu0 %2536
        %v2538 = vlaneseq
        %v2539 = vshrl.u32 %v2538, 7
        %v2540 = vsub.s32 1, %v2539
        %v2541 = vrot.slane %v2273, %v2540
        %v2542 = vmul.f32 %v2541, %v618
        %v2543 = vmul.f32 %v2541, %v619
        %v2544 = vmul.f32 %v2541, %v620
        %v2545 = vmul.f32 %v2541, %v621
        %v2546 = vmul.f32 %v2541, %v622
        %v2547 = vmul.f32 %v2541, %v623
        %v2548 = vmul.f32 %v2541, %v624
        %v2549 = vmul.f32 %v2541, %v625
        %v2550 = vmul.f32 %v2541, %v626
        %v2551 = vmul.f32 %v2541, %v627
        %v2552 = vmul.f32 %v2541, %v628
        %v2553 = vmul.f32 %v2541, %v629
        %v2554 = vmul.f32 %v2541, %v630
        %v2555 = vmul.f32 %v2541, %v631
        %v2556 = vmul.f32 %v2541, %v632
        %v2557 = vmul.f32 %v2541, %v633
        %2558 = vadd.xlane.f32.xlu0 %v2542
        %v2559 = vpop.xlane.xlu0 %2558
        %2560 = vadd.xlane.f32.xlu0 %v2543
        %v2561 = vpop.xlane.xlu0 %2560
        %2562 = vadd.xlane.f32.xlu0 %v2544
        %v2563 = vpop.xlane.xlu0 %2562
        %2564 = vadd.xlane.f32.xlu0 %v2545
        %v2565 = vpop.xlane.xlu0 %2564
        %2566 = vadd.xlane.f32.xlu0 %v2546
        %v2567 = vpop.xlane.xlu0 %2566
        %2568 = vadd.xlane.f32.xlu0 %v2547
        %v2569 = vpop.xlane.xlu0 %2568
        %2570 = vadd.xlane.f32.xlu0 %v2548
        %v2571 = vpop.xlane.xlu0 %2570
        %2572 = vadd.xlane.f32.xlu0 %v2549
        %v2573 = vpop.xlane.xlu0 %2572
        %2574 = vadd.xlane.f32.xlu0 %v2550
        %v2575 = vpop.xlane.xlu0 %2574
        %2576 = vadd.xlane.f32.xlu0 %v2551
        %v2577 = vpop.xlane.xlu0 %2576
        %2578 = vadd.xlane.f32.xlu0 %v2552
        %v2579 = vpop.xlane.xlu0 %2578
        %2580 = vadd.xlane.f32.xlu0 %v2553
        %v2581 = vpop.xlane.xlu0 %2580
        %2582 = vadd.xlane.f32.xlu0 %v2554
        %v2583 = vpop.xlane.xlu0 %2582
        %2584 = vadd.xlane.f32.xlu0 %v2555
        %v2585 = vpop.xlane.xlu0 %2584
        %2586 = vadd.xlane.f32.xlu0 %v2556
        %v2587 = vpop.xlane.xlu0 %2586
        %2588 = vadd.xlane.f32.xlu0 %v2557
        %v2589 = vpop.xlane.xlu0 %2588
        %v2590 = vlaneseq
        %v2591 = vshrl.u32 %v2590, 7
        %v2592 = vsub.s32 1, %v2591
        %v2593 = vrot.slane %v2275, %v2592
        %v2594 = vsub.f32 %v2507, %v2593
        %v2595 = vsub.f32 %v2509, %v2593
        %v2596 = vsub.f32 %v2511, %v2593
        %v2597 = vsub.f32 %v2513, %v2593
        %v2598 = vsub.f32 %v2515, %v2593
        %v2599 = vsub.f32 %v2517, %v2593
        %v2600 = vsub.f32 %v2519, %v2593
        %v2601 = vsub.f32 %v2521, %v2593
        %v2602 = vsub.f32 %v2523, %v2593
        %v2603 = vsub.f32 %v2525, %v2593
        %v2604 = vsub.f32 %v2527, %v2593
        %v2605 = vsub.f32 %v2529, %v2593
        %v2606 = vsub.f32 %v2531, %v2593
        %v2607 = vsub.f32 %v2533, %v2593
        %v2608 = vsub.f32 %v2535, %v2593
        %v2609 = vsub.f32 %v2537, %v2593
        %v2610 = vand.u32 2147483647, %v2594
        %v2611 = vand.u32 2147483647, %v2595
        %v2612 = vand.u32 2147483647, %v2596
        %v2613 = vand.u32 2147483647, %v2597
        %v2614 = vand.u32 2147483647, %v2598
        %v2615 = vand.u32 2147483647, %v2599
        %v2616 = vand.u32 2147483647, %v2600
        %v2617 = vand.u32 2147483647, %v2601
        %v2618 = vand.u32 2147483647, %v2602
        %v2619 = vand.u32 2147483647, %v2603
        %v2620 = vand.u32 2147483647, %v2604
        %v2621 = vand.u32 2147483647, %v2605
        %v2622 = vand.u32 2147483647, %v2606
        %v2623 = vand.u32 2147483647, %v2607
        %v2624 = vand.u32 2147483647, %v2608
        %v2625 = vand.u32 2147483647, %v2609
        %v2626 = vadd.f32 %v2470, %v2610
        %v2627 = vadd.f32 %v2471, %v2611
        %v2628 = vadd.f32 %v2472, %v2612
        %v2629 = vadd.f32 %v2473, %v2613
        %v2630 = vadd.f32 %v2474, %v2614
        %v2631 = vadd.f32 %v2475, %v2615
        %v2632 = vadd.f32 %v2476, %v2616
        %v2633 = vadd.f32 %v2477, %v2617
        %v2634 = vadd.f32 %v2478, %v2618
        %v2635 = vadd.f32 %v2479, %v2619
        %v2636 = vadd.f32 %v2480, %v2620
        %v2637 = vadd.f32 %v2481, %v2621
        %v2638 = vadd.f32 %v2482, %v2622
        %v2639 = vadd.f32 %v2483, %v2623
        %v2640 = vadd.f32 %v2484, %v2624
        %v2641 = vadd.f32 %v2485, %v2625
        %v2642 = vlaneseq
        %v2643 = vshrl.u32 %v2642, 7
        %v2644 = vsub.s32 1, %v2643
        %v2645 = vrot.slane %v2277, %v2644
        %v2646 = vsub.f32 %v2559, %v2645
        %v2647 = vsub.f32 %v2561, %v2645
        %v2648 = vsub.f32 %v2563, %v2645
        %v2649 = vsub.f32 %v2565, %v2645
        %v2650 = vsub.f32 %v2567, %v2645
        %v2651 = vsub.f32 %v2569, %v2645
        %v2652 = vsub.f32 %v2571, %v2645
        %v2653 = vsub.f32 %v2573, %v2645
        %v2654 = vsub.f32 %v2575, %v2645
        %v2655 = vsub.f32 %v2577, %v2645
        %v2656 = vsub.f32 %v2579, %v2645
        %v2657 = vsub.f32 %v2581, %v2645
        %v2658 = vsub.f32 %v2583, %v2645
        %v2659 = vsub.f32 %v2585, %v2645
        %v2660 = vsub.f32 %v2587, %v2645
        %v2661 = vsub.f32 %v2589, %v2645
        %v2662 = vand.u32 2147483647, %v2646
        %v2663 = vand.u32 2147483647, %v2647
        %v2664 = vand.u32 2147483647, %v2648
        %v2665 = vand.u32 2147483647, %v2649
        %v2666 = vand.u32 2147483647, %v2650
        %v2667 = vand.u32 2147483647, %v2651
        %v2668 = vand.u32 2147483647, %v2652
        %v2669 = vand.u32 2147483647, %v2653
        %v2670 = vand.u32 2147483647, %v2654
        %v2671 = vand.u32 2147483647, %v2655
        %v2672 = vand.u32 2147483647, %v2656
        %v2673 = vand.u32 2147483647, %v2657
        %v2674 = vand.u32 2147483647, %v2658
        %v2675 = vand.u32 2147483647, %v2659
        %v2676 = vand.u32 2147483647, %v2660
        %v2677 = vand.u32 2147483647, %v2661
        %v2678 = vadd.f32 %v2626, %v2662
        %v2679 = vadd.f32 %v2627, %v2663
        %v2680 = vadd.f32 %v2628, %v2664
        %v2681 = vadd.f32 %v2629, %v2665
        %v2682 = vadd.f32 %v2630, %v2666
        %v2683 = vadd.f32 %v2631, %v2667
        %v2684 = vadd.f32 %v2632, %v2668
        %v2685 = vadd.f32 %v2633, %v2669
        %v2686 = vadd.f32 %v2634, %v2670
        %v2687 = vadd.f32 %v2635, %v2671
        %v2688 = vadd.f32 %v2636, %v2672
        %v2689 = vadd.f32 %v2637, %v2673
        %v2690 = vadd.f32 %v2638, %v2674
        %v2691 = vadd.f32 %v2639, %v2675
        %v2692 = vadd.f32 %v2640, %v2676
        %v2693 = vadd.f32 %v2641, %v2677
        %v2694 = vlaneseq
        %v2695 = vshrl.u32 %v2694, 7
        %v2696 = vsub.s32 2, %v2695
        %v2697 = vrot.slane %v2271, %v2696
        %v2698 = vmul.f32 %v2697, %v618
        %v2699 = vmul.f32 %v2697, %v619
        %v2700 = vmul.f32 %v2697, %v620
        %v2701 = vmul.f32 %v2697, %v621
        %v2702 = vmul.f32 %v2697, %v622
        %v2703 = vmul.f32 %v2697, %v623
        %v2704 = vmul.f32 %v2697, %v624
        %v2705 = vmul.f32 %v2697, %v625
        %v2706 = vmul.f32 %v2697, %v626
        %v2707 = vmul.f32 %v2697, %v627
        %v2708 = vmul.f32 %v2697, %v628
        %v2709 = vmul.f32 %v2697, %v629
        %v2710 = vmul.f32 %v2697, %v630
        %v2711 = vmul.f32 %v2697, %v631
        %v2712 = vmul.f32 %v2697, %v632
        %v2713 = vmul.f32 %v2697, %v633
        %2714 = vadd.xlane.f32.xlu0 %v2698
        %v2715 = vpop.xlane.xlu0 %2714
        %2716 = vadd.xlane.f32.xlu0 %v2699
        %v2717 = vpop.xlane.xlu0 %2716
        %2718 = vadd.xlane.f32.xlu0 %v2700
        %v2719 = vpop.xlane.xlu0 %2718
        %2720 = vadd.xlane.f32.xlu0 %v2701
        %v2721 = vpop.xlane.xlu0 %2720
        %2722 = vadd.xlane.f32.xlu0 %v2702
        %v2723 = vpop.xlane.xlu0 %2722
        %2724 = vadd.xlane.f32.xlu0 %v2703
        %v2725 = vpop.xlane.xlu0 %2724
        %2726 = vadd.xlane.f32.xlu0 %v2704
        %v2727 = vpop.xlane.xlu0 %2726
        %2728 = vadd.xlane.f32.xlu0 %v2705
        %v2729 = vpop.xlane.xlu0 %2728
        %2730 = vadd.xlane.f32.xlu0 %v2706
        %v2731 = vpop.xlane.xlu0 %2730
        %2732 = vadd.xlane.f32.xlu0 %v2707
        %v2733 = vpop.xlane.xlu0 %2732
        %2734 = vadd.xlane.f32.xlu0 %v2708
        %v2735 = vpop.xlane.xlu0 %2734
        %2736 = vadd.xlane.f32.xlu0 %v2709
        %v2737 = vpop.xlane.xlu0 %2736
        %2738 = vadd.xlane.f32.xlu0 %v2710
        %v2739 = vpop.xlane.xlu0 %2738
        %2740 = vadd.xlane.f32.xlu0 %v2711
        %v2741 = vpop.xlane.xlu0 %2740
        %2742 = vadd.xlane.f32.xlu0 %v2712
        %v2743 = vpop.xlane.xlu0 %2742
        %2744 = vadd.xlane.f32.xlu0 %v2713
        %v2745 = vpop.xlane.xlu0 %2744
        %v2746 = vlaneseq
        %v2747 = vshrl.u32 %v2746, 7
        %v2748 = vsub.s32 2, %v2747
        %v2749 = vrot.slane %v2273, %v2748
        %v2750 = vmul.f32 %v2749, %v618
        %v2751 = vmul.f32 %v2749, %v619
        %v2752 = vmul.f32 %v2749, %v620
        %v2753 = vmul.f32 %v2749, %v621
        %v2754 = vmul.f32 %v2749, %v622
        %v2755 = vmul.f32 %v2749, %v623
        %v2756 = vmul.f32 %v2749, %v624
        %v2757 = vmul.f32 %v2749, %v625
        %v2758 = vmul.f32 %v2749, %v626
        %v2759 = vmul.f32 %v2749, %v627
        %v2760 = vmul.f32 %v2749, %v628
        %v2761 = vmul.f32 %v2749, %v629
        %v2762 = vmul.f32 %v2749, %v630
        %v2763 = vmul.f32 %v2749, %v631
        %v2764 = vmul.f32 %v2749, %v632
        %v2765 = vmul.f32 %v2749, %v633
        %2766 = vadd.xlane.f32.xlu0 %v2750
        %v2767 = vpop.xlane.xlu0 %2766
        %2768 = vadd.xlane.f32.xlu0 %v2751
        %v2769 = vpop.xlane.xlu0 %2768
        %2770 = vadd.xlane.f32.xlu0 %v2752
        %v2771 = vpop.xlane.xlu0 %2770
        %2772 = vadd.xlane.f32.xlu0 %v2753
        %v2773 = vpop.xlane.xlu0 %2772
        %2774 = vadd.xlane.f32.xlu0 %v2754
        %v2775 = vpop.xlane.xlu0 %2774
        %2776 = vadd.xlane.f32.xlu0 %v2755
        %v2777 = vpop.xlane.xlu0 %2776
        %2778 = vadd.xlane.f32.xlu0 %v2756
        %v2779 = vpop.xlane.xlu0 %2778
        %2780 = vadd.xlane.f32.xlu0 %v2757
        %v2781 = vpop.xlane.xlu0 %2780
        %2782 = vadd.xlane.f32.xlu0 %v2758
        %v2783 = vpop.xlane.xlu0 %2782
        %2784 = vadd.xlane.f32.xlu0 %v2759
        %v2785 = vpop.xlane.xlu0 %2784
        %2786 = vadd.xlane.f32.xlu0 %v2760
        %v2787 = vpop.xlane.xlu0 %2786
        %2788 = vadd.xlane.f32.xlu0 %v2761
        %v2789 = vpop.xlane.xlu0 %2788
        %2790 = vadd.xlane.f32.xlu0 %v2762
        %v2791 = vpop.xlane.xlu0 %2790
        %2792 = vadd.xlane.f32.xlu0 %v2763
        %v2793 = vpop.xlane.xlu0 %2792
        %2794 = vadd.xlane.f32.xlu0 %v2764
        %v2795 = vpop.xlane.xlu0 %2794
        %2796 = vadd.xlane.f32.xlu0 %v2765
        %v2797 = vpop.xlane.xlu0 %2796
        %v2798 = vlaneseq
        %v2799 = vshrl.u32 %v2798, 7
        %v2800 = vsub.s32 2, %v2799
        %v2801 = vrot.slane %v2275, %v2800
        %v2802 = vsub.f32 %v2715, %v2801
        %v2803 = vsub.f32 %v2717, %v2801
        %v2804 = vsub.f32 %v2719, %v2801
        %v2805 = vsub.f32 %v2721, %v2801
        %v2806 = vsub.f32 %v2723, %v2801
        %v2807 = vsub.f32 %v2725, %v2801
        %v2808 = vsub.f32 %v2727, %v2801
        %v2809 = vsub.f32 %v2729, %v2801
        %v2810 = vsub.f32 %v2731, %v2801
        %v2811 = vsub.f32 %v2733, %v2801
        %v2812 = vsub.f32 %v2735, %v2801
        %v2813 = vsub.f32 %v2737, %v2801
        %v2814 = vsub.f32 %v2739, %v2801
        %v2815 = vsub.f32 %v2741, %v2801
        %v2816 = vsub.f32 %v2743, %v2801
        %v2817 = vsub.f32 %v2745, %v2801
        %v2818 = vand.u32 2147483647, %v2802
        %v2819 = vand.u32 2147483647, %v2803
        %v2820 = vand.u32 2147483647, %v2804
        %v2821 = vand.u32 2147483647, %v2805
        %v2822 = vand.u32 2147483647, %v2806
        %v2823 = vand.u32 2147483647, %v2807
        %v2824 = vand.u32 2147483647, %v2808
        %v2825 = vand.u32 2147483647, %v2809
        %v2826 = vand.u32 2147483647, %v2810
        %v2827 = vand.u32 2147483647, %v2811
        %v2828 = vand.u32 2147483647, %v2812
        %v2829 = vand.u32 2147483647, %v2813
        %v2830 = vand.u32 2147483647, %v2814
        %v2831 = vand.u32 2147483647, %v2815
        %v2832 = vand.u32 2147483647, %v2816
        %v2833 = vand.u32 2147483647, %v2817
        %v2834 = vadd.f32 %v2678, %v2818
        %v2835 = vadd.f32 %v2679, %v2819
        %v2836 = vadd.f32 %v2680, %v2820
        %v2837 = vadd.f32 %v2681, %v2821
        %v2838 = vadd.f32 %v2682, %v2822
        %v2839 = vadd.f32 %v2683, %v2823
        %v2840 = vadd.f32 %v2684, %v2824
        %v2841 = vadd.f32 %v2685, %v2825
        %v2842 = vadd.f32 %v2686, %v2826
        %v2843 = vadd.f32 %v2687, %v2827
        %v2844 = vadd.f32 %v2688, %v2828
        %v2845 = vadd.f32 %v2689, %v2829
        %v2846 = vadd.f32 %v2690, %v2830
        %v2847 = vadd.f32 %v2691, %v2831
        %v2848 = vadd.f32 %v2692, %v2832
        %v2849 = vadd.f32 %v2693, %v2833
        %v2850 = vlaneseq
        %v2851 = vshrl.u32 %v2850, 7
        %v2852 = vsub.s32 2, %v2851
        %v2853 = vrot.slane %v2277, %v2852
        %v2854 = vsub.f32 %v2767, %v2853
        %v2855 = vsub.f32 %v2769, %v2853
        %v2856 = vsub.f32 %v2771, %v2853
        %v2857 = vsub.f32 %v2773, %v2853
        %v2858 = vsub.f32 %v2775, %v2853
        %v2859 = vsub.f32 %v2777, %v2853
        %v2860 = vsub.f32 %v2779, %v2853
        %v2861 = vsub.f32 %v2781, %v2853
        %v2862 = vsub.f32 %v2783, %v2853
        %v2863 = vsub.f32 %v2785, %v2853
        %v2864 = vsub.f32 %v2787, %v2853
        %v2865 = vsub.f32 %v2789, %v2853
        %v2866 = vsub.f32 %v2791, %v2853
        %v2867 = vsub.f32 %v2793, %v2853
        %v2868 = vsub.f32 %v2795, %v2853
        %v2869 = vsub.f32 %v2797, %v2853
        %v2870 = vand.u32 2147483647, %v2854
        %v2871 = vand.u32 2147483647, %v2855
        %v2872 = vand.u32 2147483647, %v2856
        %v2873 = vand.u32 2147483647, %v2857
        %v2874 = vand.u32 2147483647, %v2858
        %v2875 = vand.u32 2147483647, %v2859
        %v2876 = vand.u32 2147483647, %v2860
        %v2877 = vand.u32 2147483647, %v2861
        %v2878 = vand.u32 2147483647, %v2862
        %v2879 = vand.u32 2147483647, %v2863
        %v2880 = vand.u32 2147483647, %v2864
        %v2881 = vand.u32 2147483647, %v2865
        %v2882 = vand.u32 2147483647, %v2866
        %v2883 = vand.u32 2147483647, %v2867
        %v2884 = vand.u32 2147483647, %v2868
        %v2885 = vand.u32 2147483647, %v2869
        %v2886 = vadd.f32 %v2834, %v2870
        %v2887 = vadd.f32 %v2835, %v2871
        %v2888 = vadd.f32 %v2836, %v2872
        %v2889 = vadd.f32 %v2837, %v2873
        %v2890 = vadd.f32 %v2838, %v2874
        %v2891 = vadd.f32 %v2839, %v2875
        %v2892 = vadd.f32 %v2840, %v2876
        %v2893 = vadd.f32 %v2841, %v2877
        %v2894 = vadd.f32 %v2842, %v2878
        %v2895 = vadd.f32 %v2843, %v2879
        %v2896 = vadd.f32 %v2844, %v2880
        %v2897 = vadd.f32 %v2845, %v2881
        %v2898 = vadd.f32 %v2846, %v2882
        %v2899 = vadd.f32 %v2847, %v2883
        %v2900 = vadd.f32 %v2848, %v2884
        %v2901 = vadd.f32 %v2849, %v2885
        %v2902 = vlaneseq
        %v2903 = vshrl.u32 %v2902, 7
        %v2904 = vsub.s32 3, %v2903
        %v2905 = vrot.slane %v2271, %v2904
        %v2906 = vmul.f32 %v2905, %v618
        %v2907 = vmul.f32 %v2905, %v619
        %v2908 = vmul.f32 %v2905, %v620
        %v2909 = vmul.f32 %v2905, %v621
        %v2910 = vmul.f32 %v2905, %v622
        %v2911 = vmul.f32 %v2905, %v623
        %v2912 = vmul.f32 %v2905, %v624
        %v2913 = vmul.f32 %v2905, %v625
        %v2914 = vmul.f32 %v2905, %v626
        %v2915 = vmul.f32 %v2905, %v627
        %v2916 = vmul.f32 %v2905, %v628
        %v2917 = vmul.f32 %v2905, %v629
        %v2918 = vmul.f32 %v2905, %v630
        %v2919 = vmul.f32 %v2905, %v631
        %v2920 = vmul.f32 %v2905, %v632
        %v2921 = vmul.f32 %v2905, %v633
        %2922 = vadd.xlane.f32.xlu0 %v2906
        %v2923 = vpop.xlane.xlu0 %2922
        %2924 = vadd.xlane.f32.xlu0 %v2907
        %v2925 = vpop.xlane.xlu0 %2924
        %2926 = vadd.xlane.f32.xlu0 %v2908
        %v2927 = vpop.xlane.xlu0 %2926
        %2928 = vadd.xlane.f32.xlu0 %v2909
        %v2929 = vpop.xlane.xlu0 %2928
        %2930 = vadd.xlane.f32.xlu0 %v2910
        %v2931 = vpop.xlane.xlu0 %2930
        %2932 = vadd.xlane.f32.xlu0 %v2911
        %v2933 = vpop.xlane.xlu0 %2932
        %2934 = vadd.xlane.f32.xlu0 %v2912
        %v2935 = vpop.xlane.xlu0 %2934
        %2936 = vadd.xlane.f32.xlu0 %v2913
        %v2937 = vpop.xlane.xlu0 %2936
        %2938 = vadd.xlane.f32.xlu0 %v2914
        %v2939 = vpop.xlane.xlu0 %2938
        %2940 = vadd.xlane.f32.xlu0 %v2915
        %v2941 = vpop.xlane.xlu0 %2940
        %2942 = vadd.xlane.f32.xlu0 %v2916
        %v2943 = vpop.xlane.xlu0 %2942
        %2944 = vadd.xlane.f32.xlu0 %v2917
        %v2945 = vpop.xlane.xlu0 %2944
        %2946 = vadd.xlane.f32.xlu0 %v2918
        %v2947 = vpop.xlane.xlu0 %2946
        %2948 = vadd.xlane.f32.xlu0 %v2919
        %v2949 = vpop.xlane.xlu0 %2948
        %2950 = vadd.xlane.f32.xlu0 %v2920
        %v2951 = vpop.xlane.xlu0 %2950
        %2952 = vadd.xlane.f32.xlu0 %v2921
        %v2953 = vpop.xlane.xlu0 %2952
        %v2954 = vlaneseq
        %v2955 = vshrl.u32 %v2954, 7
        %v2956 = vsub.s32 3, %v2955
        %v2957 = vrot.slane %v2273, %v2956
        %v2958 = vmul.f32 %v2957, %v618
        %v2959 = vmul.f32 %v2957, %v619
        %v2960 = vmul.f32 %v2957, %v620
        %v2961 = vmul.f32 %v2957, %v621
        %v2962 = vmul.f32 %v2957, %v622
        %v2963 = vmul.f32 %v2957, %v623
        %v2964 = vmul.f32 %v2957, %v624
        %v2965 = vmul.f32 %v2957, %v625
        %v2966 = vmul.f32 %v2957, %v626
        %v2967 = vmul.f32 %v2957, %v627
        %v2968 = vmul.f32 %v2957, %v628
        %v2969 = vmul.f32 %v2957, %v629
        %v2970 = vmul.f32 %v2957, %v630
        %v2971 = vmul.f32 %v2957, %v631
        %v2972 = vmul.f32 %v2957, %v632
        %v2973 = vmul.f32 %v2957, %v633
        %2974 = vadd.xlane.f32.xlu0 %v2958
        %v2975 = vpop.xlane.xlu0 %2974
        %2976 = vadd.xlane.f32.xlu0 %v2959
        %v2977 = vpop.xlane.xlu0 %2976
        %2978 = vadd.xlane.f32.xlu0 %v2960
        %v2979 = vpop.xlane.xlu0 %2978
        %2980 = vadd.xlane.f32.xlu0 %v2961
        %v2981 = vpop.xlane.xlu0 %2980
        %2982 = vadd.xlane.f32.xlu0 %v2962
        %v2983 = vpop.xlane.xlu0 %2982
        %2984 = vadd.xlane.f32.xlu0 %v2963
        %v2985 = vpop.xlane.xlu0 %2984
        %2986 = vadd.xlane.f32.xlu0 %v2964
        %v2987 = vpop.xlane.xlu0 %2986
        %2988 = vadd.xlane.f32.xlu0 %v2965
        %v2989 = vpop.xlane.xlu0 %2988
        %2990 = vadd.xlane.f32.xlu0 %v2966
        %v2991 = vpop.xlane.xlu0 %2990
        %2992 = vadd.xlane.f32.xlu0 %v2967
        %v2993 = vpop.xlane.xlu0 %2992
        %2994 = vadd.xlane.f32.xlu0 %v2968
        %v2995 = vpop.xlane.xlu0 %2994
        %2996 = vadd.xlane.f32.xlu0 %v2969
        %v2997 = vpop.xlane.xlu0 %2996
        %2998 = vadd.xlane.f32.xlu0 %v2970
        %v2999 = vpop.xlane.xlu0 %2998
        %3000 = vadd.xlane.f32.xlu0 %v2971
        %v3001 = vpop.xlane.xlu0 %3000
        %3002 = vadd.xlane.f32.xlu0 %v2972
        %v3003 = vpop.xlane.xlu0 %3002
        %3004 = vadd.xlane.f32.xlu0 %v2973
        %v3005 = vpop.xlane.xlu0 %3004
        %v3006 = vlaneseq
        %v3007 = vshrl.u32 %v3006, 7
        %v3008 = vsub.s32 3, %v3007
        %v3009 = vrot.slane %v2275, %v3008
        %v3010 = vsub.f32 %v2923, %v3009
        %v3011 = vsub.f32 %v2925, %v3009
        %v3012 = vsub.f32 %v2927, %v3009
        %v3013 = vsub.f32 %v2929, %v3009
        %v3014 = vsub.f32 %v2931, %v3009
        %v3015 = vsub.f32 %v2933, %v3009
        %v3016 = vsub.f32 %v2935, %v3009
        %v3017 = vsub.f32 %v2937, %v3009
        %v3018 = vsub.f32 %v2939, %v3009
        %v3019 = vsub.f32 %v2941, %v3009
        %v3020 = vsub.f32 %v2943, %v3009
        %v3021 = vsub.f32 %v2945, %v3009
        %v3022 = vsub.f32 %v2947, %v3009
        %v3023 = vsub.f32 %v2949, %v3009
        %v3024 = vsub.f32 %v2951, %v3009
        %v3025 = vsub.f32 %v2953, %v3009
        %v3026 = vand.u32 2147483647, %v3010
        %v3027 = vand.u32 2147483647, %v3011
        %v3028 = vand.u32 2147483647, %v3012
        %v3029 = vand.u32 2147483647, %v3013
        %v3030 = vand.u32 2147483647, %v3014
        %v3031 = vand.u32 2147483647, %v3015
        %v3032 = vand.u32 2147483647, %v3016
        %v3033 = vand.u32 2147483647, %v3017
        %v3034 = vand.u32 2147483647, %v3018
        %v3035 = vand.u32 2147483647, %v3019
        %v3036 = vand.u32 2147483647, %v3020
        %v3037 = vand.u32 2147483647, %v3021
        %v3038 = vand.u32 2147483647, %v3022
        %v3039 = vand.u32 2147483647, %v3023
        %v3040 = vand.u32 2147483647, %v3024
        %v3041 = vand.u32 2147483647, %v3025
        %v3042 = vadd.f32 %v2886, %v3026
        %v3043 = vadd.f32 %v2887, %v3027
        %v3044 = vadd.f32 %v2888, %v3028
        %v3045 = vadd.f32 %v2889, %v3029
        %v3046 = vadd.f32 %v2890, %v3030
        %v3047 = vadd.f32 %v2891, %v3031
        %v3048 = vadd.f32 %v2892, %v3032
        %v3049 = vadd.f32 %v2893, %v3033
        %v3050 = vadd.f32 %v2894, %v3034
        %v3051 = vadd.f32 %v2895, %v3035
        %v3052 = vadd.f32 %v2896, %v3036
        %v3053 = vadd.f32 %v2897, %v3037
        %v3054 = vadd.f32 %v2898, %v3038
        %v3055 = vadd.f32 %v2899, %v3039
        %v3056 = vadd.f32 %v2900, %v3040
        %v3057 = vadd.f32 %v2901, %v3041
        %v3058 = vlaneseq
        %v3059 = vshrl.u32 %v3058, 7
        %v3060 = vsub.s32 3, %v3059
        %v3061 = vrot.slane %v2277, %v3060
        %v3062 = vsub.f32 %v2975, %v3061
        %v3063 = vsub.f32 %v2977, %v3061
        %v3064 = vsub.f32 %v2979, %v3061
        %v3065 = vsub.f32 %v2981, %v3061
        %v3066 = vsub.f32 %v2983, %v3061
        %v3067 = vsub.f32 %v2985, %v3061
        %v3068 = vsub.f32 %v2987, %v3061
        %v3069 = vsub.f32 %v2989, %v3061
        %v3070 = vsub.f32 %v2991, %v3061
        %v3071 = vsub.f32 %v2993, %v3061
        %v3072 = vsub.f32 %v2995, %v3061
        %v3073 = vsub.f32 %v2997, %v3061
        %v3074 = vsub.f32 %v2999, %v3061
        %v3075 = vsub.f32 %v3001, %v3061
        %v3076 = vsub.f32 %v3003, %v3061
        %v3077 = vsub.f32 %v3005, %v3061
        %v3078 = vand.u32 2147483647, %v3062
        %v3079 = vand.u32 2147483647, %v3063
        %v3080 = vand.u32 2147483647, %v3064
        %v3081 = vand.u32 2147483647, %v3065
        %v3082 = vand.u32 2147483647, %v3066
        %v3083 = vand.u32 2147483647, %v3067
        %v3084 = vand.u32 2147483647, %v3068
        %v3085 = vand.u32 2147483647, %v3069
        %v3086 = vand.u32 2147483647, %v3070
        %v3087 = vand.u32 2147483647, %v3071
        %v3088 = vand.u32 2147483647, %v3072
        %v3089 = vand.u32 2147483647, %v3073
        %v3090 = vand.u32 2147483647, %v3074
        %v3091 = vand.u32 2147483647, %v3075
        %v3092 = vand.u32 2147483647, %v3076
        %v3093 = vand.u32 2147483647, %v3077
        %v3094 = vadd.f32 %v3042, %v3078
        %v3095 = vadd.f32 %v3043, %v3079
        %v3096 = vadd.f32 %v3044, %v3080
        %v3097 = vadd.f32 %v3045, %v3081
        %v3098 = vadd.f32 %v3046, %v3082
        %v3099 = vadd.f32 %v3047, %v3083
        %v3100 = vadd.f32 %v3048, %v3084
        %v3101 = vadd.f32 %v3049, %v3085
        %v3102 = vadd.f32 %v3050, %v3086
        %v3103 = vadd.f32 %v3051, %v3087
        %v3104 = vadd.f32 %v3052, %v3088
        %v3105 = vadd.f32 %v3053, %v3089
        %v3106 = vadd.f32 %v3054, %v3090
        %v3107 = vadd.f32 %v3055, %v3091
        %v3108 = vadd.f32 %v3056, %v3092
        %v3109 = vadd.f32 %v3057, %v3093
        %v3110 = vmul.f32 %v2271, 0.5
        %v3112 = vrot.slane %v3110, 2
        %v3114 = vsub.f32 %v2271, %v3112
        %v3115 = vadd.f32 %v2271, %v3112
        %v3116 = vmul.f32 %v2275, 0.5
        %v3118 = vrot.slane %v3116, 2
        %v3120 = vsub.f32 %v2275, %v3118
        %v3121 = vadd.f32 %v2275, %v3118
        %v3122 = vsub.f32 %v3115, %v3114
        %v3124 = vrot.slane %v3122, 1
        %v3126 = vmul.f32 %v3122, %v3124
        %v3127 = vsub.f32 %v3121, %v3120
        %v3129 = vrot.slane %v3127, 1
        %v3131 = vmul.f32 %v3127, %v3129
        %v3132 = vmax.f32 %v3114, %v3120
        %v3133 = vmin.f32 %v3115, %v3121
        %v3134 = vsub.f32 %v3133, %v3132
        %v3135 = vmax.f32 %v3134, 0.0
        %v3137 = vrot.slane %v3135, 1
        %v3139 = vmul.f32 %v3135, %v3137
        %v3140 = vadd.f32 %v3126, %v3131
        %v3141 = vsub.f32 %v3140, %v3139
        %v3142 = vmax.f32 %v3141, 1e-09
        %v3143 = vrcp.pop %v3142
        %v3144 = vmul.f32 %v3139, %v3143
        %v3145 = vmin.f32 %v3114, %v3120
        %v3146 = vmax.f32 %v3115, %v3121
        %v3147 = vsub.f32 %v3146, %v3145
        %v3149 = vrot.slane %v3147, 1
        %v3151 = vmul.f32 %v3147, %v3149
        %v3152 = vmax.f32 %v3151, 1e-09
        %v3153 = vsub.f32 %v3152, %v3142
        %v3154 = vrcp.pop %v3152
        %v3155 = vmul.f32 %v3153, %v3154
        %v3156 = vsub.f32 %v3144, %v3155
        %v3157 = vsub.f32 1.0, %v3156
        %v3158 = vmul.f32 %v2273, 0.5
        %v3160 = vrot.slane %v3158, 2
        %v3162 = vsub.f32 %v2273, %v3160
        %v3163 = vadd.f32 %v2273, %v3160
        %v3164 = vmul.f32 %v2277, 0.5
        %v3166 = vrot.slane %v3164, 2
        %v3168 = vsub.f32 %v2277, %v3166
        %v3169 = vadd.f32 %v2277, %v3166
        %v3170 = vsub.f32 %v3163, %v3162
        %v3172 = vrot.slane %v3170, 1
        %v3174 = vmul.f32 %v3170, %v3172
        %v3175 = vsub.f32 %v3169, %v3168
        %v3177 = vrot.slane %v3175, 1
        %v3179 = vmul.f32 %v3175, %v3177
        %v3180 = vmax.f32 %v3162, %v3168
        %v3181 = vmin.f32 %v3163, %v3169
        %v3182 = vsub.f32 %v3181, %v3180
        %v3183 = vmax.f32 %v3182, 0.0
        %v3185 = vrot.slane %v3183, 1
        %v3187 = vmul.f32 %v3183, %v3185
        %v3188 = vadd.f32 %v3174, %v3179
        %v3189 = vsub.f32 %v3188, %v3187
        %v3190 = vmax.f32 %v3189, 1e-09
        %v3191 = vrcp.pop %v3190
        %v3192 = vmul.f32 %v3187, %v3191
        %v3193 = vmin.f32 %v3162, %v3168
        %v3194 = vmax.f32 %v3163, %v3169
        %v3195 = vsub.f32 %v3194, %v3193
        %v3197 = vrot.slane %v3195, 1
        %v3199 = vmul.f32 %v3195, %v3197
        %v3200 = vmax.f32 %v3199, 1e-09
        %v3201 = vsub.f32 %v3200, %v3190
        %v3202 = vrcp.pop %v3200
        %v3203 = vmul.f32 %v3201, %v3202
        %v3204 = vsub.f32 %v3192, %v3203
        %v3205 = vsub.f32 1.0, %v3204
        %v3206 = vadd.f32 %v3157, %v3205
        %v3207 = vstv %s1974
        %v3208 = vadd.f32 %v3207, %v2269
        %v3209 = vadd.f32 %v3208, %v3094
        %v3210 = vadd.f32 %v3208, %v3095
        %v3211 = vadd.f32 %v3208, %v3096
        %v3212 = vadd.f32 %v3208, %v3097
        %v3213 = vadd.f32 %v3208, %v3098
        %v3214 = vadd.f32 %v3208, %v3099
        %v3215 = vadd.f32 %v3208, %v3100
        %v3216 = vadd.f32 %v3208, %v3101
        %v3217 = vadd.f32 %v3208, %v3102
        %v3218 = vadd.f32 %v3208, %v3103
        %v3219 = vadd.f32 %v3208, %v3104
        %v3220 = vadd.f32 %v3208, %v3105
        %v3221 = vadd.f32 %v3208, %v3106
        %v3222 = vadd.f32 %v3208, %v3107
        %v3223 = vadd.f32 %v3208, %v3108
        %v3224 = vadd.f32 %v3208, %v3109
        %v3225 = vlaneseq
        %v3226 = vshrl.u32 %v3225, 7
        %v3227 = vsub.s32 0, %v3226
        %v3228 = vrot.slane %v3206, %v3227
        %v3229 = vadd.f32 %v3209, %v3228
        %v3230 = vadd.f32 %v3210, %v3228
        %v3231 = vadd.f32 %v3211, %v3228
        %v3232 = vadd.f32 %v3212, %v3228
        %v3233 = vadd.f32 %v3213, %v3228
        %v3234 = vadd.f32 %v3214, %v3228
        %v3235 = vadd.f32 %v3215, %v3228
        %v3236 = vadd.f32 %v3216, %v3228
        %v3237 = vadd.f32 %v3217, %v3228
        %v3238 = vadd.f32 %v3218, %v3228
        %v3239 = vadd.f32 %v3219, %v3228
        %v3240 = vadd.f32 %v3220, %v3228
        %v3241 = vadd.f32 %v3221, %v3228
        %v3242 = vadd.f32 %v3222, %v3228
        %v3243 = vadd.f32 %v3223, %v3228
        %v3244 = vadd.f32 %v3224, %v3228
        %s3245 = scalar_lea.vmem %s547, 128 [#allocation13]
        %3246 = vst [vmem:[%s3245] sm:$0xff] %v3229
        %3247 = vst [vmem:[%s3245 + $0x8] sm:$0xff] %v3230
        %3248 = vst [vmem:[%s3245 + $0x10] sm:$0xff] %v3231
        %3249 = vst [vmem:[%s3245 + $0x18] sm:$0xff] %v3232
        %3250 = vst [vmem:[%s3245 + $0x20] sm:$0xff] %v3233
        %3251 = vst [vmem:[%s3245 + $0x28] sm:$0xff] %v3234
        %3252 = vst [vmem:[%s3245 + $0x30] sm:$0xff] %v3235
        %3253 = vst [vmem:[%s3245 + $0x38] sm:$0xff] %v3236
        %3254 = vst [vmem:[%s3245 + $0x40] sm:$0xff] %v3237
        %3255 = vst [vmem:[%s3245 + $0x48] sm:$0xff] %v3238
        %3256 = vst [vmem:[%s3245 + $0x50] sm:$0xff] %v3239
        %3257 = vst [vmem:[%s3245 + $0x58] sm:$0xff] %v3240
        %3258 = vst [vmem:[%s3245 + $0x60] sm:$0xff] %v3241
        %3259 = vst [vmem:[%s3245 + $0x68] sm:$0xff] %v3242
        %3260 = vst [vmem:[%s3245 + $0x70] sm:$0xff] %v3243
        %3261 = vst [vmem:[%s3245 + $0x78] sm:$0xff] %v3244
        %s3262 = sand.u32 %s250, 1
        %s3263 = scalar_lea.sflag [#allocation4], %s3262
        %s3264 = sand.u32 %s250, 1
        %s3265 = smul.addr %s3264, 256
        %s3266 = scalar_lea.vmem [#allocation13], %s3265
        // Predicated region
        $region77: #{tpu_custom_call.1} parent=51 // pred_check
          %p3267 = pneg %p260
        $region78: #{tpu_custom_call.1} parent=51 // pred_check_branch
          %3269 = sbr.rel (%p3267) target = $region80
        $region79: #{tpu_custom_call.1} parent=51 // pred_region
          %s3270 = smul.u32 2, %s34
          %s3272 = ssub.s32 4096, 4096
          %3273 = vsyncadd %s3263, %s3272
          %s3274 = smul.addr %s3270, 16
          %s3275 = smul.addr %s3274, 128
          %s3276 = scalar_lea.hbm %s8, %s3275
          %s3277 = sshll.u32 %s3266, 4
          %s3278 = int_to_ptr.vmem [resolvable:$true] %s3277
          %3283 = dma.vmem_to_hbm [thread:$0]  %s3278, 4096, %s3276, %s3263, 128, 128, 8
        $region80: #{tpu_custom_call.1} parent=51 // pred_fallthru
          _
      $region52: #{tpu_custom_call.1} parent=5 // pred_fallthru
        _
      %p3284 = scmp.le.s32.totalorder 2, %s29
      // Predicated region
      $region81: #{tpu_custom_call.1} parent=5 // pred_check
        %p3285 = pneg %p3284
      $region82: #{tpu_custom_call.1} parent=5 // pred_check_branch
        %3287 = sbr.rel (%p3285) target = $region84
      $region83: #{tpu_custom_call.1} parent=5 // pred_region
        %s3288 = ssub.s32 %s29, 2
        // Predicated region
        $region85: #{tpu_custom_call.1} parent=83 // pred_check
          %p3289 = pneg %p266
        $region86: #{tpu_custom_call.1} parent=83 // pred_check_branch
          %3291 = sbr.rel (%p3289) target = $region88
        $region87: #{tpu_custom_call.1} parent=83 // pred_region
          %s3292 = sand.u32 %s251, 1
          %s3293 = scalar_lea.sflag [#allocation4], %s3292
          %s3294 = sand.u32 %s251, 1
          %s3295 = smul.addr %s3294, 256
          %s3296 = scalar_lea.vmem [#allocation13], %s3295
          %3297 = dma.done %s3293, 4096
        $region88: #{tpu_custom_call.1} parent=83 // pred_fallthru
          _
      $region84: #{tpu_custom_call.1} parent=5 // pred_fallthru
        _
    $region6: #{tpu_custom_call.1} parent=1 // loop_footer
      %s33 = sadd.s32 1, %s29
    $region7: #{tpu_custom_call.1} parent=1 // loop_footer_branch
      %28 = sbr.rel target = $region3
    $region8: #{tpu_custom_call.1} parent=1 // loop_exit
      _
    %3298 = vsyncpa [#allocation3], 1
    %s3299 = scalar_lea.sflag [#allocation3], 1
    %3300 = vsyncpa %s3299, 1
    %3301 = vsyncpa [#allocation6], 1
    %s3302 = scalar_lea.sflag [#allocation6], 1
    %3303 = vsyncpa %s3302, 1
    %3304 = vsyncpa [#allocation9], 1
    %s3305 = scalar_lea.sflag [#allocation9], 1
    %3306 = vsyncpa %s3305, 1
    %3307 = vsyncpa [#allocation12], 1
    %s3308 = scalar_lea.sflag [#allocation12], 1
    %3309 = vsyncpa %s3308, 1
    %3310 = vsyncpa [#allocation4], 1
    %s3311 = scalar_lea.sflag [#allocation4], 1
    %3312 = vsyncpa %s3311, 1

</llo_original>
